<compile_context>
chip_gen: v6e
topology: v6e:2x2x1
jax: 0.10.0
libtpu: 0.0.40
codegen_flags: <defaults>
</compile_context>

<pallas_src>
import numpy as np
import jax
import jax.numpy as jnp
from jax import lax
from jax.experimental import pallas as pl
from jax.experimental.pallas import tpu as pltpu

# HIGHEST keeps the truncated-DFT matmuls within a few ULP of the FFT reference
# (review correctness concern).  Switch to lax.Precision.DEFAULT for single-pass
# bf16 MXU throughput if the looser tolerance is acceptable.
_MM_PRECISION = lax.Precision.HIGHEST


def _dot(a, b):
    return jnp.dot(a, b, preferred_element_type=jnp.float32, precision=_MM_PRECISION)


def spectral_conv2d_kernel(x_ref, fw_ref, fht_ref, icr_ref, ici_ref, iwd_ref,
                           wr_ref, wi_ref, out_ref,
                           xr_s, xi_s, or_s, oi_s, oc_s):
    cin, cout, kf = wr_ref.shape
    n_k1 = icr_ref.shape[0] // 2          # 2*modes1 retained H-modes
    n_k2 = iwd_ref.shape[0] // 2          # modes2 retained W-modes
    hh = fht_ref.shape[0]                 # H
    w_pad = iwd_ref.shape[1]

    # ---- forward DFT along W: cos & sin fused into one [W, 2*K2] matmul ------------
    x2 = x_ref[0]                                               # [Cin*H, W]
    p = _dot(x2, fw_ref[...])                                   # [Cin*H, 2K2] = [pc | ps]

    # corner turn: bring H to the contraction (minor) position for the H-DFT
    p3 = jnp.transpose(p.reshape(cin, hh, 2 * n_k2), (0, 2, 1))  # [Cin, 2K2, H]
    p2 = p3.reshape(cin * 2 * n_k2, hh)

    # ---- forward DFT along H over the retained modes: cos & sin fused --------------
    r = _dot(p2, fht_ref[...])                                  # [Cin*2K2, 2K1]
    r3 = r.reshape(cin, 2 * n_k2, 2 * n_k1)
    xr = r3[:, :n_k2, :n_k1] - r3[:, n_k2:, n_k1:]              # Re(x_ft)  [Cin, K2, K1]
    xi = -(r3[:, :n_k2, n_k1:] + r3[:, n_k2:, :n_k1])           # Im(x_ft)  [Cin, K2, K1]

    # ---- flatten modes (k2-major, k1-minor) into scratch -> lane-dense channel mix --
    for j in range(n_k2):
        xr_s[:, j * n_k1:(j + 1) * n_k1] = xr[:, j, :]
        xi_s[:, j * n_k1:(j + 1) * n_k1] = xi[:, j, :]
    or_s[...] = jnp.zeros_like(or_s)
    oi_s[...] = jnp.zeros_like(oi_s)

    def mix_body(i, carry):
        a = xr_s[pl.ds(i, 1), :]                                # [1, Kf]
        b = xi_s[pl.ds(i, 1), :]
        wr_i = wr_ref[i]                                        # [Cout, Kf]
        wi_i = wi_ref[i]
        or_s[...] = or_s[...] + (a * wr_i - b * wi_i)
        oi_s[...] = oi_s[...] + (a * wi_i + b * wr_i)
        return carry

    lax.fori_loop(0, cin, mix_body, 0)

    # ---- inverse DFT along H: [out_r | out_i] stacked along the contraction dim -----
    for j in range(n_k2):
        oc_s[:, j, :n_k1] = or_s[:, j * n_k1:(j + 1) * n_k1]
        oc_s[:, j, n_k1:] = oi_s[:, j * n_k1:(j + 1) * n_k1]
    oc2 = oc_s[...].reshape(cout * n_k2, 2 * n_k1)              # [(o,k2), 2K1]
    t_r = _dot(oc2, icr_ref[...]).reshape(cout, n_k2, hh)       # [Cout, K2, H]
    t_i = _dot(oc2, ici_ref[...]).reshape(cout, n_k2, hh)

    # ---- inverse real DFT along W: single fused [2*K2, W_pad] matmul -----------------
    tcat = jnp.concatenate([t_r, t_i], axis=1)                  # [Cout, 2K2, H]
    t2 = jnp.transpose(tcat, (0, 2, 1)).reshape(cout * hh, 2 * n_k2)
    y = _dot(t2, iwd_ref[...])                                  # [Cout*H, W_pad]
    out_ref[0] = y.reshape(cout, hh, w_pad).astype(out_ref.dtype)


def _pack_constants(H, W, m1, m2, W_pad):
    """2-D truncated-DFT matrices (no channel broadcast); cos/sin pairs host-stacked."""
    K1, K2 = 2 * m1, m2
    h = np.arange(H)
    w = np.arange(W)
    k1set = np.concatenate([np.arange(m1), np.arange(H - m1, H)])   # retained H-modes
    k2set = np.arange(m2)
    ang_h = 2.0 * np.pi * np.outer(k1set, h) / H                    # [K1, H]
    ang_w = 2.0 * np.pi * np.outer(k2set, w) / W                    # [K2, W]
    ch, sh = np.cos(ang_h), np.sin(ang_h)
    cw, sw = np.cos(ang_w), np.sin(ang_w)

    fw = np.concatenate([cw.T, sw.T], axis=1)                       # [W, 2K2]  forward W
    fht = np.concatenate([ch.T, sh.T], axis=1)                      # [H, 2K1]  forward H
    icr = np.concatenate([ch, -sh], axis=0)                         # [2K1, H]  inverse H (Re)
    ici = np.concatenate([sh, ch], axis=0)                          # [2K1, H]  inverse H (Im)

    # irfft-W Hermitian doubling + 1/(H*W), zero-padded columns for a lane-dense store
    coef = np.full((K2,), 2.0)
    coef[0] = 1.0
    if W % 2 == 0 and m2 - 1 == W // 2:
        coef[-1] = 1.0                                              # Nyquist bin
    coef = coef / float(H * W)
    iwd = np.zeros((2 * K2, W_pad), np.float64)
    iwd[:K2, :W] = coef[:, None] * cw
    iwd[K2:, :W] = -coef[:, None] * sw

    consts = dict(fw=fw, fht=fht, icr=icr, ici=ici, iwd=iwd)
    return {k: jnp.asarray(v, dtype=jnp.float32) for k, v in consts.items()}


def init_spectral_conv2d(key, in_channels, out_channels, modes1, modes2, H, W):
    """Mimics the torch init (scale * rand complex weights) and packs kernel operands."""
    assert 2 * modes1 <= H and modes2 <= W // 2 + 1
    scale = 1.0 / (in_channels * out_channels)
    k1, k2, k3, k4 = jax.random.split(key, 4)
    shp = (in_channels, out_channels, modes1, modes2)
    w1r = scale * jax.random.uniform(k1, shp, jnp.float32)
    w1i = scale * jax.random.uniform(k2, shp, jnp.float32)
    w2r = scale * jax.random.uniform(k3, shp, jnp.float32)
    w2i = scale * jax.random.uniform(k4, shp, jnp.float32)

    K1, K2 = 2 * modes1, modes2
    W_pad = W if W >= 128 else 128        # lane-dense final store; wrapper slices back

    # complex weights over the retained H-mode set, repacked mode-flattened
    # (k2-major, k1-minor) so the in-kernel channel mix runs on lane-dense vregs.
    wr = jnp.concatenate([w1r, w2r], axis=2)                        # [Cin, Cout, K1, K2]
    wi = jnp.concatenate([w1i, w2i], axis=2)
    wrf = jnp.transpose(wr, (0, 1, 3, 2)).reshape(in_channels, out_channels, K2 * K1)
    wif = jnp.transpose(wi, (0, 1, 3, 2)).reshape(in_channels, out_channels, K2 * K1)

    layer = dict(w1r=w1r, w1i=w1i, w2r=w2r, w2i=w2i, wrf=wrf, wif=wif,
                 modes1=modes1, modes2=modes2,
                 in_channels=in_channels, out_channels=out_channels,
                 H=H, W=W, W_pad=W_pad)
    layer.update(_pack_constants(H, W, modes1, modes2, W_pad))
    return layer


def spectral_conv2d_forward(x, layer):
    B, Cin, H, W = x.shape
    Cout = layer["out_channels"]
    m1, m2 = layer["modes1"], layer["modes2"]
    assert Cin == layer["in_channels"] and H == layer["H"] and W == layer["W"]
    K1, K2 = 2 * m1, m2
    Kf = K1 * K2
    W_pad = layer["W_pad"]

    fw, fht, icr, ici, iwd = (layer["fw"], layer["fht"], layer["icr"],
                              layer["ici"], layer["iwd"])
    wrf, wif = layer["wrf"], layer["wif"]

    # free metadata reshape: kernel sees one 2-D [Cin*H, W] slab per batch element
    x_flat = x.reshape(B, Cin * H, W)

    def const_spec(a):
        nd = a.ndim
        return pl.BlockSpec(a.shape, lambda b, _nd=nd: (0,) * _nd,
                            pipeline_mode=pl.Buffered(1))   # invariant -> single buffer

    in_specs = [
        pl.BlockSpec((1, Cin * H, W), lambda b: (b, 0, 0)),
        const_spec(fw), const_spec(fht), const_spec(icr), const_spec(ici),
        const_spec(iwd), const_spec(wrf), const_spec(wif),
    ]
    out_spec = pl.BlockSpec((1, Cout, H, W_pad), lambda b: (b, 0, 0, 0))

    scratch_shapes = [
        pltpu.VMEM((Cin, Kf), jnp.float32),            # xr (mode-flattened)
        pltpu.VMEM((Cin, Kf), jnp.float32),            # xi
        pltpu.VMEM((Cout, Kf), jnp.float32),           # out_ft real accumulator
        pltpu.VMEM((Cout, Kf), jnp.float32),           # out_ft imag accumulator
        pltpu.VMEM((Cout, K2, 2 * K1), jnp.float32),   # [out_r | out_i] for inverse H
    ]

    # explicit scoped-VMEM budget (single-buffered constants + double-buffered I/O)
    const_bytes = 4 * int(fw.size + fht.size + icr.size + ici.size + iwd.size
                          + wrf.size + wif.size)
    io_bytes = 4 * 2 * (Cin * H * W + Cout * H * W_pad)
    scratch_bytes = 4 * (2 * Cin * Kf + 2 * Cout * Kf + Cout * K2 * 2 * K1)
    tmp_bytes = 4 * 4 * (Cin * H * 2 * K2 + Cin * 2 * K2 * 2 * K1
                         + Cout * 2 * K2 * max(H, 2 * K1) + Cout * H * W_pad)
    need = const_bytes + io_bytes + scratch_bytes + tmp_bytes
    vmem_limit = max(need + (8 << 20), 32 << 20)
    try:
        cap = int(pltpu.get_tpu_info().vmem_capacity_bytes) * 7 // 8
    except Exception:
        cap = 96 << 20
    vmem_limit = int(min(vmem_limit, cap))

    flops = int(B * (2 * (Cin * H) * W * (2 * K2)            # forward W-DFT
                     + 2 * (Cin * 2 * K2) * H * (2 * K1)     # forward H-DFT
                     + 8 * Cin * Cout * Kf                   # complex channel mix
                     + 2 * 2 * (Cout * K2) * (2 * K1) * H    # inverse H-DFT
                     + 2 * (Cout * H) * (2 * K2) * W_pad))   # inverse W-DFT
    bytes_accessed = int(4 * (x.size + B * Cout * H * W_pad) + const_bytes)

    fn = pl.pallas_call(
        spectral_conv2d_kernel,
        out_shape=jax.ShapeDtypeStruct((B, Cout, H, W_pad), jnp.float32),
        grid=(B,),
        in_specs=in_specs,
        out_specs=out_spec,
        scratch_shapes=scratch_shapes,
        compiler_params=pltpu.CompilerParams(
            dimension_semantics=("parallel",),
            vmem_limit_bytes=vmem_limit),
        cost_estimate=pl.CostEstimate(flops=flops, transcendentals=0,
                                      bytes_accessed=bytes_accessed),
    )
    out = fn(x_flat, fw, fht, icr, ici, iwd, wrf, wif)
    if W_pad != W:
        out = out[..., :W]
    return out


def spectral_conv2d_reference(x, layer):
    """Pure-JAX reference mirroring the torch module (FFT based)."""
    B, Cin, H, W = x.shape
    m1, m2 = layer["modes1"], layer["modes2"]
    Cout = layer["out_channels"]
    w1 = layer["w1r"] + 1j * layer["w1i"]
    w2 = layer["w2r"] + 1j * layer["w2i"]

    x_ft = jnp.fft.rfft2(x, axes=(2, 3))
    mul = lambda a, w: jnp.einsum('bixy,ioxy->boxy', a, w,
                                  precision=lax.Precision.HIGHEST)
    out_ft = jnp.zeros((B, Cout, H, W // 2 + 1), dtype=jnp.complex64)
    out_ft = out_ft.at[:, :, :m1, :m2].set(mul(x_ft[:, :, :m1, :m2], w1))
    out_ft = out_ft.at[:, :, -m1:, :m2].set(mul(x_ft[:, :, -m1:, :m2], w2))
    return jnp.fft.irfft2(out_ft, s=(H, W), axes=(2, 3))


if __name__ == "__main__":
    batch, in_channels, out_channels = 2, 4, 4
    H = W = 16
    modes1, modes2 = 4, 4

    key = jax.random.PRNGKey(0)
    kx, kp = jax.random.split(key)
    x = jax.random.normal(kx, (batch, in_channels, H, W), jnp.float32)
    layer = init_spectral_conv2d(kp, in_channels, out_channels, modes1, modes2, H, W)

    out = spectral_conv2d_forward(x, layer)
    out = jax.block_until_ready(out)

    ref = spectral_conv2d_reference(x, layer)
    np.testing.assert_allclose(np.asarray(out), np.asarray(ref), rtol=2e-2, atol=2e-3)
    assert out.shape == (batch, out_channels, H, W)

    print("KERNEL_OK")
</pallas_src>

<mosaic_0001>
module attributes {stable_mosaic.version = 11 : i64} {
  func.func @spectral_conv2d_kernel(%arg0: i32, %arg1: memref<1x64x16xf32, #tpu.memory_space<vmem>>, %arg2: memref<16x8xf32, #tpu.memory_space<vmem>>, %arg3: memref<16x16xf32, #tpu.memory_space<vmem>>, %arg4: memref<16x16xf32, #tpu.memory_space<vmem>>, %arg5: memref<16x16xf32, #tpu.memory_space<vmem>>, %arg6: memref<8x128xf32, #tpu.memory_space<vmem>>, %arg7: memref<4x4x32xf32, #tpu.memory_space<vmem>>, %arg8: memref<4x4x32xf32, #tpu.memory_space<vmem>>, %arg9: memref<1x4x16x128xf32, #tpu.memory_space<vmem>>, %arg10: memref<4x32xf32, #tpu.memory_space<vmem>>, %arg11: memref<4x32xf32, #tpu.memory_space<vmem>>, %arg12: memref<4x32xf32, #tpu.memory_space<vmem>>, %arg13: memref<4x32xf32, #tpu.memory_space<vmem>>, %arg14: memref<4x4x16xf32, #tpu.memory_space<vmem>>) attributes {dimension_semantics = [#tpu.dimension_semantics<parallel>], iteration_bounds = array<i64: 2>, scalar_prefetch = 0 : i64, scratch_operands = 5 : i64, tpu.core_type = #tpu.core_type<tc>, window_params = [{transform_indices = @transform_0, window_bounds = array<i64: 1, 64, 16>}, {pipeline_mode = #tpu.pipeline_mode<synchronous>, transform_indices = @transform_1, window_bounds = array<i64: 16, 8>}, {pipeline_mode = #tpu.pipeline_mode<synchronous>, transform_indices = @transform_2, window_bounds = array<i64: 16, 16>}, {pipeline_mode = #tpu.pipeline_mode<synchronous>, transform_indices = @transform_3, window_bounds = array<i64: 16, 16>}, {pipeline_mode = #tpu.pipeline_mode<synchronous>, transform_indices = @transform_4, window_bounds = array<i64: 16, 16>}, {pipeline_mode = #tpu.pipeline_mode<synchronous>, transform_indices = @transform_5, window_bounds = array<i64: 8, 128>}, {pipeline_mode = #tpu.pipeline_mode<synchronous>, transform_indices = @transform_6, window_bounds = array<i64: 4, 4, 32>}, {pipeline_mode = #tpu.pipeline_mode<synchronous>, transform_indices = @transform_7, window_bounds = array<i64: 4, 4, 32>}, {transform_indices = @transform_8, window_bounds = array<i64: 1, 4, 16, 128>}]} {
    %c0 = arith.constant 0 : index
    %c0_0 = arith.constant 0 : index
    %c0_1 = arith.constant 0 : index
    %0 = vector.load %arg1[%c0, %c0_0, %c0_1] : memref<1x64x16xf32, #tpu.memory_space<vmem>>, vector<1x64x16xf32>
    %1 = vector.shape_cast %0 : vector<1x64x16xf32> to vector<64x16xf32>
    %c0_2 = arith.constant 0 : index
    %c0_3 = arith.constant 0 : index
    %2 = vector.load %arg2[%c0_2, %c0_3] : memref<16x8xf32, #tpu.memory_space<vmem>>, vector<16x8xf32>
    %cst = arith.constant dense<0.000000e+00> : vector<64x8xf32>
    %3 = tpu.matmul %1, %2, %cst {dimension_numbers = #tpu.dot_dimension_numbers<[1], [0], [0], [1], [0, 0, 1, 1], [], []>, precision = #tpu.contract_precision<fp32>} : vector<64x16xf32>, vector<16x8xf32>, vector<64x8xf32> -> vector<64x8xf32>
    %4 = vector.shape_cast %3 : vector<64x8xf32> to vector<4x16x8xf32>
    %5 = tpu.transpose %4, [0, 2, 1] : vector<4x16x8xf32> -> vector<4x8x16xf32>
    %6 = vector.shape_cast %5 : vector<4x8x16xf32> to vector<32x16xf32>
    %c0_4 = arith.constant 0 : index
    %c0_5 = arith.constant 0 : index
    %7 = vector.load %arg3[%c0_4, %c0_5] : memref<16x16xf32, #tpu.memory_space<vmem>>, vector<16x16xf32>
    %cst_6 = arith.constant dense<0.000000e+00> : vector<32x16xf32>
    %8 = tpu.matmul %6, %7, %cst_6 {dimension_numbers = #tpu.dot_dimension_numbers<[1], [0], [0], [1], [0, 0, 1, 1], [], []>, precision = #tpu.contract_precision<fp32>} : vector<32x16xf32>, vector<16x16xf32>, vector<32x16xf32> -> vector<32x16xf32>
    %9 = vector.shape_cast %8 : vector<32x16xf32> to vector<4x8x16xf32>
    %10 = vector.extract_strided_slice %9 {offsets = [0, 0, 0], sizes = [4, 4, 8], strides = [1, 1, 1]} : vector<4x8x16xf32> to vector<4x4x8xf32>
    %11 = vector.extract_strided_slice %9 {offsets = [0, 4, 8], sizes = [4, 4, 8], strides = [1, 1, 1]} : vector<4x8x16xf32> to vector<4x4x8xf32>
    %12 = arith.subf %10, %11 : vector<4x4x8xf32>
    %13 = vector.extract_strided_slice %9 {offsets = [0, 0, 8], sizes = [4, 4, 8], strides = [1, 1, 1]} : vector<4x8x16xf32> to vector<4x4x8xf32>
    %14 = vector.extract_strided_slice %9 {offsets = [0, 4, 0], sizes = [4, 4, 8], strides = [1, 1, 1]} : vector<4x8x16xf32> to vector<4x4x8xf32>
    %15 = arith.addf %13, %14 : vector<4x4x8xf32>
    %cst_7 = arith.constant 0.000000e+00 : f32
    %16 = vector.broadcast %cst_7 : f32 to vector<4x4x8xf32>
    %17 = arith.subf %16, %15 : vector<4x4x8xf32>
    %18 = vector.extract_strided_slice %12 {offsets = [0, 0, 0], sizes = [4, 1, 8], strides = [1, 1, 1]} : vector<4x4x8xf32> to vector<4x1x8xf32>
    %19 = vector.shape_cast %18 : vector<4x1x8xf32> to vector<4x8xf32>
    %c0_8 = arith.constant 0 : index
    %c0_9 = arith.constant 0 : index
    %20 = vector.load %arg10[%c0_8, %c0_9] : memref<4x32xf32, #tpu.memory_space<vmem>>, vector<4x8xf32>
    tpu.vector_store %arg10[%c0_8, %c0_9], %19 {strides = array<i32>} : memref<4x32xf32, #tpu.memory_space<vmem>>, vector<4x8xf32>,
    %21 = vector.extract_strided_slice %17 {offsets = [0, 0, 0], sizes = [4, 1, 8], strides = [1, 1, 1]} : vector<4x4x8xf32> to vector<4x1x8xf32>
    %22 = vector.shape_cast %21 : vector<4x1x8xf32> to vector<4x8xf32>
    %c0_10 = arith.constant 0 : index
    %c0_11 = arith.constant 0 : index
    %23 = vector.load %arg11[%c0_10, %c0_11] : memref<4x32xf32, #tpu.memory_space<vmem>>, vector<4x8xf32>
    tpu.vector_store %arg11[%c0_10, %c0_11], %22 {strides = array<i32>} : memref<4x32xf32, #tpu.memory_space<vmem>>, vector<4x8xf32>,
    %24 = vector.extract_strided_slice %12 {offsets = [0, 1, 0], sizes = [4, 1, 8], strides = [1, 1, 1]} : vector<4x4x8xf32> to vector<4x1x8xf32>
    %25 = vector.shape_cast %24 : vector<4x1x8xf32> to vector<4x8xf32>
    %c0_12 = arith.constant 0 : index
    %c8 = arith.constant 8 : index
    %26 = vector.load %arg10[%c0_12, %c8] : memref<4x32xf32, #tpu.memory_space<vmem>>, vector<4x8xf32>
    tpu.vector_store %arg10[%c0_12, %c8], %25 {strides = array<i32>} : memref<4x32xf32, #tpu.memory_space<vmem>>, vector<4x8xf32>,
    %27 = vector.extract_strided_slice %17 {offsets = [0, 1, 0], sizes = [4, 1, 8], strides = [1, 1, 1]} : vector<4x4x8xf32> to vector<4x1x8xf32>
    %28 = vector.shape_cast %27 : vector<4x1x8xf32> to vector<4x8xf32>
    %c0_13 = arith.constant 0 : index
    %c8_14 = arith.constant 8 : index
    %29 = vector.load %arg11[%c0_13, %c8_14] : memref<4x32xf32, #tpu.memory_space<vmem>>, vector<4x8xf32>
    tpu.vector_store %arg11[%c0_13, %c8_14], %28 {strides = array<i32>} : memref<4x32xf32, #tpu.memory_space<vmem>>, vector<4x8xf32>,
    %30 = vector.extract_strided_slice %12 {offsets = [0, 2, 0], sizes = [4, 1, 8], strides = [1, 1, 1]} : vector<4x4x8xf32> to vector<4x1x8xf32>
    %31 = vector.shape_cast %30 : vector<4x1x8xf32> to vector<4x8xf32>
    %c0_15 = arith.constant 0 : index
    %c16 = arith.constant 16 : index
    %32 = vector.load %arg10[%c0_15, %c16] : memref<4x32xf32, #tpu.memory_space<vmem>>, vector<4x8xf32>
    tpu.vector_store %arg10[%c0_15, %c16], %31 {strides = array<i32>} : memref<4x32xf32, #tpu.memory_space<vmem>>, vector<4x8xf32>,
    %33 = vector.extract_strided_slice %17 {offsets = [0, 2, 0], sizes = [4, 1, 8], strides = [1, 1, 1]} : vector<4x4x8xf32> to vector<4x1x8xf32>
    %34 = vector.shape_cast %33 : vector<4x1x8xf32> to vector<4x8xf32>
    %c0_16 = arith.constant 0 : index
    %c16_17 = arith.constant 16 : index
    %35 = vector.load %arg11[%c0_16, %c16_17] : memref<4x32xf32, #tpu.memory_space<vmem>>, vector<4x8xf32>
    tpu.vector_store %arg11[%c0_16, %c16_17], %34 {strides = array<i32>} : memref<4x32xf32, #tpu.memory_space<vmem>>, vector<4x8xf32>,
    %36 = vector.extract_strided_slice %12 {offsets = [0, 3, 0], sizes = [4, 1, 8], strides = [1, 1, 1]} : vector<4x4x8xf32> to vector<4x1x8xf32>
    %37 = vector.shape_cast %36 : vector<4x1x8xf32> to vector<4x8xf32>
    %c0_18 = arith.constant 0 : index
    %c24 = arith.constant 24 : index
    %38 = vector.load %arg10[%c0_18, %c24] : memref<4x32xf32, #tpu.memory_space<vmem>>, vector<4x8xf32>
    tpu.vector_store %arg10[%c0_18, %c24], %37 {strides = array<i32>} : memref<4x32xf32, #tpu.memory_space<vmem>>, vector<4x8xf32>,
    %39 = vector.extract_strided_slice %17 {offsets = [0, 3, 0], sizes = [4, 1, 8], strides = [1, 1, 1]} : vector<4x4x8xf32> to vector<4x1x8xf32>
    %40 = vector.shape_cast %39 : vector<4x1x8xf32> to vector<4x8xf32>
    %c0_19 = arith.constant 0 : index
    %c24_20 = arith.constant 24 : index
    %41 = vector.load %arg11[%c0_19, %c24_20] : memref<4x32xf32, #tpu.memory_space<vmem>>, vector<4x8xf32>
    tpu.vector_store %arg11[%c0_19, %c24_20], %40 {strides = array<i32>} : memref<4x32xf32, #tpu.memory_space<vmem>>, vector<4x8xf32>,
    %cst_21 = arith.constant 0.000000e+00 : f32
    %42 = vector.broadcast %cst_21 : f32 to vector<4x32xf32>
    %c0_22 = arith.constant 0 : index
    %c0_23 = arith.constant 0 : index
    %43 = vector.load %arg12[%c0_22, %c0_23] : memref<4x32xf32, #tpu.memory_space<vmem>>, vector<4x32xf32>
    tpu.vector_store %arg12[%c0_22, %c0_23], %42 {strides = array<i32>} : memref<4x32xf32, #tpu.memory_space<vmem>>, vector<4x32xf32>,
    %cst_24 = arith.constant 0.000000e+00 : f32
    %44 = vector.broadcast %cst_24 : f32 to vector<4x32xf32>
    %c0_25 = arith.constant 0 : index
    %c0_26 = arith.constant 0 : index
    %45 = vector.load %arg13[%c0_25, %c0_26] : memref<4x32xf32, #tpu.memory_space<vmem>>, vector<4x32xf32>
    tpu.vector_store %arg13[%c0_25, %c0_26], %44 {strides = array<i32>} : memref<4x32xf32, #tpu.memory_space<vmem>>, vector<4x32xf32>,
    %c0_i32 = arith.constant 0 : i32
    %c4_i32 = arith.constant 4 : i32
    %46 = arith.addi %c0_i32, %c4_i32 : i32
    %c1_i32 = arith.constant 1 : i32
    scf.for %arg15 = %c0_i32 to %46 step %c1_i32  : i32 {
      %96 = arith.index_cast %arg15 : i32 to index
      %c0_81 = arith.constant 0 : index
      %97 = vector.load %arg10[%96, %c0_81] : memref<4x32xf32, #tpu.memory_space<vmem>>, vector<1x32xf32>
      %98 = arith.index_cast %arg15 : i32 to index
      %c0_82 = arith.constant 0 : index
      %99 = vector.load %arg11[%98, %c0_82] : memref<4x32xf32, #tpu.memory_space<vmem>>, vector<1x32xf32>
      %100 = arith.index_cast %arg15 : i32 to index
      %c0_83 = arith.constant 0 : index
      %c0_84 = arith.constant 0 : index
      %101 = vector.load %arg7[%100, %c0_83, %c0_84] : memref<4x4x32xf32, #tpu.memory_space<vmem>>, vector<1x4x32xf32>
      %102 = vector.shape_cast %101 : vector<1x4x32xf32> to vector<4x32xf32>
      %103 = arith.index_cast %arg15 : i32 to index
      %c0_85 = arith.constant 0 : index
      %c0_86 = arith.constant 0 : index
      %104 = vector.load %arg8[%103, %c0_85, %c0_86] : memref<4x4x32xf32, #tpu.memory_space<vmem>>, vector<1x4x32xf32>
      %105 = vector.shape_cast %104 : vector<1x4x32xf32> to vector<4x32xf32>
      %c0_87 = arith.constant 0 : index
      %c0_88 = arith.constant 0 : index
      %106 = vector.load %arg12[%c0_87, %c0_88] : memref<4x32xf32, #tpu.memory_space<vmem>>, vector<4x32xf32>
      %107 = vector.broadcast %97 : vector<1x32xf32> to vector<4x32xf32>
      %108 = arith.mulf %107, %102 : vector<4x32xf32>
      %109 = vector.broadcast %99 : vector<1x32xf32> to vector<4x32xf32>
      %110 = arith.mulf %109, %105 : vector<4x32xf32>
      %111 = arith.subf %108, %110 : vector<4x32xf32>
      %112 = arith.addf %106, %111 : vector<4x32xf32>
      %c0_89 = arith.constant 0 : index
      %c0_90 = arith.constant 0 : index
      %113 = vector.load %arg12[%c0_89, %c0_90] : memref<4x32xf32, #tpu.memory_space<vmem>>, vector<4x32xf32>
      tpu.vector_store %arg12[%c0_89, %c0_90], %112 {strides = array<i32>} : memref<4x32xf32, #tpu.memory_space<vmem>>, vector<4x32xf32>,
      %c0_91 = arith.constant 0 : index
      %c0_92 = arith.constant 0 : index
      %114 = vector.load %arg13[%c0_91, %c0_92] : memref<4x32xf32, #tpu.memory_space<vmem>>, vector<4x32xf32>
      %115 = vector.broadcast %97 : vector<1x32xf32> to vector<4x32xf32>
      %116 = arith.mulf %115, %105 : vector<4x32xf32>
      %117 = vector.broadcast %99 : vector<1x32xf32> to vector<4x32xf32>
      %118 = arith.mulf %117, %102 : vector<4x32xf32>
      %119 = arith.addf %116, %118 : vector<4x32xf32>
      %120 = arith.addf %114, %119 : vector<4x32xf32>
      %c0_93 = arith.constant 0 : index
      %c0_94 = arith.constant 0 : index
      %121 = vector.load %arg13[%c0_93, %c0_94] : memref<4x32xf32, #tpu.memory_space<vmem>>, vector<4x32xf32>
      tpu.vector_store %arg13[%c0_93, %c0_94], %120 {strides = array<i32>} : memref<4x32xf32, #tpu.memory_space<vmem>>, vector<4x32xf32>,
    }
    %c4_i32_27 = arith.constant 4 : i32
    %c0_28 = arith.constant 0 : index
    %c0_29 = arith.constant 0 : index
    %47 = vector.load %arg12[%c0_28, %c0_29] : memref<4x32xf32, #tpu.memory_space<vmem>>, vector<4x8xf32>
    %c0_30 = arith.constant 0 : index
    %c0_31 = arith.constant 0 : index
    %c0_32 = arith.constant 0 : index
    %48 = vector.load %arg14[%c0_30, %c0_31, %c0_32] : memref<4x4x16xf32, #tpu.memory_space<vmem>>, vector<4x1x8xf32>
    %49 = vector.shape_cast %48 : vector<4x1x8xf32> to vector<4x8xf32>
    %50 = vector.shape_cast %47 : vector<4x8xf32> to vector<4x1x8xf32>
    tpu.vector_store %arg14[%c0_30, %c0_31, %c0_32], %50 {strides = array<i32>} : memref<4x4x16xf32, #tpu.memory_space<vmem>>, vector<4x1x8xf32>,
    %c0_33 = arith.constant 0 : index
    %c0_34 = arith.constant 0 : index
    %51 = vector.load %arg13[%c0_33, %c0_34] : memref<4x32xf32, #tpu.memory_space<vmem>>, vector<4x8xf32>
    %c0_35 = arith.constant 0 : index
    %c0_36 = arith.constant 0 : index
    %c8_37 = arith.constant 8 : index
    %52 = vector.load %arg14[%c0_35, %c0_36, %c8_37] : memref<4x4x16xf32, #tpu.memory_space<vmem>>, vector<4x1x8xf32>
    %53 = vector.shape_cast %52 : vector<4x1x8xf32> to vector<4x8xf32>
    %54 = vector.shape_cast %51 : vector<4x8xf32> to vector<4x1x8xf32>
    tpu.vector_store %arg14[%c0_35, %c0_36, %c8_37], %54 {strides = array<i32>} : memref<4x4x16xf32, #tpu.memory_space<vmem>>, vector<4x1x8xf32>,
    %c0_38 = arith.constant 0 : index
    %c8_39 = arith.constant 8 : index
    %55 = vector.load %arg12[%c0_38, %c8_39] : memref<4x32xf32, #tpu.memory_space<vmem>>, vector<4x8xf32>
    %c0_40 = arith.constant 0 : index
    %c1 = arith.constant 1 : index
    %c0_41 = arith.constant 0 : index
    %56 = vector.load %arg14[%c0_40, %c1, %c0_41] : memref<4x4x16xf32, #tpu.memory_space<vmem>>, vector<4x1x8xf32>
    %57 = vector.shape_cast %56 : vector<4x1x8xf32> to vector<4x8xf32>
    %58 = vector.shape_cast %55 : vector<4x8xf32> to vector<4x1x8xf32>
    tpu.vector_store %arg14[%c0_40, %c1, %c0_41], %58 {strides = array<i32>} : memref<4x4x16xf32, #tpu.memory_space<vmem>>, vector<4x1x8xf32>,
    %c0_42 = arith.constant 0 : index
    %c8_43 = arith.constant 8 : index
    %59 = vector.load %arg13[%c0_42, %c8_43] : memref<4x32xf32, #tpu.memory_space<vmem>>, vector<4x8xf32>
    %c0_44 = arith.constant 0 : index
    %c1_45 = arith.constant 1 : index
    %c8_46 = arith.constant 8 : index
    %60 = vector.load %arg14[%c0_44, %c1_45, %c8_46] : memref<4x4x16xf32, #tpu.memory_space<vmem>>, vector<4x1x8xf32>
    %61 = vector.shape_cast %60 : vector<4x1x8xf32> to vector<4x8xf32>
    %62 = vector.shape_cast %59 : vector<4x8xf32> to vector<4x1x8xf32>
    tpu.vector_store %arg14[%c0_44, %c1_45, %c8_46], %62 {strides = array<i32>} : memref<4x4x16xf32, #tpu.memory_space<vmem>>, vector<4x1x8xf32>,
    %c0_47 = arith.constant 0 : index
    %c16_48 = arith.constant 16 : index
    %63 = vector.load %arg12[%c0_47, %c16_48] : memref<4x32xf32, #tpu.memory_space<vmem>>, vector<4x8xf32>
    %c0_49 = arith.constant 0 : index
    %c2 = arith.constant 2 : index
    %c0_50 = arith.constant 0 : index
    %64 = vector.load %arg14[%c0_49, %c2, %c0_50] : memref<4x4x16xf32, #tpu.memory_space<vmem>>, vector<4x1x8xf32>
    %65 = vector.shape_cast %64 : vector<4x1x8xf32> to vector<4x8xf32>
    %66 = vector.shape_cast %63 : vector<4x8xf32> to vector<4x1x8xf32>
    tpu.vector_store %arg14[%c0_49, %c2, %c0_50], %66 {strides = array<i32>} : memref<4x4x16xf32, #tpu.memory_space<vmem>>, vector<4x1x8xf32>,
    %c0_51 = arith.constant 0 : index
    %c16_52 = arith.constant 16 : index
    %67 = vector.load %arg13[%c0_51, %c16_52] : memref<4x32xf32, #tpu.memory_space<vmem>>, vector<4x8xf32>
    %c0_53 = arith.constant 0 : index
    %c2_54 = arith.constant 2 : index
    %c8_55 = arith.constant 8 : index
    %68 = vector.load %arg14[%c0_53, %c2_54, %c8_55] : memref<4x4x16xf32, #tpu.memory_space<vmem>>, vector<4x1x8xf32>
    %69 = vector.shape_cast %68 : vector<4x1x8xf32> to vector<4x8xf32>
    %70 = vector.shape_cast %67 : vector<4x8xf32> to vector<4x1x8xf32>
    tpu.vector_store %arg14[%c0_53, %c2_54, %c8_55], %70 {strides = array<i32>} : memref<4x4x16xf32, #tpu.memory_space<vmem>>, vector<4x1x8xf32>,
    %c0_56 = arith.constant 0 : index
    %c24_57 = arith.constant 24 : index
    %71 = vector.load %arg12[%c0_56, %c24_57] : memref<4x32xf32, #tpu.memory_space<vmem>>, vector<4x8xf32>
    %c0_58 = arith.constant 0 : index
    %c3 = arith.constant 3 : index
    %c0_59 = arith.constant 0 : index
    %72 = vector.load %arg14[%c0_58, %c3, %c0_59] : memref<4x4x16xf32, #tpu.memory_space<vmem>>, vector<4x1x8xf32>
    %73 = vector.shape_cast %72 : vector<4x1x8xf32> to vector<4x8xf32>
    %74 = vector.shape_cast %71 : vector<4x8xf32> to vector<4x1x8xf32>
    tpu.vector_store %arg14[%c0_58, %c3, %c0_59], %74 {strides = array<i32>} : memref<4x4x16xf32, #tpu.memory_space<vmem>>, vector<4x1x8xf32>,
    %c0_60 = arith.constant 0 : index
    %c24_61 = arith.constant 24 : index
    %75 = vector.load %arg13[%c0_60, %c24_61] : memref<4x32xf32, #tpu.memory_space<vmem>>, vector<4x8xf32>
    %c0_62 = arith.constant 0 : index
    %c3_63 = arith.constant 3 : index
    %c8_64 = arith.constant 8 : index
    %76 = vector.load %arg14[%c0_62, %c3_63, %c8_64] : memref<4x4x16xf32, #tpu.memory_space<vmem>>, vector<4x1x8xf32>
    %77 = vector.shape_cast %76 : vector<4x1x8xf32> to vector<4x8xf32>
    %78 = vector.shape_cast %75 : vector<4x8xf32> to vector<4x1x8xf32>
    tpu.vector_store %arg14[%c0_62, %c3_63, %c8_64], %78 {strides = array<i32>} : memref<4x4x16xf32, #tpu.memory_space<vmem>>, vector<4x1x8xf32>,
    %c0_65 = arith.constant 0 : index
    %c0_66 = arith.constant 0 : index
    %c0_67 = arith.constant 0 : index
    %79 = vector.load %arg14[%c0_65, %c0_66, %c0_67] : memref<4x4x16xf32, #tpu.memory_space<vmem>>, vector<4x4x16xf32>
    %80 = vector.shape_cast %79 : vector<4x4x16xf32> to vector<16x16xf32>
    %c0_68 = arith.constant 0 : index
    %c0_69 = arith.constant 0 : index
    %81 = vector.load %arg4[%c0_68, %c0_69] : memref<16x16xf32, #tpu.memory_space<vmem>>, vector<16x16xf32>
    %cst_70 = arith.constant dense<0.000000e+00> : vector<16x16xf32>
    %82 = tpu.matmul %80, %81, %cst_70 {dimension_numbers = #tpu.dot_dimension_numbers<[1], [0], [0], [1], [0, 0, 1, 1], [], []>, precision = #tpu.contract_precision<fp32>} : vector<16x16xf32>, vector<16x16xf32>, vector<16x16xf32> -> vector<16x16xf32>
    %83 = vector.shape_cast %82 : vector<16x16xf32> to vector<4x4x16xf32>
    %c0_71 = arith.constant 0 : index
    %c0_72 = arith.constant 0 : index
    %84 = vector.load %arg5[%c0_71, %c0_72] : memref<16x16xf32, #tpu.memory_space<vmem>>, vector<16x16xf32>
    %cst_73 = arith.constant dense<0.000000e+00> : vector<16x16xf32>
    %85 = tpu.matmul %80, %84, %cst_73 {dimension_numbers = #tpu.dot_dimension_numbers<[1], [0], [0], [1], [0, 0, 1, 1], [], []>, precision = #tpu.contract_precision<fp32>} : vector<16x16xf32>, vector<16x16xf32>, vector<16x16xf32> -> vector<16x16xf32>
    %86 = vector.shape_cast %85 : vector<16x16xf32> to vector<4x4x16xf32>
    %87 = tpu.concatenate %83, %86 in 1 : vector<4x4x16xf32>, vector<4x4x16xf32> -> vector<4x8x16xf32>
    %88 = tpu.transpose %87, [0, 2, 1] : vector<4x8x16xf32> -> vector<4x16x8xf32>
    %89 = vector.shape_cast %88 : vector<4x16x8xf32> to vector<64x8xf32>
    %c0_74 = arith.constant 0 : index
    %c0_75 = arith.constant 0 : index
    %90 = vector.load %arg6[%c0_74, %c0_75] : memref<8x128xf32, #tpu.memory_space<vmem>>, vector<8x128xf32>
    %cst_76 = arith.constant dense<0.000000e+00> : vector<64x128xf32>
    %91 = tpu.matmul %89, %90, %cst_76 {dimension_numbers = #tpu.dot_dimension_numbers<[1], [0], [0], [1], [0, 0, 1, 1], [], []>, precision = #tpu.contract_precision<fp32>} : vector<64x8xf32>, vector<8x128xf32>, vector<64x128xf32> -> vector<64x128xf32>
    %92 = vector.shape_cast %91 : vector<64x128xf32> to vector<4x16x128xf32>
    %c0_77 = arith.constant 0 : index
    %c0_78 = arith.constant 0 : index
    %c0_79 = arith.constant 0 : index
    %c0_80 = arith.constant 0 : index
    %93 = vector.load %arg9[%c0_77, %c0_78, %c0_79, %c0_80] : memref<1x4x16x128xf32, #tpu.memory_space<vmem>>, vector<1x4x16x128xf32>
    %94 = vector.shape_cast %93 : vector<1x4x16x128xf32> to vector<4x16x128xf32>
    %95 = vector.shape_cast %92 : vector<4x16x128xf32> to vector<1x4x16x128xf32>
    tpu.vector_store %arg9[%c0_77, %c0_78, %c0_79, %c0_80], %95 {strides = array<i32>} : memref<1x4x16x128xf32, #tpu.memory_space<vmem>>, vector<1x4x16x128xf32>,
    return
  }
  func.func @transform_0(%arg0: i32) -> (i32, i32, i32) {
    %c0_i32 = arith.constant 0 : i32
    %c0_i32_0 = arith.constant 0 : i32
    %c0_i32_1 = arith.constant 0 : i32
    return %arg0, %c0_i32, %c0_i32_0 : i32, i32, i32
  }
  func.func @transform_1(%arg0: i32) -> (i32, i32) {
    %c0_i32 = arith.constant 0 : i32
    %c0_i32_0 = arith.constant 0 : i32
    %c0_i32_1 = arith.constant 0 : i32
    return %c0_i32, %c0_i32_0 : i32, i32
  }
  func.func @transform_2(%arg0: i32) -> (i32, i32) {
    %c0_i32 = arith.constant 0 : i32
    %c0_i32_0 = arith.constant 0 : i32
    %c0_i32_1 = arith.constant 0 : i32
    return %c0_i32, %c0_i32_0 : i32, i32
  }
  func.func @transform_3(%arg0: i32) -> (i32, i32) {
    %c0_i32 = arith.constant 0 : i32
    %c0_i32_0 = arith.constant 0 : i32
    %c0_i32_1 = arith.constant 0 : i32
    return %c0_i32, %c0_i32_0 : i32, i32
  }
  func.func @transform_4(%arg0: i32) -> (i32, i32) {
    %c0_i32 = arith.constant 0 : i32
    %c0_i32_0 = arith.constant 0 : i32
    %c0_i32_1 = arith.constant 0 : i32
    return %c0_i32, %c0_i32_0 : i32, i32
  }
  func.func @transform_5(%arg0: i32) -> (i32, i32) {
    %c0_i32 = arith.constant 0 : i32
    %c0_i32_0 = arith.constant 0 : i32
    %c0_i32_1 = arith.constant 0 : i32
    return %c0_i32, %c0_i32_0 : i32, i32
  }
  func.func @transform_6(%arg0: i32) -> (i32, i32, i32) {
    %c0_i32 = arith.constant 0 : i32
    %c0_i32_0 = arith.constant 0 : i32
    %c0_i32_1 = arith.constant 0 : i32
    %c0_i32_2 = arith.constant 0 : i32
    return %c0_i32, %c0_i32_0, %c0_i32_1 : i32, i32, i32
  }
  func.func @transform_7(%arg0: i32) -> (i32, i32, i32) {
    %c0_i32 = arith.constant 0 : i32
    %c0_i32_0 = arith.constant 0 : i32
    %c0_i32_1 = arith.constant 0 : i32
    %c0_i32_2 = arith.constant 0 : i32
    return %c0_i32, %c0_i32_0, %c0_i32_1 : i32, i32, i32
  }
  func.func @transform_8(%arg0: i32) -> (i32, i32, i32, i32) {
    %c0_i32 = arith.constant 0 : i32
    %c0_i32_0 = arith.constant 0 : i32
    %c0_i32_1 = arith.constant 0 : i32
    %c0_i32_2 = arith.constant 0 : i32
    return %arg0, %c0_i32, %c0_i32_0, %c0_i32_1 : i32, i32, i32, i32
  }
}

</mosaic_0001>

<llo_original>
// kernel: tpu_custom_call.1
$region0: #{tpu_custom_call.1}
  #allocation0 [shape = 'u32[]', space=smem, size = 0x4, offset = 0x4, fixed_abs, tag = 'smem constant byte address 0x4 - core index']
  #allocation1 [shape = 'u32[144,128]{1,0:T(1,128)}', space=vmem, size = 0x12000, scoped, tag = 'internal scratch']
  #allocation2 [shape = 'f32[4,32]{1,0:T(4,128)}', space=vmem, size = 0x800, scoped, tag = 'scratch operand']
  #allocation3 [shape = 'f32[4,32]{1,0:T(4,128)}', space=vmem, size = 0x800, scoped, tag = 'scratch operand']
  #allocation4 [shape = 'f32[4,32]{1,0:T(4,128)}', space=vmem, size = 0x800, scoped, tag = 'scratch operand']
  #allocation5 [shape = 'f32[4,32]{1,0:T(4,128)}', space=vmem, size = 0x800, scoped, tag = 'scratch operand']
  #allocation6 [shape = 'f32[4,4,16]{2,1,0:T(4,128)}', space=vmem, size = 0x2000, scoped, tag = 'scratch operand']
  %s0 = inlined_call_operand.vmem [shape: f32[2,64,16], index: 0, kind: input, shape index: {}]
  %s1 = inlined_call_operand.vmem [shape: f32[16,8], index: 1, kind: input, shape index: {}]
  %s2 = inlined_call_operand.vmem [shape: f32[16,16], index: 2, kind: input, shape index: {}]
  %s3 = inlined_call_operand.vmem [shape: f32[16,16], index: 3, kind: input, shape index: {}]
  %s4 = inlined_call_operand.vmem [shape: f32[16,16], index: 4, kind: input, shape index: {}]
  %s5 = inlined_call_operand.vmem [shape: f32[8,128], index: 5, kind: input, shape index: {}]
  %s6 = inlined_call_operand.vmem [shape: f32[4,4,32], index: 6, kind: input, shape index: {}]
  %s7 = inlined_call_operand.vmem [shape: f32[4,4,32], index: 7, kind: input, shape index: {}]
  %s8 = inlined_call_operand.hbm [shape: f32[2,4,16,128], index: 8, kind: output, shape index: {}]
  %s9 = sld [smem:[#allocation0]]
  $region72: #{tpu_custom_call.1} parent=0
    _
  %s11 = ssub.s32 1, %s9
  %s12 = scalar_select 0, %s11, %s9
  $region1: #{tpu_custom_call.1} parent=0
    #allocation7 [shape = 'u8[65536]{0}', space=vmem, size = 0x10000, scoped, tag = 'output window, operand 0']
    #allocation8 [shape = 's32[2]{0}', space=sflag, size = 0x8, scoped, tag = 'scoped memory for tpu_custom_call.1']
    %13 = vsyncpa [#allocation8], 0
    %s14 = scalar_lea.sflag [#allocation8], 1
    %15 = vsyncpa %s14, 0
    loop: start=0, step=1, limit=4
    $region2: #{tpu_custom_call.1} parent=1 // loop_pre_header
      _
    $region3: #{tpu_custom_call.1} parent=1 // loop_header
      %s17 = sphi 0, %s21
      %p18 = scmp.ge.s32.totalorder %s17, 4
      %s27 = sphi 0, %s29
      %s30 = sphi 0, %s27
      %s31 = sphi 0, %s30
      %s47 = sphi 0, %s31
      %s51 = sphi 0, %s51
      %s53 = sphi 0, %s51
      %s54 = sphi 0, %s53
      %s68 = sphi 0, %s54
      %s72 = sphi 0, %s72
      %s74 = sphi 0, %s72
      %s75 = sphi 0, %s74
      %s89 = sphi 0, %s75
      %s93 = sphi 0, %s93
      %s95 = sphi 0, %s93
      %s96 = sphi 0, %s95
      %s110 = sphi 0, %s96
      %s114 = sphi 0, %s114
      %s116 = sphi 0, %s114
      %s117 = sphi 0, %s116
      %s131 = sphi 0, %s117
      %s135 = sphi 0, %s135
      %s137 = sphi 0, %s135
      %s138 = sphi 0, %s137
      %s152 = sphi 0, %s138
      %s156 = sphi 0, %s156
      %s158 = sphi 0, %s156
      %s159 = sphi 0, %s158
      %s173 = sphi 0, %s159
      %s177 = sphi 0, %s177
      %s179 = sphi 0, %s177
      %s180 = sphi 0, %s179
      %s194 = sphi 0, %s180
      %s200 = sphi 0, %s202
      %s203 = sphi 0, %s200
      %s204 = sphi 0, %s203
      %s220 = sphi 0, %s204
    $region4: #{tpu_custom_call.1} parent=1 // loop_header_branch
      %20 = sbr.rel (%p18) target = $region8
    $region5: #{tpu_custom_call.1} parent=1 // loop_body
      %s22 = ssub.s32 %s17, 1
      %s23 = ssub.s32 %s17, 2
      %s24 = sadd.s32 %s17, 1
      %s25 = ssub.s32 %s17, %s24
      %p26 = scmp.eq.s32.totalorder %s25, 0
      %s28 = sadd.s32 %s27, 1
      %s29 = scalar_select %p26, %s27, %s28
      %p32 = pneg %p26
      %p33 = scmp.eq.s32.totalorder %s17, 1
      %p34 = por %p32, %p33
      %p35 = scmp.ne.s32.totalorder %s27, %s30
      %p36 = scmp.eq.s32.totalorder %s17, 0
      %p37 = por %p35, %p36
      %p38 = scmp.ne.s32.totalorder %s27, %s30
      %p39 = scmp.eq.s32.totalorder %s22, 1
      %p40 = por %p38, %p39
      %p41 = scmp.ne.s32.totalorder %s30, %s31
      %p42 = scmp.eq.s32.totalorder %s22, 0
      %p43 = por %p41, %p42
      %p44 = scmp.ne.s32.totalorder %s30, %s31
      %p45 = scmp.eq.s32.totalorder %s23, 1
      %p46 = por %p44, %p45
      %p48 = scmp.ne.s32.totalorder %s31, %s47
      %p49 = scmp.eq.s32.totalorder %s23, 0
      %p50 = por %p48, %p49
      %s52 = sadd.s32 %s51, 1
      %p55 = scmp.eq.s32.totalorder %s17, 1
      %p56 = scmp.ne.s32.totalorder %s51, %s53
      %p57 = scmp.eq.s32.totalorder %s17, 0
      %p58 = por %p56, %p57
      %p59 = scmp.ne.s32.totalorder %s51, %s53
      %p60 = scmp.eq.s32.totalorder %s22, 1
      %p61 = por %p59, %p60
      %p62 = scmp.ne.s32.totalorder %s53, %s54
      %p63 = scmp.eq.s32.totalorder %s22, 0
      %p64 = por %p62, %p63
      %p65 = scmp.ne.s32.totalorder %s53, %s54
      %p66 = scmp.eq.s32.totalorder %s23, 1
      %p67 = por %p65, %p66
      %p69 = scmp.ne.s32.totalorder %s54, %s68
      %p70 = scmp.eq.s32.totalorder %s23, 0
      %p71 = por %p69, %p70
      %s73 = sadd.s32 %s72, 1
      %p76 = scmp.eq.s32.totalorder %s17, 1
      %p77 = scmp.ne.s32.totalorder %s72, %s74
      %p78 = scmp.eq.s32.totalorder %s17, 0
      %p79 = por %p77, %p78
      %p80 = scmp.ne.s32.totalorder %s72, %s74
      %p81 = scmp.eq.s32.totalorder %s22, 1
      %p82 = por %p80, %p81
      %p83 = scmp.ne.s32.totalorder %s74, %s75
      %p84 = scmp.eq.s32.totalorder %s22, 0
      %p85 = por %p83, %p84
      %p86 = scmp.ne.s32.totalorder %s74, %s75
      %p87 = scmp.eq.s32.totalorder %s23, 1
      %p88 = por %p86, %p87
      %p90 = scmp.ne.s32.totalorder %s75, %s89
      %p91 = scmp.eq.s32.totalorder %s23, 0
      %p92 = por %p90, %p91
      %s94 = sadd.s32 %s93, 1
      %p97 = scmp.eq.s32.totalorder %s17, 1
      %p98 = scmp.ne.s32.totalorder %s93, %s95
      %p99 = scmp.eq.s32.totalorder %s17, 0
      %p100 = por %p98, %p99
      %p101 = scmp.ne.s32.totalorder %s93, %s95
      %p102 = scmp.eq.s32.totalorder %s22, 1
      %p103 = por %p101, %p102
      %p104 = scmp.ne.s32.totalorder %s95, %s96
      %p105 = scmp.eq.s32.totalorder %s22, 0
      %p106 = por %p104, %p105
      %p107 = scmp.ne.s32.totalorder %s95, %s96
      %p108 = scmp.eq.s32.totalorder %s23, 1
      %p109 = por %p107, %p108
      %p111 = scmp.ne.s32.totalorder %s96, %s110
      %p112 = scmp.eq.s32.totalorder %s23, 0
      %p113 = por %p111, %p112
      %s115 = sadd.s32 %s114, 1
      %p118 = scmp.eq.s32.totalorder %s17, 1
      %p119 = scmp.ne.s32.totalorder %s114, %s116
      %p120 = scmp.eq.s32.totalorder %s17, 0
      %p121 = por %p119, %p120
      %p122 = scmp.ne.s32.totalorder %s114, %s116
      %p123 = scmp.eq.s32.totalorder %s22, 1
      %p124 = por %p122, %p123
      %p125 = scmp.ne.s32.totalorder %s116, %s117
      %p126 = scmp.eq.s32.totalorder %s22, 0
      %p127 = por %p125, %p126
      %p128 = scmp.ne.s32.totalorder %s116, %s117
      %p129 = scmp.eq.s32.totalorder %s23, 1
      %p130 = por %p128, %p129
      %p132 = scmp.ne.s32.totalorder %s117, %s131
      %p133 = scmp.eq.s32.totalorder %s23, 0
      %p134 = por %p132, %p133
      %s136 = sadd.s32 %s135, 1
      %p139 = scmp.eq.s32.totalorder %s17, 1
      %p140 = scmp.ne.s32.totalorder %s135, %s137
      %p141 = scmp.eq.s32.totalorder %s17, 0
      %p142 = por %p140, %p141
      %p143 = scmp.ne.s32.totalorder %s135, %s137
      %p144 = scmp.eq.s32.totalorder %s22, 1
      %p145 = por %p143, %p144
      %p146 = scmp.ne.s32.totalorder %s137, %s138
      %p147 = scmp.eq.s32.totalorder %s22, 0
      %p148 = por %p146, %p147
      %p149 = scmp.ne.s32.totalorder %s137, %s138
      %p150 = scmp.eq.s32.totalorder %s23, 1
      %p151 = por %p149, %p150
      %p153 = scmp.ne.s32.totalorder %s138, %s152
      %p154 = scmp.eq.s32.totalorder %s23, 0
      %p155 = por %p153, %p154
      %s157 = sadd.s32 %s156, 1
      %p160 = scmp.eq.s32.totalorder %s17, 1
      %p161 = scmp.ne.s32.totalorder %s156, %s158
      %p162 = scmp.eq.s32.totalorder %s17, 0
      %p163 = por %p161, %p162
      %p164 = scmp.ne.s32.totalorder %s156, %s158
      %p165 = scmp.eq.s32.totalorder %s22, 1
      %p166 = por %p164, %p165
      %p167 = scmp.ne.s32.totalorder %s158, %s159
      %p168 = scmp.eq.s32.totalorder %s22, 0
      %p169 = por %p167, %p168
      %p170 = scmp.ne.s32.totalorder %s158, %s159
      %p171 = scmp.eq.s32.totalorder %s23, 1
      %p172 = por %p170, %p171
      %p174 = scmp.ne.s32.totalorder %s159, %s173
      %p175 = scmp.eq.s32.totalorder %s23, 0
      %p176 = por %p174, %p175
      %s178 = sadd.s32 %s177, 1
      %p181 = scmp.eq.s32.totalorder %s17, 1
      %p182 = scmp.ne.s32.totalorder %s177, %s179
      %p183 = scmp.eq.s32.totalorder %s17, 0
      %p184 = por %p182, %p183
      %p185 = scmp.ne.s32.totalorder %s177, %s179
      %p186 = scmp.eq.s32.totalorder %s22, 1
      %p187 = por %p185, %p186
      %p188 = scmp.ne.s32.totalorder %s179, %s180
      %p189 = scmp.eq.s32.totalorder %s22, 0
      %p190 = por %p188, %p189
      %p191 = scmp.ne.s32.totalorder %s179, %s180
      %p192 = scmp.eq.s32.totalorder %s23, 1
      %p193 = por %p191, %p192
      %p195 = scmp.ne.s32.totalorder %s180, %s194
      %p196 = scmp.eq.s32.totalorder %s23, 0
      %p197 = por %p195, %p196
      %s198 = ssub.s32 %s17, %s24
      %p199 = scmp.eq.s32.totalorder %s198, 0
      %s201 = sadd.s32 %s200, 1
      %s202 = scalar_select %p199, %s200, %s201
      %p205 = pneg %p199
      %p206 = scmp.eq.s32.totalorder %s17, 1
      %p207 = por %p205, %p206
      %p208 = scmp.ne.s32.totalorder %s200, %s203
      %p209 = scmp.eq.s32.totalorder %s17, 0
      %p210 = por %p208, %p209
      %p211 = scmp.ne.s32.totalorder %s200, %s203
      %p212 = scmp.eq.s32.totalorder %s22, 1
      %p213 = por %p211, %p212
      %p214 = scmp.ne.s32.totalorder %s203, %s204
      %p215 = scmp.eq.s32.totalorder %s22, 0
      %p216 = por %p214, %p215
      %p217 = scmp.ne.s32.totalorder %s203, %s204
      %p218 = scmp.eq.s32.totalorder %s23, 1
      %p219 = por %p217, %p218
      %p221 = scmp.ne.s32.totalorder %s204, %s220
      %p222 = scmp.eq.s32.totalorder %s23, 0
      %p223 = por %p221, %p222
      %p224 = scmp.le.s32.totalorder 1, %s17
      %p225 = scmp.lt.s32.totalorder %s17, 3
      %p226 = pnand %p224, %p225
      %p227 = pneg %p226
      // Predicated region
      $region9: #{tpu_custom_call.1} parent=5 // pred_check
        _
      $region10: #{tpu_custom_call.1} parent=5 // pred_check_branch
        %229 = sbr.rel (%p226) target = $region12
      $region11: #{tpu_custom_call.1} parent=5 // pred_region
        %s230 = ssub.s32 %s17, 1
        // Predicated region
        $region13: #{tpu_custom_call.1} parent=11 // pred_check
          %p231 = pneg %p64
        $region14: #{tpu_custom_call.1} parent=11 // pred_check_branch
          %233 = sbr.rel (%p231) target = $region16
        $region15: #{tpu_custom_call.1} parent=11 // pred_region
          _
        $region16: #{tpu_custom_call.1} parent=11 // pred_fallthru
          _
        // Predicated region
        $region17: #{tpu_custom_call.1} parent=11 // pred_check
          %p234 = pneg %p85
        $region18: #{tpu_custom_call.1} parent=11 // pred_check_branch
          %236 = sbr.rel (%p234) target = $region20
        $region19: #{tpu_custom_call.1} parent=11 // pred_region
          _
        $region20: #{tpu_custom_call.1} parent=11 // pred_fallthru
          _
        // Predicated region
        $region21: #{tpu_custom_call.1} parent=11 // pred_check
          %p237 = pneg %p106
        $region22: #{tpu_custom_call.1} parent=11 // pred_check_branch
          %239 = sbr.rel (%p237) target = $region24
        $region23: #{tpu_custom_call.1} parent=11 // pred_region
          _
        $region24: #{tpu_custom_call.1} parent=11 // pred_fallthru
          _
        // Predicated region
        $region25: #{tpu_custom_call.1} parent=11 // pred_check
          %p240 = pneg %p127
        $region26: #{tpu_custom_call.1} parent=11 // pred_check_branch
          %242 = sbr.rel (%p240) target = $region28
        $region27: #{tpu_custom_call.1} parent=11 // pred_region
          _
        $region28: #{tpu_custom_call.1} parent=11 // pred_fallthru
          _
        // Predicated region
        $region29: #{tpu_custom_call.1} parent=11 // pred_check
          %p243 = pneg %p148
        $region30: #{tpu_custom_call.1} parent=11 // pred_check_branch
          %245 = sbr.rel (%p243) target = $region32
        $region31: #{tpu_custom_call.1} parent=11 // pred_region
          _
        $region32: #{tpu_custom_call.1} parent=11 // pred_fallthru
          _
        // Predicated region
        $region33: #{tpu_custom_call.1} parent=11 // pred_check
          %p246 = pneg %p169
        $region34: #{tpu_custom_call.1} parent=11 // pred_check_branch
          %248 = sbr.rel (%p246) target = $region36
        $region35: #{tpu_custom_call.1} parent=11 // pred_region
          _
        $region36: #{tpu_custom_call.1} parent=11 // pred_fallthru
          _
        // Predicated region
        $region37: #{tpu_custom_call.1} parent=11 // pred_check
          %p249 = pneg %p190
        $region38: #{tpu_custom_call.1} parent=11 // pred_check_branch
          %251 = sbr.rel (%p249) target = $region40
        $region39: #{tpu_custom_call.1} parent=11 // pred_region
          _
        $region40: #{tpu_custom_call.1} parent=11 // pred_fallthru
          _
      $region12: #{tpu_custom_call.1} parent=5 // pred_fallthru
        _
      %p252 = scmp.lt.s32.totalorder %s17, 2
      // Predicated region
      $region41: #{tpu_custom_call.1} parent=5 // pred_check
        %p253 = pneg %p252
      $region42: #{tpu_custom_call.1} parent=5 // pred_check_branch
        %255 = sbr.rel (%p253) target = $region44
      $region43: #{tpu_custom_call.1} parent=5 // pred_region
        // Predicated region
        $region45: #{tpu_custom_call.1} parent=43 // pred_check
          %p256 = pneg %p37
        $region46: #{tpu_custom_call.1} parent=43 // pred_check_branch
          %258 = sbr.rel (%p256) target = $region48
        $region47: #{tpu_custom_call.1} parent=43 // pred_region
          %p259 = scmp.lt.s32.totalorder %s17, 1
          %s260 = scalar_select %p259, %s17, 1
          %s261 = smul.addr %s260, 8
          %s262 = smul.addr %s261, 8
          %s263 = scalar_lea.vmem %s0, %s262
        $region48: #{tpu_custom_call.1} parent=43 // pred_fallthru
          _
      $region44: #{tpu_custom_call.1} parent=5 // pred_fallthru
        _
      %p264 = scmp.le.s32.totalorder 1, %s17
      %p265 = scmp.lt.s32.totalorder %s17, 3
      %p266 = pnand %p264, %p265
      %p267 = pneg %p266
      // Predicated region
      $region49: #{tpu_custom_call.1} parent=5 // pred_check
        _
      $region50: #{tpu_custom_call.1} parent=5 // pred_check_branch
        %269 = sbr.rel (%p266) target = $region52
      $region51: #{tpu_custom_call.1} parent=5 // pred_region
        %s270 = ssub.s32 %s17, 1
        %p271 = scmp.lt.s32.totalorder %s22, 1
        %s272 = scalar_select %p271, %s22, 1
        %s273 = smul.addr %s272, 8
        %s274 = smul.addr %s273, 8
        %s275 = scalar_lea.vmem %s0, %s274
        %p276 = pneg %p43
        %p277 = pneg %p40
        %p278 = pneg %p64
        %p279 = pneg %p61
        %p280 = pneg %p85
        %p281 = pneg %p82
        %p282 = pneg %p106
        %p283 = pneg %p103
        %p284 = pneg %p127
        %p285 = pneg %p124
        %p286 = pneg %p148
        %p287 = pneg %p145
        %p288 = pneg %p169
        %p289 = pneg %p166
        %p290 = pneg %p190
        %p291 = pneg %p187
        %p292 = pneg %p216
        %p293 = pneg %p213
        %s294 = sand.u32 %s203, 1
        %s295 = scalar_lea.sflag [#allocation8], %s294
        %s296 = sand.u32 %s203, 1
        %s297 = smul.addr %s296, 64
        %s298 = scalar_lea.vmem [#allocation7], %s297
        %p299 = scmp.lt.s32.totalorder %s22, 1
        %s300 = scalar_select %p299, %s22, 1
        %s301 = smul.addr %s300, 8
        %s302 = smul.addr %s301, 8
        %s303 = scalar_lea.vmem %s0, %s302
        %v304 = vld [vmem:[%s303] sm:$0xff]
        %v305 = vld [vmem:[%s303 + $0x8] sm:$0xff]
        %v306 = vld [vmem:[%s303 + $0x10] sm:$0xff]
        %v307 = vld [vmem:[%s303 + $0x18] sm:$0xff]
        %v308 = vld [vmem:[%s303 + $0x20] sm:$0xff]
        %v309 = vld [vmem:[%s303 + $0x28] sm:$0xff]
        %v310 = vld [vmem:[%s303 + $0x30] sm:$0xff]
        %v311 = vld [vmem:[%s303 + $0x38] sm:$0xff]
        %v312 = vld [vmem:[%s1] sm:$0xff]
        %v313 = vld [vmem:[%s1 + $0x8] sm:$0xff]
        %vm314 = vcmask 130048
        %v316 = vsel %vm314, %v304, 0
        %v319 = vsel %vm314, %v305, 0
        %v322 = vsel %vm314, %v306, 0
        %v325 = vsel %vm314, %v307, 0
        %v328 = vsel %vm314, %v308, 0
        %v331 = vsel %vm314, %v309, 0
        %v334 = vsel %vm314, %v310, 0
        %v337 = vsel %vm314, %v311, 0
        %339 = vmatprep.subr.mxu0 0.0
        %340 = vmatpush1.msra.mxu0 0.0
        %341 = vmatprep.subr.mxu0 0.0
        %342 = vmatpush1.msra.mxu0 0.0
        %343 = vmatprep.subr.mxu0 0.0
        %344 = vmatpush1.msra.mxu0 0.0
        %345 = vmatprep.subr.mxu0 0.0
        %346 = vmatpush1.msra.mxu0 0.0
        %347 = vmatprep.subr.mxu0 0.0
        %348 = vmatpush1.msra.mxu0 0.0
        %349 = vmatprep.subr.mxu0 0.0
        %350 = vmatpush1.msra.mxu0 0.0
        %351 = vmatprep.subr.mxu0 0.0
        %352 = vmatpush1.msra.mxu0 0.0
        %353 = vmatprep.subr.mxu0 0.0
        %354 = vmatpush1.msra.mxu0 0.0
        %355 = vmatprep.subr.mxu0 0.0
        %356 = vmatpush1.msra.mxu0 0.0
        %357 = vmatprep.subr.mxu0 0.0
        %358 = vmatpush1.msra.mxu0 0.0
        %359 = vmatprep.subr.mxu0 0.0
        %360 = vmatpush1.msra.mxu0 0.0
        %361 = vmatprep.subr.mxu0 0.0
        %362 = vmatpush1.msra.mxu0 0.0
        %363 = vmatprep.subr.mxu0 0.0
        %364 = vmatpush1.msra.mxu0 0.0
        %365 = vmatprep.subr.mxu0 0.0
        %366 = vmatpush1.msra.mxu0 0.0
        %367 = vmatprep.subr.mxu0 0.0
        %v368 = vand.u32 %v313, 4294901760
        %369 = vmatpush1.msra.mxu0 %v368
        %370 = vmatprep.subr.mxu0 0.0
        %v371 = vand.u32 %v312, 4294901760
        %372 = vmatpush1.msra.mxu0 %v371
        %373 = vmatprep.subr.mxu0 0.0
        %374 = vmatpush2.msra.mxu0 0.0
        %375 = vmatprep.subr.mxu0 0.0
        %376 = vmatpush2.msra.mxu0 0.0
        %377 = vmatprep.subr.mxu0 0.0
        %378 = vmatpush2.msra.mxu0 0.0
        %379 = vmatprep.subr.mxu0 0.0
        %380 = vmatpush2.msra.mxu0 0.0
        %381 = vmatprep.subr.mxu0 0.0
        %382 = vmatpush2.msra.mxu0 0.0
        %383 = vmatprep.subr.mxu0 0.0
        %384 = vmatpush2.msra.mxu0 0.0
        %385 = vmatprep.subr.mxu0 0.0
        %386 = vmatpush2.msra.mxu0 0.0
        %387 = vmatprep.subr.mxu0 0.0
        %388 = vmatpush2.msra.mxu0 0.0
        %389 = vmatprep.subr.mxu0 0.0
        %390 = vmatpush2.msra.mxu0 0.0
        %391 = vmatprep.subr.mxu0 0.0
        %392 = vmatpush2.msra.mxu0 0.0
        %393 = vmatprep.subr.mxu0 0.0
        %394 = vmatpush2.msra.mxu0 0.0
        %395 = vmatprep.subr.mxu0 0.0
        %396 = vmatpush2.msra.mxu0 0.0
        %397 = vmatprep.subr.mxu0 0.0
        %398 = vmatpush2.msra.mxu0 0.0
        %399 = vmatprep.subr.mxu0 0.0
        %400 = vmatpush2.msra.mxu0 0.0
        %401 = vmatprep.subr.mxu0 0.0
        %402 = vmatpush2.msra.mxu0 0.0
        %403 = vmatprep.subr.mxu0 0.0
        %404 = vmatpush2.msra.mxu0 0.0
        %405 = vmatprep.mubr.f32.mxu0 0.0
        %v406 = vand.u32 %v316, 4294901760
        %v407 = vsub.f32 %v316, %v406
        %v408 = vand.u32 %v407, 4294901760
        %v409 = vsub.f32 %v407, %v408
        %v410 = vand.u32 %v409, 4294901760
        %411 = vmatmul.mubr.f32.gmra.mxu0 %v410
        %v412 = vpop.f32.mrf.mxu0
        %v413 = vadd.f32 0.0, %v412
        %v414 = vpop.f32.mrf.mxu0
        %415 = vmatprep.mubr.f32.mxu0 0.0
        %v416 = vand.u32 %v319, 4294901760
        %v417 = vsub.f32 %v319, %v416
        %v418 = vand.u32 %v417, 4294901760
        %v419 = vsub.f32 %v417, %v418
        %v420 = vand.u32 %v419, 4294901760
        %421 = vmatmul.mubr.f32.gmra.mxu0 %v420
        %v422 = vpop.f32.mrf.mxu0
        %v423 = vadd.f32 0.0, %v422
        %v424 = vpop.f32.mrf.mxu0
        %425 = vmatprep.mubr.f32.mxu0 0.0
        %v426 = vand.u32 %v322, 4294901760
        %v427 = vsub.f32 %v322, %v426
        %v428 = vand.u32 %v427, 4294901760
        %v429 = vsub.f32 %v427, %v428
        %v430 = vand.u32 %v429, 4294901760
        %431 = vmatmul.mubr.f32.gmra.mxu0 %v430
        %v432 = vpop.f32.mrf.mxu0
        %v433 = vadd.f32 0.0, %v432
        %v434 = vpop.f32.mrf.mxu0
        %435 = vmatprep.mubr.f32.mxu0 0.0
        %v436 = vand.u32 %v325, 4294901760
        %v437 = vsub.f32 %v325, %v436
        %v438 = vand.u32 %v437, 4294901760
        %v439 = vsub.f32 %v437, %v438
        %v440 = vand.u32 %v439, 4294901760
        %441 = vmatmul.mubr.f32.gmra.mxu0 %v440
        %v442 = vpop.f32.mrf.mxu0
        %v443 = vadd.f32 0.0, %v442
        %v444 = vpop.f32.mrf.mxu0
        %445 = vmatprep.mubr.f32.mxu0 0.0
        %v446 = vand.u32 %v328, 4294901760
        %v447 = vsub.f32 %v328, %v446
        %v448 = vand.u32 %v447, 4294901760
        %v449 = vsub.f32 %v447, %v448
        %v450 = vand.u32 %v449, 4294901760
        %451 = vmatmul.mubr.f32.gmra.mxu0 %v450
        %v452 = vpop.f32.mrf.mxu0
        %v453 = vadd.f32 0.0, %v452
        %v454 = vpop.f32.mrf.mxu0
        %455 = vmatprep.mubr.f32.mxu0 0.0
        %v456 = vand.u32 %v331, 4294901760
        %v457 = vsub.f32 %v331, %v456
        %v458 = vand.u32 %v457, 4294901760
        %v459 = vsub.f32 %v457, %v458
        %v460 = vand.u32 %v459, 4294901760
        %461 = vmatmul.mubr.f32.gmra.mxu0 %v460
        %v462 = vpop.f32.mrf.mxu0
        %v463 = vadd.f32 0.0, %v462
        %v464 = vpop.f32.mrf.mxu0
        %465 = vmatprep.mubr.f32.mxu0 0.0
        %v466 = vand.u32 %v334, 4294901760
        %v467 = vsub.f32 %v334, %v466
        %v468 = vand.u32 %v467, 4294901760
        %v469 = vsub.f32 %v467, %v468
        %v470 = vand.u32 %v469, 4294901760
        %471 = vmatmul.mubr.f32.gmra.mxu0 %v470
        %v472 = vpop.f32.mrf.mxu0
        %v473 = vadd.f32 0.0, %v472
        %v474 = vpop.f32.mrf.mxu0
        %475 = vmatprep.mubr.f32.mxu0 0.0
        %v476 = vand.u32 %v337, 4294901760
        %v477 = vsub.f32 %v337, %v476
        %v478 = vand.u32 %v477, 4294901760
        %v479 = vsub.f32 %v477, %v478
        %v480 = vand.u32 %v479, 4294901760
        %481 = vmatmul.mubr.f32.gmra.mxu0 %v480
        %v482 = vpop.f32.mrf.mxu0
        %v483 = vadd.f32 0.0, %v482
        %v484 = vpop.f32.mrf.mxu0
        %485 = vdwg.mxu0
        %486 = vmatprep.subr.mxu0 0.0
        %487 = vmatpush1.msra.mxu0 0.0
        %488 = vmatprep.subr.mxu0 0.0
        %489 = vmatpush1.msra.mxu0 0.0
        %490 = vmatprep.subr.mxu0 0.0
        %491 = vmatpush1.msra.mxu0 0.0
        %492 = vmatprep.subr.mxu0 0.0
        %493 = vmatpush1.msra.mxu0 0.0
        %494 = vmatprep.subr.mxu0 0.0
        %495 = vmatpush1.msra.mxu0 0.0
        %496 = vmatprep.subr.mxu0 0.0
        %497 = vmatpush1.msra.mxu0 0.0
        %498 = vmatprep.subr.mxu0 0.0
        %499 = vmatpush1.msra.mxu0 0.0
        %500 = vmatprep.subr.mxu0 0.0
        %501 = vmatpush1.msra.mxu0 0.0
        %502 = vmatprep.subr.mxu0 0.0
        %503 = vmatpush1.msra.mxu0 0.0
        %504 = vmatprep.subr.mxu0 0.0
        %505 = vmatpush1.msra.mxu0 0.0
        %506 = vmatprep.subr.mxu0 0.0
        %507 = vmatpush1.msra.mxu0 0.0
        %508 = vmatprep.subr.mxu0 0.0
        %509 = vmatpush1.msra.mxu0 0.0
        %510 = vmatprep.subr.mxu0 0.0
        %511 = vmatpush1.msra.mxu0 0.0
        %512 = vmatprep.subr.mxu0 0.0
        %513 = vmatpush1.msra.mxu0 0.0
        %514 = vmatprep.subr.mxu0 0.0
        %v515 = vand.u32 %v313, 4294901760
        %v516 = vsub.f32 %v313, %v515
        %v517 = vand.u32 %v516, 4294901760
        %v518 = vsub.f32 %v516, %v517
        %v519 = vand.u32 %v518, 4294901760
        %520 = vmatpush1.msra.mxu0 %v519
        %521 = vmatprep.subr.mxu0 0.0
        %v522 = vand.u32 %v312, 4294901760
        %v523 = vsub.f32 %v312, %v522
        %v524 = vand.u32 %v523, 4294901760
        %v525 = vsub.f32 %v523, %v524
        %v526 = vand.u32 %v525, 4294901760
        %527 = vmatpush1.msra.mxu0 %v526
        %528 = vmatprep.subr.mxu0 0.0
        %529 = vmatpush2.msra.mxu0 0.0
        %530 = vmatprep.subr.mxu0 0.0
        %531 = vmatpush2.msra.mxu0 0.0
        %532 = vmatprep.subr.mxu0 0.0
        %533 = vmatpush2.msra.mxu0 0.0
        %534 = vmatprep.subr.mxu0 0.0
        %535 = vmatpush2.msra.mxu0 0.0
        %536 = vmatprep.subr.mxu0 0.0
        %537 = vmatpush2.msra.mxu0 0.0
        %538 = vmatprep.subr.mxu0 0.0
        %539 = vmatpush2.msra.mxu0 0.0
        %540 = vmatprep.subr.mxu0 0.0
        %541 = vmatpush2.msra.mxu0 0.0
        %542 = vmatprep.subr.mxu0 0.0
        %543 = vmatpush2.msra.mxu0 0.0
        %544 = vmatprep.subr.mxu0 0.0
        %545 = vmatpush2.msra.mxu0 0.0
        %546 = vmatprep.subr.mxu0 0.0
        %547 = vmatpush2.msra.mxu0 0.0
        %548 = vmatprep.subr.mxu0 0.0
        %549 = vmatpush2.msra.mxu0 0.0
        %550 = vmatprep.subr.mxu0 0.0
        %551 = vmatpush2.msra.mxu0 0.0
        %552 = vmatprep.subr.mxu0 0.0
        %553 = vmatpush2.msra.mxu0 0.0
        %554 = vmatprep.subr.mxu0 0.0
        %555 = vmatpush2.msra.mxu0 0.0
        %556 = vmatprep.subr.mxu0 0.0
        %557 = vmatpush2.msra.mxu0 0.0
        %558 = vmatprep.subr.mxu0 0.0
        %559 = vmatpush2.msra.mxu0 0.0
        %560 = vmatprep.mubr.f32.mxu0 0.0
        %v561 = vand.u32 %v316, 4294901760
        %562 = vmatmul.mubr.f32.gmra.mxu0 %v561
        %v563 = vpop.f32.mrf.mxu0
        %v564 = vadd.f32 %v413, %v563
        %v565 = vpop.f32.mrf.mxu0
        %566 = vmatprep.mubr.f32.mxu0 0.0
        %v567 = vand.u32 %v319, 4294901760
        %568 = vmatmul.mubr.f32.gmra.mxu0 %v567
        %v569 = vpop.f32.mrf.mxu0
        %v570 = vadd.f32 %v423, %v569
        %v571 = vpop.f32.mrf.mxu0
        %572 = vmatprep.mubr.f32.mxu0 0.0
        %v573 = vand.u32 %v322, 4294901760
        %574 = vmatmul.mubr.f32.gmra.mxu0 %v573
        %v575 = vpop.f32.mrf.mxu0
        %v576 = vadd.f32 %v433, %v575
        %v577 = vpop.f32.mrf.mxu0
        %578 = vmatprep.mubr.f32.mxu0 0.0
        %v579 = vand.u32 %v325, 4294901760
        %580 = vmatmul.mubr.f32.gmra.mxu0 %v579
        %v581 = vpop.f32.mrf.mxu0
        %v582 = vadd.f32 %v443, %v581
        %v583 = vpop.f32.mrf.mxu0
        %584 = vmatprep.mubr.f32.mxu0 0.0
        %v585 = vand.u32 %v328, 4294901760
        %586 = vmatmul.mubr.f32.gmra.mxu0 %v585
        %v587 = vpop.f32.mrf.mxu0
        %v588 = vadd.f32 %v453, %v587
        %v589 = vpop.f32.mrf.mxu0
        %590 = vmatprep.mubr.f32.mxu0 0.0
        %v591 = vand.u32 %v331, 4294901760
        %592 = vmatmul.mubr.f32.gmra.mxu0 %v591
        %v593 = vpop.f32.mrf.mxu0
        %v594 = vadd.f32 %v463, %v593
        %v595 = vpop.f32.mrf.mxu0
        %596 = vmatprep.mubr.f32.mxu0 0.0
        %v597 = vand.u32 %v334, 4294901760
        %598 = vmatmul.mubr.f32.gmra.mxu0 %v597
        %v599 = vpop.f32.mrf.mxu0
        %v600 = vadd.f32 %v473, %v599
        %v601 = vpop.f32.mrf.mxu0
        %602 = vmatprep.mubr.f32.mxu0 0.0
        %v603 = vand.u32 %v337, 4294901760
        %604 = vmatmul.mubr.f32.gmra.mxu0 %v603
        %v605 = vpop.f32.mrf.mxu0
        %v606 = vadd.f32 %v483, %v605
        %v607 = vpop.f32.mrf.mxu0
        %608 = vdwg.mxu0
        %609 = vmatprep.subr.mxu0 0.0
        %610 = vmatpush1.msra.mxu0 0.0
        %611 = vmatprep.subr.mxu0 0.0
        %612 = vmatpush1.msra.mxu0 0.0
        %613 = vmatprep.subr.mxu0 0.0
        %614 = vmatpush1.msra.mxu0 0.0
        %615 = vmatprep.subr.mxu0 0.0
        %616 = vmatpush1.msra.mxu0 0.0
        %617 = vmatprep.subr.mxu0 0.0
        %618 = vmatpush1.msra.mxu0 0.0
        %619 = vmatprep.subr.mxu0 0.0
        %620 = vmatpush1.msra.mxu0 0.0
        %621 = vmatprep.subr.mxu0 0.0
        %622 = vmatpush1.msra.mxu0 0.0
        %623 = vmatprep.subr.mxu0 0.0
        %624 = vmatpush1.msra.mxu0 0.0
        %625 = vmatprep.subr.mxu0 0.0
        %626 = vmatpush1.msra.mxu0 0.0
        %627 = vmatprep.subr.mxu0 0.0
        %628 = vmatpush1.msra.mxu0 0.0
        %629 = vmatprep.subr.mxu0 0.0
        %630 = vmatpush1.msra.mxu0 0.0
        %631 = vmatprep.subr.mxu0 0.0
        %632 = vmatpush1.msra.mxu0 0.0
        %633 = vmatprep.subr.mxu0 0.0
        %634 = vmatpush1.msra.mxu0 0.0
        %635 = vmatprep.subr.mxu0 0.0
        %636 = vmatpush1.msra.mxu0 0.0
        %637 = vmatprep.subr.mxu0 0.0
        %v638 = vand.u32 %v313, 4294901760
        %v639 = vsub.f32 %v313, %v638
        %640 = vmatpush1.msra.mxu0 %v639
        %641 = vmatprep.subr.mxu0 0.0
        %v642 = vand.u32 %v312, 4294901760
        %v643 = vsub.f32 %v312, %v642
        %644 = vmatpush1.msra.mxu0 %v643
        %645 = vmatprep.subr.mxu0 0.0
        %646 = vmatpush2.msra.mxu0 0.0
        %647 = vmatprep.subr.mxu0 0.0
        %648 = vmatpush2.msra.mxu0 0.0
        %649 = vmatprep.subr.mxu0 0.0
        %650 = vmatpush2.msra.mxu0 0.0
        %651 = vmatprep.subr.mxu0 0.0
        %652 = vmatpush2.msra.mxu0 0.0
        %653 = vmatprep.subr.mxu0 0.0
        %654 = vmatpush2.msra.mxu0 0.0
        %655 = vmatprep.subr.mxu0 0.0
        %656 = vmatpush2.msra.mxu0 0.0
        %657 = vmatprep.subr.mxu0 0.0
        %658 = vmatpush2.msra.mxu0 0.0
        %659 = vmatprep.subr.mxu0 0.0
        %660 = vmatpush2.msra.mxu0 0.0
        %661 = vmatprep.subr.mxu0 0.0
        %662 = vmatpush2.msra.mxu0 0.0
        %663 = vmatprep.subr.mxu0 0.0
        %664 = vmatpush2.msra.mxu0 0.0
        %665 = vmatprep.subr.mxu0 0.0
        %666 = vmatpush2.msra.mxu0 0.0
        %667 = vmatprep.subr.mxu0 0.0
        %668 = vmatpush2.msra.mxu0 0.0
        %669 = vmatprep.subr.mxu0 0.0
        %670 = vmatpush2.msra.mxu0 0.0
        %671 = vmatprep.subr.mxu0 0.0
        %672 = vmatpush2.msra.mxu0 0.0
        %673 = vmatprep.subr.mxu0 0.0
        %674 = vmatpush2.msra.mxu0 0.0
        %675 = vmatprep.subr.mxu0 0.0
        %676 = vmatpush2.msra.mxu0 0.0
        %677 = vmatprep.mubr.f32.mxu0 0.0
        %v678 = vand.u32 %v316, 4294901760
        %v679 = vsub.f32 %v316, %v678
        %680 = vmatmul.mubr.f32.gmra.mxu0 %v679
        %v681 = vpop.f32.mrf.mxu0
        %v682 = vadd.f32 %v564, %v681
        %v683 = vpop.f32.mrf.mxu0
        %684 = vmatprep.mubr.f32.mxu0 0.0
        %v685 = vand.u32 %v319, 4294901760
        %v686 = vsub.f32 %v319, %v685
        %687 = vmatmul.mubr.f32.gmra.mxu0 %v686
        %v688 = vpop.f32.mrf.mxu0
        %v689 = vadd.f32 %v570, %v688
        %v690 = vpop.f32.mrf.mxu0
        %691 = vmatprep.mubr.f32.mxu0 0.0
        %v692 = vand.u32 %v322, 4294901760
        %v693 = vsub.f32 %v322, %v692
        %694 = vmatmul.mubr.f32.gmra.mxu0 %v693
        %v695 = vpop.f32.mrf.mxu0
        %v696 = vadd.f32 %v576, %v695
        %v697 = vpop.f32.mrf.mxu0
        %698 = vmatprep.mubr.f32.mxu0 0.0
        %v699 = vand.u32 %v325, 4294901760
        %v700 = vsub.f32 %v325, %v699
        %701 = vmatmul.mubr.f32.gmra.mxu0 %v700
        %v702 = vpop.f32.mrf.mxu0
        %v703 = vadd.f32 %v582, %v702
        %v704 = vpop.f32.mrf.mxu0
        %705 = vmatprep.mubr.f32.mxu0 0.0
        %v706 = vand.u32 %v328, 4294901760
        %v707 = vsub.f32 %v328, %v706
        %708 = vmatmul.mubr.f32.gmra.mxu0 %v707
        %v709 = vpop.f32.mrf.mxu0
        %v710 = vadd.f32 %v588, %v709
        %v711 = vpop.f32.mrf.mxu0
        %712 = vmatprep.mubr.f32.mxu0 0.0
        %v713 = vand.u32 %v331, 4294901760
        %v714 = vsub.f32 %v331, %v713
        %715 = vmatmul.mubr.f32.gmra.mxu0 %v714
        %v716 = vpop.f32.mrf.mxu0
        %v717 = vadd.f32 %v594, %v716
        %v718 = vpop.f32.mrf.mxu0
        %719 = vmatprep.mubr.f32.mxu0 0.0
        %v720 = vand.u32 %v334, 4294901760
        %v721 = vsub.f32 %v334, %v720
        %722 = vmatmul.mubr.f32.gmra.mxu0 %v721
        %v723 = vpop.f32.mrf.mxu0
        %v724 = vadd.f32 %v600, %v723
        %v725 = vpop.f32.mrf.mxu0
        %726 = vmatprep.mubr.f32.mxu0 0.0
        %v727 = vand.u32 %v337, 4294901760
        %v728 = vsub.f32 %v337, %v727
        %729 = vmatmul.mubr.f32.gmra.mxu0 %v728
        %v730 = vpop.f32.mrf.mxu0
        %v731 = vadd.f32 %v606, %v730
        %v732 = vpop.f32.mrf.mxu0
        %733 = vdwg.mxu0
        %734 = vmatprep.subr.mxu0 0.0
        %735 = vmatpush1.msra.mxu0 0.0
        %736 = vmatprep.subr.mxu0 0.0
        %737 = vmatpush1.msra.mxu0 0.0
        %738 = vmatprep.subr.mxu0 0.0
        %739 = vmatpush1.msra.mxu0 0.0
        %740 = vmatprep.subr.mxu0 0.0
        %741 = vmatpush1.msra.mxu0 0.0
        %742 = vmatprep.subr.mxu0 0.0
        %743 = vmatpush1.msra.mxu0 0.0
        %744 = vmatprep.subr.mxu0 0.0
        %745 = vmatpush1.msra.mxu0 0.0
        %746 = vmatprep.subr.mxu0 0.0
        %747 = vmatpush1.msra.mxu0 0.0
        %748 = vmatprep.subr.mxu0 0.0
        %749 = vmatpush1.msra.mxu0 0.0
        %750 = vmatprep.subr.mxu0 0.0
        %751 = vmatpush1.msra.mxu0 0.0
        %752 = vmatprep.subr.mxu0 0.0
        %753 = vmatpush1.msra.mxu0 0.0
        %754 = vmatprep.subr.mxu0 0.0
        %755 = vmatpush1.msra.mxu0 0.0
        %756 = vmatprep.subr.mxu0 0.0
        %757 = vmatpush1.msra.mxu0 0.0
        %758 = vmatprep.subr.mxu0 0.0
        %759 = vmatpush1.msra.mxu0 0.0
        %760 = vmatprep.subr.mxu0 0.0
        %761 = vmatpush1.msra.mxu0 0.0
        %762 = vmatprep.subr.mxu0 0.0
        %v763 = vand.u32 %v313, 4294901760
        %764 = vmatpush1.msra.mxu0 %v763
        %765 = vmatprep.subr.mxu0 0.0
        %v766 = vand.u32 %v312, 4294901760
        %767 = vmatpush1.msra.mxu0 %v766
        %768 = vmatprep.subr.mxu0 0.0
        %769 = vmatpush2.msra.mxu0 0.0
        %770 = vmatprep.subr.mxu0 0.0
        %771 = vmatpush2.msra.mxu0 0.0
        %772 = vmatprep.subr.mxu0 0.0
        %773 = vmatpush2.msra.mxu0 0.0
        %774 = vmatprep.subr.mxu0 0.0
        %775 = vmatpush2.msra.mxu0 0.0
        %776 = vmatprep.subr.mxu0 0.0
        %777 = vmatpush2.msra.mxu0 0.0
        %778 = vmatprep.subr.mxu0 0.0
        %779 = vmatpush2.msra.mxu0 0.0
        %780 = vmatprep.subr.mxu0 0.0
        %781 = vmatpush2.msra.mxu0 0.0
        %782 = vmatprep.subr.mxu0 0.0
        %783 = vmatpush2.msra.mxu0 0.0
        %784 = vmatprep.subr.mxu0 0.0
        %785 = vmatpush2.msra.mxu0 0.0
        %786 = vmatprep.subr.mxu0 0.0
        %787 = vmatpush2.msra.mxu0 0.0
        %788 = vmatprep.subr.mxu0 0.0
        %789 = vmatpush2.msra.mxu0 0.0
        %790 = vmatprep.subr.mxu0 0.0
        %791 = vmatpush2.msra.mxu0 0.0
        %792 = vmatprep.subr.mxu0 0.0
        %793 = vmatpush2.msra.mxu0 0.0
        %794 = vmatprep.subr.mxu0 0.0
        %795 = vmatpush2.msra.mxu0 0.0
        %796 = vmatprep.subr.mxu0 0.0
        %797 = vmatpush2.msra.mxu0 0.0
        %798 = vmatprep.subr.mxu0 0.0
        %799 = vmatpush2.msra.mxu0 0.0
        %800 = vmatprep.mubr.f32.mxu0 0.0
        %v801 = vand.u32 %v316, 4294901760
        %v802 = vsub.f32 %v316, %v801
        %v803 = vand.u32 %v802, 4294901760
        %804 = vmatmul.mubr.f32.gmra.mxu0 %v803
        %v805 = vpop.f32.mrf.mxu0
        %v806 = vadd.f32 %v682, %v805
        %v807 = vpop.f32.mrf.mxu0
        %808 = vmatprep.mubr.f32.mxu0 0.0
        %v809 = vand.u32 %v319, 4294901760
        %v810 = vsub.f32 %v319, %v809
        %v811 = vand.u32 %v810, 4294901760
        %812 = vmatmul.mubr.f32.gmra.mxu0 %v811
        %v813 = vpop.f32.mrf.mxu0
        %v814 = vadd.f32 %v689, %v813
        %v815 = vpop.f32.mrf.mxu0
        %816 = vmatprep.mubr.f32.mxu0 0.0
        %v817 = vand.u32 %v322, 4294901760
        %v818 = vsub.f32 %v322, %v817
        %v819 = vand.u32 %v818, 4294901760
        %820 = vmatmul.mubr.f32.gmra.mxu0 %v819
        %v821 = vpop.f32.mrf.mxu0
        %v822 = vadd.f32 %v696, %v821
        %v823 = vpop.f32.mrf.mxu0
        %824 = vmatprep.mubr.f32.mxu0 0.0
        %v825 = vand.u32 %v325, 4294901760
        %v826 = vsub.f32 %v325, %v825
        %v827 = vand.u32 %v826, 4294901760
        %828 = vmatmul.mubr.f32.gmra.mxu0 %v827
        %v829 = vpop.f32.mrf.mxu0
        %v830 = vadd.f32 %v703, %v829
        %v831 = vpop.f32.mrf.mxu0
        %832 = vmatprep.mubr.f32.mxu0 0.0
        %v833 = vand.u32 %v328, 4294901760
        %v834 = vsub.f32 %v328, %v833
        %v835 = vand.u32 %v834, 4294901760
        %836 = vmatmul.mubr.f32.gmra.mxu0 %v835
        %v837 = vpop.f32.mrf.mxu0
        %v838 = vadd.f32 %v710, %v837
        %v839 = vpop.f32.mrf.mxu0
        %840 = vmatprep.mubr.f32.mxu0 0.0
        %v841 = vand.u32 %v331, 4294901760
        %v842 = vsub.f32 %v331, %v841
        %v843 = vand.u32 %v842, 4294901760
        %844 = vmatmul.mubr.f32.gmra.mxu0 %v843
        %v845 = vpop.f32.mrf.mxu0
        %v846 = vadd.f32 %v717, %v845
        %v847 = vpop.f32.mrf.mxu0
        %848 = vmatprep.mubr.f32.mxu0 0.0
        %v849 = vand.u32 %v334, 4294901760
        %v850 = vsub.f32 %v334, %v849
        %v851 = vand.u32 %v850, 4294901760
        %852 = vmatmul.mubr.f32.gmra.mxu0 %v851
        %v853 = vpop.f32.mrf.mxu0
        %v854 = vadd.f32 %v724, %v853
        %v855 = vpop.f32.mrf.mxu0
        %856 = vmatprep.mubr.f32.mxu0 0.0
        %v857 = vand.u32 %v337, 4294901760
        %v858 = vsub.f32 %v337, %v857
        %v859 = vand.u32 %v858, 4294901760
        %860 = vmatmul.mubr.f32.gmra.mxu0 %v859
        %v861 = vpop.f32.mrf.mxu0
        %v862 = vadd.f32 %v731, %v861
        %v863 = vpop.f32.mrf.mxu0
        %864 = vdwg.mxu0
        %865 = vmatprep.subr.mxu0 0.0
        %866 = vmatpush1.msra.mxu0 0.0
        %867 = vmatprep.subr.mxu0 0.0
        %868 = vmatpush1.msra.mxu0 0.0
        %869 = vmatprep.subr.mxu0 0.0
        %870 = vmatpush1.msra.mxu0 0.0
        %871 = vmatprep.subr.mxu0 0.0
        %872 = vmatpush1.msra.mxu0 0.0
        %873 = vmatprep.subr.mxu0 0.0
        %874 = vmatpush1.msra.mxu0 0.0
        %875 = vmatprep.subr.mxu0 0.0
        %876 = vmatpush1.msra.mxu0 0.0
        %877 = vmatprep.subr.mxu0 0.0
        %878 = vmatpush1.msra.mxu0 0.0
        %879 = vmatprep.subr.mxu0 0.0
        %880 = vmatpush1.msra.mxu0 0.0
        %881 = vmatprep.subr.mxu0 0.0
        %882 = vmatpush1.msra.mxu0 0.0
        %883 = vmatprep.subr.mxu0 0.0
        %884 = vmatpush1.msra.mxu0 0.0
        %885 = vmatprep.subr.mxu0 0.0
        %886 = vmatpush1.msra.mxu0 0.0
        %887 = vmatprep.subr.mxu0 0.0
        %888 = vmatpush1.msra.mxu0 0.0
        %889 = vmatprep.subr.mxu0 0.0
        %890 = vmatpush1.msra.mxu0 0.0
        %891 = vmatprep.subr.mxu0 0.0
        %892 = vmatpush1.msra.mxu0 0.0
        %893 = vmatprep.subr.mxu0 0.0
        %v894 = vand.u32 %v313, 4294901760
        %v895 = vsub.f32 %v313, %v894
        %v896 = vand.u32 %v895, 4294901760
        %897 = vmatpush1.msra.mxu0 %v896
        %898 = vmatprep.subr.mxu0 0.0
        %v899 = vand.u32 %v312, 4294901760
        %v900 = vsub.f32 %v312, %v899
        %v901 = vand.u32 %v900, 4294901760
        %902 = vmatpush1.msra.mxu0 %v901
        %903 = vmatprep.subr.mxu0 0.0
        %904 = vmatpush2.msra.mxu0 0.0
        %905 = vmatprep.subr.mxu0 0.0
        %906 = vmatpush2.msra.mxu0 0.0
        %907 = vmatprep.subr.mxu0 0.0
        %908 = vmatpush2.msra.mxu0 0.0
        %909 = vmatprep.subr.mxu0 0.0
        %910 = vmatpush2.msra.mxu0 0.0
        %911 = vmatprep.subr.mxu0 0.0
        %912 = vmatpush2.msra.mxu0 0.0
        %913 = vmatprep.subr.mxu0 0.0
        %914 = vmatpush2.msra.mxu0 0.0
        %915 = vmatprep.subr.mxu0 0.0
        %916 = vmatpush2.msra.mxu0 0.0
        %917 = vmatprep.subr.mxu0 0.0
        %918 = vmatpush2.msra.mxu0 0.0
        %919 = vmatprep.subr.mxu0 0.0
        %920 = vmatpush2.msra.mxu0 0.0
        %921 = vmatprep.subr.mxu0 0.0
        %922 = vmatpush2.msra.mxu0 0.0
        %923 = vmatprep.subr.mxu0 0.0
        %924 = vmatpush2.msra.mxu0 0.0
        %925 = vmatprep.subr.mxu0 0.0
        %926 = vmatpush2.msra.mxu0 0.0
        %927 = vmatprep.subr.mxu0 0.0
        %928 = vmatpush2.msra.mxu0 0.0
        %929 = vmatprep.subr.mxu0 0.0
        %930 = vmatpush2.msra.mxu0 0.0
        %931 = vmatprep.subr.mxu0 0.0
        %932 = vmatpush2.msra.mxu0 0.0
        %933 = vmatprep.subr.mxu0 0.0
        %934 = vmatpush2.msra.mxu0 0.0
        %935 = vmatprep.mubr.f32.mxu0 0.0
        %v936 = vand.u32 %v316, 4294901760
        %937 = vmatmul.mubr.f32.gmra.mxu0 %v936
        %v938 = vpop.f32.mrf.mxu0
        %v939 = vadd.f32 %v806, %v938
        %v940 = vpop.f32.mrf.mxu0
        %941 = vmatprep.mubr.f32.mxu0 0.0
        %v942 = vand.u32 %v319, 4294901760
        %943 = vmatmul.mubr.f32.gmra.mxu0 %v942
        %v944 = vpop.f32.mrf.mxu0
        %v945 = vadd.f32 %v814, %v944
        %v946 = vpop.f32.mrf.mxu0
        %947 = vmatprep.mubr.f32.mxu0 0.0
        %v948 = vand.u32 %v322, 4294901760
        %949 = vmatmul.mubr.f32.gmra.mxu0 %v948
        %v950 = vpop.f32.mrf.mxu0
        %v951 = vadd.f32 %v822, %v950
        %v952 = vpop.f32.mrf.mxu0
        %953 = vmatprep.mubr.f32.mxu0 0.0
        %v954 = vand.u32 %v325, 4294901760
        %955 = vmatmul.mubr.f32.gmra.mxu0 %v954
        %v956 = vpop.f32.mrf.mxu0
        %v957 = vadd.f32 %v830, %v956
        %v958 = vpop.f32.mrf.mxu0
        %959 = vmatprep.mubr.f32.mxu0 0.0
        %v960 = vand.u32 %v328, 4294901760
        %961 = vmatmul.mubr.f32.gmra.mxu0 %v960
        %v962 = vpop.f32.mrf.mxu0
        %v963 = vadd.f32 %v838, %v962
        %v964 = vpop.f32.mrf.mxu0
        %965 = vmatprep.mubr.f32.mxu0 0.0
        %v966 = vand.u32 %v331, 4294901760
        %967 = vmatmul.mubr.f32.gmra.mxu0 %v966
        %v968 = vpop.f32.mrf.mxu0
        %v969 = vadd.f32 %v846, %v968
        %v970 = vpop.f32.mrf.mxu0
        %971 = vmatprep.mubr.f32.mxu0 0.0
        %v972 = vand.u32 %v334, 4294901760
        %973 = vmatmul.mubr.f32.gmra.mxu0 %v972
        %v974 = vpop.f32.mrf.mxu0
        %v975 = vadd.f32 %v854, %v974
        %v976 = vpop.f32.mrf.mxu0
        %977 = vmatprep.mubr.f32.mxu0 0.0
        %v978 = vand.u32 %v337, 4294901760
        %979 = vmatmul.mubr.f32.gmra.mxu0 %v978
        %v980 = vpop.f32.mrf.mxu0
        %v981 = vadd.f32 %v862, %v980
        %v982 = vpop.f32.mrf.mxu0
        %983 = vdwg.mxu0
        %984 = vmatprep.subr.mxu0 0.0
        %985 = vmatpush1.msra.mxu0 0.0
        %986 = vmatprep.subr.mxu0 0.0
        %987 = vmatpush1.msra.mxu0 0.0
        %988 = vmatprep.subr.mxu0 0.0
        %989 = vmatpush1.msra.mxu0 0.0
        %990 = vmatprep.subr.mxu0 0.0
        %991 = vmatpush1.msra.mxu0 0.0
        %992 = vmatprep.subr.mxu0 0.0
        %993 = vmatpush1.msra.mxu0 0.0
        %994 = vmatprep.subr.mxu0 0.0
        %995 = vmatpush1.msra.mxu0 0.0
        %996 = vmatprep.subr.mxu0 0.0
        %997 = vmatpush1.msra.mxu0 0.0
        %998 = vmatprep.subr.mxu0 0.0
        %999 = vmatpush1.msra.mxu0 0.0
        %1000 = vmatprep.subr.mxu0 0.0
        %1001 = vmatpush1.msra.mxu0 0.0
        %1002 = vmatprep.subr.mxu0 0.0
        %1003 = vmatpush1.msra.mxu0 0.0
        %1004 = vmatprep.subr.mxu0 0.0
        %1005 = vmatpush1.msra.mxu0 0.0
        %1006 = vmatprep.subr.mxu0 0.0
        %1007 = vmatpush1.msra.mxu0 0.0
        %1008 = vmatprep.subr.mxu0 0.0
        %1009 = vmatpush1.msra.mxu0 0.0
        %1010 = vmatprep.subr.mxu0 0.0
        %1011 = vmatpush1.msra.mxu0 0.0
        %1012 = vmatprep.subr.mxu0 0.0
        %v1013 = vand.u32 %v313, 4294901760
        %1014 = vmatpush1.msra.mxu0 %v1013
        %1015 = vmatprep.subr.mxu0 0.0
        %v1016 = vand.u32 %v312, 4294901760
        %1017 = vmatpush1.msra.mxu0 %v1016
        %1018 = vmatprep.subr.mxu0 0.0
        %1019 = vmatpush2.msra.mxu0 0.0
        %1020 = vmatprep.subr.mxu0 0.0
        %1021 = vmatpush2.msra.mxu0 0.0
        %1022 = vmatprep.subr.mxu0 0.0
        %1023 = vmatpush2.msra.mxu0 0.0
        %1024 = vmatprep.subr.mxu0 0.0
        %1025 = vmatpush2.msra.mxu0 0.0
        %1026 = vmatprep.subr.mxu0 0.0
        %1027 = vmatpush2.msra.mxu0 0.0
        %1028 = vmatprep.subr.mxu0 0.0
        %1029 = vmatpush2.msra.mxu0 0.0
        %1030 = vmatprep.subr.mxu0 0.0
        %1031 = vmatpush2.msra.mxu0 0.0
        %1032 = vmatprep.subr.mxu0 0.0
        %1033 = vmatpush2.msra.mxu0 0.0
        %1034 = vmatprep.subr.mxu0 0.0
        %1035 = vmatpush2.msra.mxu0 0.0
        %1036 = vmatprep.subr.mxu0 0.0
        %1037 = vmatpush2.msra.mxu0 0.0
        %1038 = vmatprep.subr.mxu0 0.0
        %1039 = vmatpush2.msra.mxu0 0.0
        %1040 = vmatprep.subr.mxu0 0.0
        %1041 = vmatpush2.msra.mxu0 0.0
        %1042 = vmatprep.subr.mxu0 0.0
        %1043 = vmatpush2.msra.mxu0 0.0
        %1044 = vmatprep.subr.mxu0 0.0
        %1045 = vmatpush2.msra.mxu0 0.0
        %1046 = vmatprep.subr.mxu0 0.0
        %1047 = vmatpush2.msra.mxu0 0.0
        %1048 = vmatprep.subr.mxu0 0.0
        %1049 = vmatpush2.msra.mxu0 0.0
        %1050 = vmatprep.mubr.f32.mxu0 0.0
        %v1051 = vand.u32 %v316, 4294901760
        %1052 = vmatmul.mubr.f32.gmra.mxu0 %v1051
        %v1053 = vpop.f32.mrf.mxu0
        %v1054 = vadd.f32 %v939, %v1053
        %v1055 = vpop.f32.mrf.mxu0
        %1056 = vmatprep.mubr.f32.mxu0 0.0
        %v1057 = vand.u32 %v319, 4294901760
        %1058 = vmatmul.mubr.f32.gmra.mxu0 %v1057
        %v1059 = vpop.f32.mrf.mxu0
        %v1060 = vadd.f32 %v945, %v1059
        %v1061 = vpop.f32.mrf.mxu0
        %1062 = vmatprep.mubr.f32.mxu0 0.0
        %v1063 = vand.u32 %v322, 4294901760
        %1064 = vmatmul.mubr.f32.gmra.mxu0 %v1063
        %v1065 = vpop.f32.mrf.mxu0
        %v1066 = vadd.f32 %v951, %v1065
        %v1067 = vpop.f32.mrf.mxu0
        %1068 = vmatprep.mubr.f32.mxu0 0.0
        %v1069 = vand.u32 %v325, 4294901760
        %1070 = vmatmul.mubr.f32.gmra.mxu0 %v1069
        %v1071 = vpop.f32.mrf.mxu0
        %v1072 = vadd.f32 %v957, %v1071
        %v1073 = vpop.f32.mrf.mxu0
        %1074 = vmatprep.mubr.f32.mxu0 0.0
        %v1075 = vand.u32 %v328, 4294901760
        %1076 = vmatmul.mubr.f32.gmra.mxu0 %v1075
        %v1077 = vpop.f32.mrf.mxu0
        %v1078 = vadd.f32 %v963, %v1077
        %v1079 = vpop.f32.mrf.mxu0
        %1080 = vmatprep.mubr.f32.mxu0 0.0
        %v1081 = vand.u32 %v331, 4294901760
        %1082 = vmatmul.mubr.f32.gmra.mxu0 %v1081
        %v1083 = vpop.f32.mrf.mxu0
        %v1084 = vadd.f32 %v969, %v1083
        %v1085 = vpop.f32.mrf.mxu0
        %1086 = vmatprep.mubr.f32.mxu0 0.0
        %v1087 = vand.u32 %v334, 4294901760
        %1088 = vmatmul.mubr.f32.gmra.mxu0 %v1087
        %v1089 = vpop.f32.mrf.mxu0
        %v1090 = vadd.f32 %v975, %v1089
        %v1091 = vpop.f32.mrf.mxu0
        %1092 = vmatprep.mubr.f32.mxu0 0.0
        %v1093 = vand.u32 %v337, 4294901760
        %1094 = vmatmul.mubr.f32.gmra.mxu0 %v1093
        %v1095 = vpop.f32.mrf.mxu0
        %v1096 = vadd.f32 %v981, %v1095
        %v1097 = vpop.f32.mrf.mxu0
        %1098 = vdwg.mxu0
        %1099 = vxpose.xlu0.b32.start [1/16] %v1054, 128
        %1100 = vxpose.xlu0.b32.cont [2/16] %v1060, 128
        %1101 = vxpose.xlu0.b32.cont [3/16] 0.0, 128
        %1102 = vxpose.xlu0.b32.cont [4/16] 0.0, 128
        %1103 = vxpose.xlu0.b32.cont [5/16] 0.0, 128
        %1104 = vxpose.xlu0.b32.cont [6/16] 0.0, 128
        %1105 = vxpose.xlu0.b32.cont [7/16] 0.0, 128
        %1106 = vxpose.xlu0.b32.cont [8/16] 0.0, 128
        %1107 = vxpose.xlu0.b32.cont [9/16] 0.0, 128
        %1108 = vxpose.xlu0.b32.cont [10/16] 0.0, 128
        %1109 = vxpose.xlu0.b32.cont [11/16] 0.0, 128
        %1110 = vxpose.xlu0.b32.cont [12/16] 0.0, 128
        %1111 = vxpose.xlu0.b32.cont [13/16] 0.0, 128
        %1112 = vxpose.xlu0.b32.cont [14/16] 0.0, 128
        %1113 = vxpose.xlu0.b32.cont [15/16] 0.0, 128
        %1114 = vxpose.xlu0.b32.end [16/16] 0.0, 128
        %v1115 = vpop.trf.xlu0
        %v1116 = vpop.trf.xlu0
        %v1117 = vpop.trf.xlu0
        %v1118 = vpop.trf.xlu0
        %v1119 = vpop.trf.xlu0
        %v1120 = vpop.trf.xlu0
        %v1121 = vpop.trf.xlu0
        %v1122 = vpop.trf.xlu0
        %v1123 = vpop.trf.xlu0
        %v1124 = vpop.trf.xlu0
        %v1125 = vpop.trf.xlu0
        %v1126 = vpop.trf.xlu0
        %v1127 = vpop.trf.xlu0
        %v1128 = vpop.trf.xlu0
        %v1129 = vpop.trf.xlu0
        %v1130 = vpop.trf.xlu0
        %1131 = vxpose.xlu0.b32.start [1/16] %v1066, 128
        %1132 = vxpose.xlu0.b32.cont [2/16] %v1072, 128
        %1133 = vxpose.xlu0.b32.cont [3/16] 0.0, 128
        %1134 = vxpose.xlu0.b32.cont [4/16] 0.0, 128
        %1135 = vxpose.xlu0.b32.cont [5/16] 0.0, 128
        %1136 = vxpose.xlu0.b32.cont [6/16] 0.0, 128
        %1137 = vxpose.xlu0.b32.cont [7/16] 0.0, 128
        %1138 = vxpose.xlu0.b32.cont [8/16] 0.0, 128
        %1139 = vxpose.xlu0.b32.cont [9/16] 0.0, 128
        %1140 = vxpose.xlu0.b32.cont [10/16] 0.0, 128
        %1141 = vxpose.xlu0.b32.cont [11/16] 0.0, 128
        %1142 = vxpose.xlu0.b32.cont [12/16] 0.0, 128
        %1143 = vxpose.xlu0.b32.cont [13/16] 0.0, 128
        %1144 = vxpose.xlu0.b32.cont [14/16] 0.0, 128
        %1145 = vxpose.xlu0.b32.cont [15/16] 0.0, 128
        %1146 = vxpose.xlu0.b32.end [16/16] 0.0, 128
        %v1147 = vpop.trf.xlu0
        %v1148 = vpop.trf.xlu0
        %v1149 = vpop.trf.xlu0
        %v1150 = vpop.trf.xlu0
        %v1151 = vpop.trf.xlu0
        %v1152 = vpop.trf.xlu0
        %v1153 = vpop.trf.xlu0
        %v1154 = vpop.trf.xlu0
        %v1155 = vpop.trf.xlu0
        %v1156 = vpop.trf.xlu0
        %v1157 = vpop.trf.xlu0
        %v1158 = vpop.trf.xlu0
        %v1159 = vpop.trf.xlu0
        %v1160 = vpop.trf.xlu0
        %v1161 = vpop.trf.xlu0
        %v1162 = vpop.trf.xlu0
        %1163 = vxpose.xlu0.b32.start [1/16] %v1078, 128
        %1164 = vxpose.xlu0.b32.cont [2/16] %v1084, 128
        %1165 = vxpose.xlu0.b32.cont [3/16] 0.0, 128
        %1166 = vxpose.xlu0.b32.cont [4/16] 0.0, 128
        %1167 = vxpose.xlu0.b32.cont [5/16] 0.0, 128
        %1168 = vxpose.xlu0.b32.cont [6/16] 0.0, 128
        %1169 = vxpose.xlu0.b32.cont [7/16] 0.0, 128
        %1170 = vxpose.xlu0.b32.cont [8/16] 0.0, 128
        %1171 = vxpose.xlu0.b32.cont [9/16] 0.0, 128
        %1172 = vxpose.xlu0.b32.cont [10/16] 0.0, 128
        %1173 = vxpose.xlu0.b32.cont [11/16] 0.0, 128
        %1174 = vxpose.xlu0.b32.cont [12/16] 0.0, 128
        %1175 = vxpose.xlu0.b32.cont [13/16] 0.0, 128
        %1176 = vxpose.xlu0.b32.cont [14/16] 0.0, 128
        %1177 = vxpose.xlu0.b32.cont [15/16] 0.0, 128
        %1178 = vxpose.xlu0.b32.end [16/16] 0.0, 128
        %v1179 = vpop.trf.xlu0
        %v1180 = vpop.trf.xlu0
        %v1181 = vpop.trf.xlu0
        %v1182 = vpop.trf.xlu0
        %v1183 = vpop.trf.xlu0
        %v1184 = vpop.trf.xlu0
        %v1185 = vpop.trf.xlu0
        %v1186 = vpop.trf.xlu0
        %v1187 = vpop.trf.xlu0
        %v1188 = vpop.trf.xlu0
        %v1189 = vpop.trf.xlu0
        %v1190 = vpop.trf.xlu0
        %v1191 = vpop.trf.xlu0
        %v1192 = vpop.trf.xlu0
        %v1193 = vpop.trf.xlu0
        %v1194 = vpop.trf.xlu0
        %1195 = vxpose.xlu0.b32.start [1/16] %v1090, 128
        %1196 = vxpose.xlu0.b32.cont [2/16] %v1096, 128
        %1197 = vxpose.xlu0.b32.cont [3/16] 0.0, 128
        %1198 = vxpose.xlu0.b32.cont [4/16] 0.0, 128
        %1199 = vxpose.xlu0.b32.cont [5/16] 0.0, 128
        %1200 = vxpose.xlu0.b32.cont [6/16] 0.0, 128
        %1201 = vxpose.xlu0.b32.cont [7/16] 0.0, 128
        %1202 = vxpose.xlu0.b32.cont [8/16] 0.0, 128
        %1203 = vxpose.xlu0.b32.cont [9/16] 0.0, 128
        %1204 = vxpose.xlu0.b32.cont [10/16] 0.0, 128
        %1205 = vxpose.xlu0.b32.cont [11/16] 0.0, 128
        %1206 = vxpose.xlu0.b32.cont [12/16] 0.0, 128
        %1207 = vxpose.xlu0.b32.cont [13/16] 0.0, 128
        %1208 = vxpose.xlu0.b32.cont [14/16] 0.0, 128
        %1209 = vxpose.xlu0.b32.cont [15/16] 0.0, 128
        %1210 = vxpose.xlu0.b32.end [16/16] 0.0, 128
        %v1211 = vpop.trf.xlu0
        %v1212 = vpop.trf.xlu0
        %v1213 = vpop.trf.xlu0
        %v1214 = vpop.trf.xlu0
        %v1215 = vpop.trf.xlu0
        %v1216 = vpop.trf.xlu0
        %v1217 = vpop.trf.xlu0
        %v1218 = vpop.trf.xlu0
        %v1219 = vpop.trf.xlu0
        %v1220 = vpop.trf.xlu0
        %v1221 = vpop.trf.xlu0
        %v1222 = vpop.trf.xlu0
        %v1223 = vpop.trf.xlu0
        %v1224 = vpop.trf.xlu0
        %v1225 = vpop.trf.xlu0
        %v1226 = vpop.trf.xlu0
        %v1227 = vld [vmem:[%s2] sm:$0xff]
        %v1228 = vld [vmem:[%s2 + $0x8] sm:$0xff]
        %v1230 = vsel %vm314, %v1115, 0
        %v1233 = vsel %vm314, %v1147, 0
        %v1236 = vsel %vm314, %v1179, 0
        %v1239 = vsel %vm314, %v1211, 0
        %1241 = vmatprep.subr.mxu0 0.0
        %1242 = vmatpush1.msra.mxu0 0.0
        %1243 = vmatprep.subr.mxu0 0.0
        %1244 = vmatpush1.msra.mxu0 0.0
        %1245 = vmatprep.subr.mxu0 0.0
        %1246 = vmatpush1.msra.mxu0 0.0
        %1247 = vmatprep.subr.mxu0 0.0
        %1248 = vmatpush1.msra.mxu0 0.0
        %1249 = vmatprep.subr.mxu0 0.0
        %1250 = vmatpush1.msra.mxu0 0.0
        %1251 = vmatprep.subr.mxu0 0.0
        %1252 = vmatpush1.msra.mxu0 0.0
        %1253 = vmatprep.subr.mxu0 0.0
        %1254 = vmatpush1.msra.mxu0 0.0
        %1255 = vmatprep.subr.mxu0 0.0
        %1256 = vmatpush1.msra.mxu0 0.0
        %1257 = vmatprep.subr.mxu0 0.0
        %1258 = vmatpush1.msra.mxu0 0.0
        %1259 = vmatprep.subr.mxu0 0.0
        %1260 = vmatpush1.msra.mxu0 0.0
        %1261 = vmatprep.subr.mxu0 0.0
        %1262 = vmatpush1.msra.mxu0 0.0
        %1263 = vmatprep.subr.mxu0 0.0
        %1264 = vmatpush1.msra.mxu0 0.0
        %1265 = vmatprep.subr.mxu0 0.0
        %1266 = vmatpush1.msra.mxu0 0.0
        %1267 = vmatprep.subr.mxu0 0.0
        %1268 = vmatpush1.msra.mxu0 0.0
        %1269 = vmatprep.subr.mxu0 0.0
        %v1270 = vand.u32 %v1228, 4294901760
        %1271 = vmatpush1.msra.mxu0 %v1270
        %1272 = vmatprep.subr.mxu0 0.0
        %v1273 = vand.u32 %v1227, 4294901760
        %1274 = vmatpush1.msra.mxu0 %v1273
        %1275 = vmatprep.subr.mxu0 0.0
        %1276 = vmatpush2.msra.mxu0 0.0
        %1277 = vmatprep.subr.mxu0 0.0
        %1278 = vmatpush2.msra.mxu0 0.0
        %1279 = vmatprep.subr.mxu0 0.0
        %1280 = vmatpush2.msra.mxu0 0.0
        %1281 = vmatprep.subr.mxu0 0.0
        %1282 = vmatpush2.msra.mxu0 0.0
        %1283 = vmatprep.subr.mxu0 0.0
        %1284 = vmatpush2.msra.mxu0 0.0
        %1285 = vmatprep.subr.mxu0 0.0
        %1286 = vmatpush2.msra.mxu0 0.0
        %1287 = vmatprep.subr.mxu0 0.0
        %1288 = vmatpush2.msra.mxu0 0.0
        %1289 = vmatprep.subr.mxu0 0.0
        %1290 = vmatpush2.msra.mxu0 0.0
        %1291 = vmatprep.subr.mxu0 0.0
        %1292 = vmatpush2.msra.mxu0 0.0
        %1293 = vmatprep.subr.mxu0 0.0
        %1294 = vmatpush2.msra.mxu0 0.0
        %1295 = vmatprep.subr.mxu0 0.0
        %1296 = vmatpush2.msra.mxu0 0.0
        %1297 = vmatprep.subr.mxu0 0.0
        %1298 = vmatpush2.msra.mxu0 0.0
        %1299 = vmatprep.subr.mxu0 0.0
        %1300 = vmatpush2.msra.mxu0 0.0
        %1301 = vmatprep.subr.mxu0 0.0
        %1302 = vmatpush2.msra.mxu0 0.0
        %1303 = vmatprep.subr.mxu0 0.0
        %1304 = vmatpush2.msra.mxu0 0.0
        %1305 = vmatprep.subr.mxu0 0.0
        %1306 = vmatpush2.msra.mxu0 0.0
        %1307 = vmatprep.mubr.f32.mxu0 0.0
        %v1308 = vand.u32 %v1230, 4294901760
        %v1309 = vsub.f32 %v1230, %v1308
        %v1310 = vand.u32 %v1309, 4294901760
        %v1311 = vsub.f32 %v1309, %v1310
        %v1312 = vand.u32 %v1311, 4294901760
        %1313 = vmatmul.mubr.f32.gmra.mxu0 %v1312
        %v1314 = vpop.f32.mrf.mxu0
        %v1315 = vadd.f32 0.0, %v1314
        %v1316 = vpop.f32.mrf.mxu0
        %1317 = vmatprep.mubr.f32.mxu0 0.0
        %v1318 = vand.u32 %v1233, 4294901760
        %v1319 = vsub.f32 %v1233, %v1318
        %v1320 = vand.u32 %v1319, 4294901760
        %v1321 = vsub.f32 %v1319, %v1320
        %v1322 = vand.u32 %v1321, 4294901760
        %1323 = vmatmul.mubr.f32.gmra.mxu0 %v1322
        %v1324 = vpop.f32.mrf.mxu0
        %v1325 = vadd.f32 0.0, %v1324
        %v1326 = vpop.f32.mrf.mxu0
        %1327 = vmatprep.mubr.f32.mxu0 0.0
        %v1328 = vand.u32 %v1236, 4294901760
        %v1329 = vsub.f32 %v1236, %v1328
        %v1330 = vand.u32 %v1329, 4294901760
        %v1331 = vsub.f32 %v1329, %v1330
        %v1332 = vand.u32 %v1331, 4294901760
        %1333 = vmatmul.mubr.f32.gmra.mxu0 %v1332
        %v1334 = vpop.f32.mrf.mxu0
        %v1335 = vadd.f32 0.0, %v1334
        %v1336 = vpop.f32.mrf.mxu0
        %1337 = vmatprep.mubr.f32.mxu0 0.0
        %v1338 = vand.u32 %v1239, 4294901760
        %v1339 = vsub.f32 %v1239, %v1338
        %v1340 = vand.u32 %v1339, 4294901760
        %v1341 = vsub.f32 %v1339, %v1340
        %v1342 = vand.u32 %v1341, 4294901760
        %1343 = vmatmul.mubr.f32.gmra.mxu0 %v1342
        %v1344 = vpop.f32.mrf.mxu0
        %v1345 = vadd.f32 0.0, %v1344
        %v1346 = vpop.f32.mrf.mxu0
        %1347 = vdwg.mxu0
        %1348 = vmatprep.subr.mxu0 0.0
        %1349 = vmatpush1.msra.mxu0 0.0
        %1350 = vmatprep.subr.mxu0 0.0
        %1351 = vmatpush1.msra.mxu0 0.0
        %1352 = vmatprep.subr.mxu0 0.0
        %1353 = vmatpush1.msra.mxu0 0.0
        %1354 = vmatprep.subr.mxu0 0.0
        %1355 = vmatpush1.msra.mxu0 0.0
        %1356 = vmatprep.subr.mxu0 0.0
        %1357 = vmatpush1.msra.mxu0 0.0
        %1358 = vmatprep.subr.mxu0 0.0
        %1359 = vmatpush1.msra.mxu0 0.0
        %1360 = vmatprep.subr.mxu0 0.0
        %1361 = vmatpush1.msra.mxu0 0.0
        %1362 = vmatprep.subr.mxu0 0.0
        %1363 = vmatpush1.msra.mxu0 0.0
        %1364 = vmatprep.subr.mxu0 0.0
        %1365 = vmatpush1.msra.mxu0 0.0
        %1366 = vmatprep.subr.mxu0 0.0
        %1367 = vmatpush1.msra.mxu0 0.0
        %1368 = vmatprep.subr.mxu0 0.0
        %1369 = vmatpush1.msra.mxu0 0.0
        %1370 = vmatprep.subr.mxu0 0.0
        %1371 = vmatpush1.msra.mxu0 0.0
        %1372 = vmatprep.subr.mxu0 0.0
        %1373 = vmatpush1.msra.mxu0 0.0
        %1374 = vmatprep.subr.mxu0 0.0
        %1375 = vmatpush1.msra.mxu0 0.0
        %1376 = vmatprep.subr.mxu0 0.0
        %v1377 = vand.u32 %v1228, 4294901760
        %v1378 = vsub.f32 %v1228, %v1377
        %v1379 = vand.u32 %v1378, 4294901760
        %v1380 = vsub.f32 %v1378, %v1379
        %v1381 = vand.u32 %v1380, 4294901760
        %1382 = vmatpush1.msra.mxu0 %v1381
        %1383 = vmatprep.subr.mxu0 0.0
        %v1384 = vand.u32 %v1227, 4294901760
        %v1385 = vsub.f32 %v1227, %v1384
        %v1386 = vand.u32 %v1385, 4294901760
        %v1387 = vsub.f32 %v1385, %v1386
        %v1388 = vand.u32 %v1387, 4294901760
        %1389 = vmatpush1.msra.mxu0 %v1388
        %1390 = vmatprep.subr.mxu0 0.0
        %1391 = vmatpush2.msra.mxu0 0.0
        %1392 = vmatprep.subr.mxu0 0.0
        %1393 = vmatpush2.msra.mxu0 0.0
        %1394 = vmatprep.subr.mxu0 0.0
        %1395 = vmatpush2.msra.mxu0 0.0
        %1396 = vmatprep.subr.mxu0 0.0
        %1397 = vmatpush2.msra.mxu0 0.0
        %1398 = vmatprep.subr.mxu0 0.0
        %1399 = vmatpush2.msra.mxu0 0.0
        %1400 = vmatprep.subr.mxu0 0.0
        %1401 = vmatpush2.msra.mxu0 0.0
        %1402 = vmatprep.subr.mxu0 0.0
        %1403 = vmatpush2.msra.mxu0 0.0
        %1404 = vmatprep.subr.mxu0 0.0
        %1405 = vmatpush2.msra.mxu0 0.0
        %1406 = vmatprep.subr.mxu0 0.0
        %1407 = vmatpush2.msra.mxu0 0.0
        %1408 = vmatprep.subr.mxu0 0.0
        %1409 = vmatpush2.msra.mxu0 0.0
        %1410 = vmatprep.subr.mxu0 0.0
        %1411 = vmatpush2.msra.mxu0 0.0
        %1412 = vmatprep.subr.mxu0 0.0
        %1413 = vmatpush2.msra.mxu0 0.0
        %1414 = vmatprep.subr.mxu0 0.0
        %1415 = vmatpush2.msra.mxu0 0.0
        %1416 = vmatprep.subr.mxu0 0.0
        %1417 = vmatpush2.msra.mxu0 0.0
        %1418 = vmatprep.subr.mxu0 0.0
        %1419 = vmatpush2.msra.mxu0 0.0
        %1420 = vmatprep.subr.mxu0 0.0
        %1421 = vmatpush2.msra.mxu0 0.0
        %1422 = vmatprep.mubr.f32.mxu0 0.0
        %v1423 = vand.u32 %v1230, 4294901760
        %1424 = vmatmul.mubr.f32.gmra.mxu0 %v1423
        %v1425 = vpop.f32.mrf.mxu0
        %v1426 = vadd.f32 %v1315, %v1425
        %v1427 = vpop.f32.mrf.mxu0
        %1428 = vmatprep.mubr.f32.mxu0 0.0
        %v1429 = vand.u32 %v1233, 4294901760
        %1430 = vmatmul.mubr.f32.gmra.mxu0 %v1429
        %v1431 = vpop.f32.mrf.mxu0
        %v1432 = vadd.f32 %v1325, %v1431
        %v1433 = vpop.f32.mrf.mxu0
        %1434 = vmatprep.mubr.f32.mxu0 0.0
        %v1435 = vand.u32 %v1236, 4294901760
        %1436 = vmatmul.mubr.f32.gmra.mxu0 %v1435
        %v1437 = vpop.f32.mrf.mxu0
        %v1438 = vadd.f32 %v1335, %v1437
        %v1439 = vpop.f32.mrf.mxu0
        %1440 = vmatprep.mubr.f32.mxu0 0.0
        %v1441 = vand.u32 %v1239, 4294901760
        %1442 = vmatmul.mubr.f32.gmra.mxu0 %v1441
        %v1443 = vpop.f32.mrf.mxu0
        %v1444 = vadd.f32 %v1345, %v1443
        %v1445 = vpop.f32.mrf.mxu0
        %1446 = vdwg.mxu0
        %1447 = vmatprep.subr.mxu0 0.0
        %1448 = vmatpush1.msra.mxu0 0.0
        %1449 = vmatprep.subr.mxu0 0.0
        %1450 = vmatpush1.msra.mxu0 0.0
        %1451 = vmatprep.subr.mxu0 0.0
        %1452 = vmatpush1.msra.mxu0 0.0
        %1453 = vmatprep.subr.mxu0 0.0
        %1454 = vmatpush1.msra.mxu0 0.0
        %1455 = vmatprep.subr.mxu0 0.0
        %1456 = vmatpush1.msra.mxu0 0.0
        %1457 = vmatprep.subr.mxu0 0.0
        %1458 = vmatpush1.msra.mxu0 0.0
        %1459 = vmatprep.subr.mxu0 0.0
        %1460 = vmatpush1.msra.mxu0 0.0
        %1461 = vmatprep.subr.mxu0 0.0
        %1462 = vmatpush1.msra.mxu0 0.0
        %1463 = vmatprep.subr.mxu0 0.0
        %1464 = vmatpush1.msra.mxu0 0.0
        %1465 = vmatprep.subr.mxu0 0.0
        %1466 = vmatpush1.msra.mxu0 0.0
        %1467 = vmatprep.subr.mxu0 0.0
        %1468 = vmatpush1.msra.mxu0 0.0
        %1469 = vmatprep.subr.mxu0 0.0
        %1470 = vmatpush1.msra.mxu0 0.0
        %1471 = vmatprep.subr.mxu0 0.0
        %1472 = vmatpush1.msra.mxu0 0.0
        %1473 = vmatprep.subr.mxu0 0.0
        %1474 = vmatpush1.msra.mxu0 0.0
        %1475 = vmatprep.subr.mxu0 0.0
        %v1476 = vand.u32 %v1228, 4294901760
        %v1477 = vsub.f32 %v1228, %v1476
        %1478 = vmatpush1.msra.mxu0 %v1477
        %1479 = vmatprep.subr.mxu0 0.0
        %v1480 = vand.u32 %v1227, 4294901760
        %v1481 = vsub.f32 %v1227, %v1480
        %1482 = vmatpush1.msra.mxu0 %v1481
        %1483 = vmatprep.subr.mxu0 0.0
        %1484 = vmatpush2.msra.mxu0 0.0
        %1485 = vmatprep.subr.mxu0 0.0
        %1486 = vmatpush2.msra.mxu0 0.0
        %1487 = vmatprep.subr.mxu0 0.0
        %1488 = vmatpush2.msra.mxu0 0.0
        %1489 = vmatprep.subr.mxu0 0.0
        %1490 = vmatpush2.msra.mxu0 0.0
        %1491 = vmatprep.subr.mxu0 0.0
        %1492 = vmatpush2.msra.mxu0 0.0
        %1493 = vmatprep.subr.mxu0 0.0
        %1494 = vmatpush2.msra.mxu0 0.0
        %1495 = vmatprep.subr.mxu0 0.0
        %1496 = vmatpush2.msra.mxu0 0.0
        %1497 = vmatprep.subr.mxu0 0.0
        %1498 = vmatpush2.msra.mxu0 0.0
        %1499 = vmatprep.subr.mxu0 0.0
        %1500 = vmatpush2.msra.mxu0 0.0
        %1501 = vmatprep.subr.mxu0 0.0
        %1502 = vmatpush2.msra.mxu0 0.0
        %1503 = vmatprep.subr.mxu0 0.0
        %1504 = vmatpush2.msra.mxu0 0.0
        %1505 = vmatprep.subr.mxu0 0.0
        %1506 = vmatpush2.msra.mxu0 0.0
        %1507 = vmatprep.subr.mxu0 0.0
        %1508 = vmatpush2.msra.mxu0 0.0
        %1509 = vmatprep.subr.mxu0 0.0
        %1510 = vmatpush2.msra.mxu0 0.0
        %1511 = vmatprep.subr.mxu0 0.0
        %1512 = vmatpush2.msra.mxu0 0.0
        %1513 = vmatprep.subr.mxu0 0.0
        %1514 = vmatpush2.msra.mxu0 0.0
        %1515 = vmatprep.mubr.f32.mxu0 0.0
        %v1516 = vand.u32 %v1230, 4294901760
        %v1517 = vsub.f32 %v1230, %v1516
        %1518 = vmatmul.mubr.f32.gmra.mxu0 %v1517
        %v1519 = vpop.f32.mrf.mxu0
        %v1520 = vadd.f32 %v1426, %v1519
        %v1521 = vpop.f32.mrf.mxu0
        %1522 = vmatprep.mubr.f32.mxu0 0.0
        %v1523 = vand.u32 %v1233, 4294901760
        %v1524 = vsub.f32 %v1233, %v1523
        %1525 = vmatmul.mubr.f32.gmra.mxu0 %v1524
        %v1526 = vpop.f32.mrf.mxu0
        %v1527 = vadd.f32 %v1432, %v1526
        %v1528 = vpop.f32.mrf.mxu0
        %1529 = vmatprep.mubr.f32.mxu0 0.0
        %v1530 = vand.u32 %v1236, 4294901760
        %v1531 = vsub.f32 %v1236, %v1530
        %1532 = vmatmul.mubr.f32.gmra.mxu0 %v1531
        %v1533 = vpop.f32.mrf.mxu0
        %v1534 = vadd.f32 %v1438, %v1533
        %v1535 = vpop.f32.mrf.mxu0
        %1536 = vmatprep.mubr.f32.mxu0 0.0
        %v1537 = vand.u32 %v1239, 4294901760
        %v1538 = vsub.f32 %v1239, %v1537
        %1539 = vmatmul.mubr.f32.gmra.mxu0 %v1538
        %v1540 = vpop.f32.mrf.mxu0
        %v1541 = vadd.f32 %v1444, %v1540
        %v1542 = vpop.f32.mrf.mxu0
        %1543 = vdwg.mxu0
        %1544 = vmatprep.subr.mxu0 0.0
        %1545 = vmatpush1.msra.mxu0 0.0
        %1546 = vmatprep.subr.mxu0 0.0
        %1547 = vmatpush1.msra.mxu0 0.0
        %1548 = vmatprep.subr.mxu0 0.0
        %1549 = vmatpush1.msra.mxu0 0.0
        %1550 = vmatprep.subr.mxu0 0.0
        %1551 = vmatpush1.msra.mxu0 0.0
        %1552 = vmatprep.subr.mxu0 0.0
        %1553 = vmatpush1.msra.mxu0 0.0
        %1554 = vmatprep.subr.mxu0 0.0
        %1555 = vmatpush1.msra.mxu0 0.0
        %1556 = vmatprep.subr.mxu0 0.0
        %1557 = vmatpush1.msra.mxu0 0.0
        %1558 = vmatprep.subr.mxu0 0.0
        %1559 = vmatpush1.msra.mxu0 0.0
        %1560 = vmatprep.subr.mxu0 0.0
        %1561 = vmatpush1.msra.mxu0 0.0
        %1562 = vmatprep.subr.mxu0 0.0
        %1563 = vmatpush1.msra.mxu0 0.0
        %1564 = vmatprep.subr.mxu0 0.0
        %1565 = vmatpush1.msra.mxu0 0.0
        %1566 = vmatprep.subr.mxu0 0.0
        %1567 = vmatpush1.msra.mxu0 0.0
        %1568 = vmatprep.subr.mxu0 0.0
        %1569 = vmatpush1.msra.mxu0 0.0
        %1570 = vmatprep.subr.mxu0 0.0
        %1571 = vmatpush1.msra.mxu0 0.0
        %1572 = vmatprep.subr.mxu0 0.0
        %v1573 = vand.u32 %v1228, 4294901760
        %1574 = vmatpush1.msra.mxu0 %v1573
        %1575 = vmatprep.subr.mxu0 0.0
        %v1576 = vand.u32 %v1227, 4294901760
        %1577 = vmatpush1.msra.mxu0 %v1576
        %1578 = vmatprep.subr.mxu0 0.0
        %1579 = vmatpush2.msra.mxu0 0.0
        %1580 = vmatprep.subr.mxu0 0.0
        %1581 = vmatpush2.msra.mxu0 0.0
        %1582 = vmatprep.subr.mxu0 0.0
        %1583 = vmatpush2.msra.mxu0 0.0
        %1584 = vmatprep.subr.mxu0 0.0
        %1585 = vmatpush2.msra.mxu0 0.0
        %1586 = vmatprep.subr.mxu0 0.0
        %1587 = vmatpush2.msra.mxu0 0.0
        %1588 = vmatprep.subr.mxu0 0.0
        %1589 = vmatpush2.msra.mxu0 0.0
        %1590 = vmatprep.subr.mxu0 0.0
        %1591 = vmatpush2.msra.mxu0 0.0
        %1592 = vmatprep.subr.mxu0 0.0
        %1593 = vmatpush2.msra.mxu0 0.0
        %1594 = vmatprep.subr.mxu0 0.0
        %1595 = vmatpush2.msra.mxu0 0.0
        %1596 = vmatprep.subr.mxu0 0.0
        %1597 = vmatpush2.msra.mxu0 0.0
        %1598 = vmatprep.subr.mxu0 0.0
        %1599 = vmatpush2.msra.mxu0 0.0
        %1600 = vmatprep.subr.mxu0 0.0
        %1601 = vmatpush2.msra.mxu0 0.0
        %1602 = vmatprep.subr.mxu0 0.0
        %1603 = vmatpush2.msra.mxu0 0.0
        %1604 = vmatprep.subr.mxu0 0.0
        %1605 = vmatpush2.msra.mxu0 0.0
        %1606 = vmatprep.subr.mxu0 0.0
        %1607 = vmatpush2.msra.mxu0 0.0
        %1608 = vmatprep.subr.mxu0 0.0
        %1609 = vmatpush2.msra.mxu0 0.0
        %1610 = vmatprep.mubr.f32.mxu0 0.0
        %v1611 = vand.u32 %v1230, 4294901760
        %v1612 = vsub.f32 %v1230, %v1611
        %v1613 = vand.u32 %v1612, 4294901760
        %1614 = vmatmul.mubr.f32.gmra.mxu0 %v1613
        %v1615 = vpop.f32.mrf.mxu0
        %v1616 = vadd.f32 %v1520, %v1615
        %v1617 = vpop.f32.mrf.mxu0
        %1618 = vmatprep.mubr.f32.mxu0 0.0
        %v1619 = vand.u32 %v1233, 4294901760
        %v1620 = vsub.f32 %v1233, %v1619
        %v1621 = vand.u32 %v1620, 4294901760
        %1622 = vmatmul.mubr.f32.gmra.mxu0 %v1621
        %v1623 = vpop.f32.mrf.mxu0
        %v1624 = vadd.f32 %v1527, %v1623
        %v1625 = vpop.f32.mrf.mxu0
        %1626 = vmatprep.mubr.f32.mxu0 0.0
        %v1627 = vand.u32 %v1236, 4294901760
        %v1628 = vsub.f32 %v1236, %v1627
        %v1629 = vand.u32 %v1628, 4294901760
        %1630 = vmatmul.mubr.f32.gmra.mxu0 %v1629
        %v1631 = vpop.f32.mrf.mxu0
        %v1632 = vadd.f32 %v1534, %v1631
        %v1633 = vpop.f32.mrf.mxu0
        %1634 = vmatprep.mubr.f32.mxu0 0.0
        %v1635 = vand.u32 %v1239, 4294901760
        %v1636 = vsub.f32 %v1239, %v1635
        %v1637 = vand.u32 %v1636, 4294901760
        %1638 = vmatmul.mubr.f32.gmra.mxu0 %v1637
        %v1639 = vpop.f32.mrf.mxu0
        %v1640 = vadd.f32 %v1541, %v1639
        %v1641 = vpop.f32.mrf.mxu0
        %1642 = vdwg.mxu0
        %1643 = vmatprep.subr.mxu0 0.0
        %1644 = vmatpush1.msra.mxu0 0.0
        %1645 = vmatprep.subr.mxu0 0.0
        %1646 = vmatpush1.msra.mxu0 0.0
        %1647 = vmatprep.subr.mxu0 0.0
        %1648 = vmatpush1.msra.mxu0 0.0
        %1649 = vmatprep.subr.mxu0 0.0
        %1650 = vmatpush1.msra.mxu0 0.0
        %1651 = vmatprep.subr.mxu0 0.0
        %1652 = vmatpush1.msra.mxu0 0.0
        %1653 = vmatprep.subr.mxu0 0.0
        %1654 = vmatpush1.msra.mxu0 0.0
        %1655 = vmatprep.subr.mxu0 0.0
        %1656 = vmatpush1.msra.mxu0 0.0
        %1657 = vmatprep.subr.mxu0 0.0
        %1658 = vmatpush1.msra.mxu0 0.0
        %1659 = vmatprep.subr.mxu0 0.0
        %1660 = vmatpush1.msra.mxu0 0.0
        %1661 = vmatprep.subr.mxu0 0.0
        %1662 = vmatpush1.msra.mxu0 0.0
        %1663 = vmatprep.subr.mxu0 0.0
        %1664 = vmatpush1.msra.mxu0 0.0
        %1665 = vmatprep.subr.mxu0 0.0
        %1666 = vmatpush1.msra.mxu0 0.0
        %1667 = vmatprep.subr.mxu0 0.0
        %1668 = vmatpush1.msra.mxu0 0.0
        %1669 = vmatprep.subr.mxu0 0.0
        %1670 = vmatpush1.msra.mxu0 0.0
        %1671 = vmatprep.subr.mxu0 0.0
        %v1672 = vand.u32 %v1228, 4294901760
        %v1673 = vsub.f32 %v1228, %v1672
        %v1674 = vand.u32 %v1673, 4294901760
        %1675 = vmatpush1.msra.mxu0 %v1674
        %1676 = vmatprep.subr.mxu0 0.0
        %v1677 = vand.u32 %v1227, 4294901760
        %v1678 = vsub.f32 %v1227, %v1677
        %v1679 = vand.u32 %v1678, 4294901760
        %1680 = vmatpush1.msra.mxu0 %v1679
        %1681 = vmatprep.subr.mxu0 0.0
        %1682 = vmatpush2.msra.mxu0 0.0
        %1683 = vmatprep.subr.mxu0 0.0
        %1684 = vmatpush2.msra.mxu0 0.0
        %1685 = vmatprep.subr.mxu0 0.0
        %1686 = vmatpush2.msra.mxu0 0.0
        %1687 = vmatprep.subr.mxu0 0.0
        %1688 = vmatpush2.msra.mxu0 0.0
        %1689 = vmatprep.subr.mxu0 0.0
        %1690 = vmatpush2.msra.mxu0 0.0
        %1691 = vmatprep.subr.mxu0 0.0
        %1692 = vmatpush2.msra.mxu0 0.0
        %1693 = vmatprep.subr.mxu0 0.0
        %1694 = vmatpush2.msra.mxu0 0.0
        %1695 = vmatprep.subr.mxu0 0.0
        %1696 = vmatpush2.msra.mxu0 0.0
        %1697 = vmatprep.subr.mxu0 0.0
        %1698 = vmatpush2.msra.mxu0 0.0
        %1699 = vmatprep.subr.mxu0 0.0
        %1700 = vmatpush2.msra.mxu0 0.0
        %1701 = vmatprep.subr.mxu0 0.0
        %1702 = vmatpush2.msra.mxu0 0.0
        %1703 = vmatprep.subr.mxu0 0.0
        %1704 = vmatpush2.msra.mxu0 0.0
        %1705 = vmatprep.subr.mxu0 0.0
        %1706 = vmatpush2.msra.mxu0 0.0
        %1707 = vmatprep.subr.mxu0 0.0
        %1708 = vmatpush2.msra.mxu0 0.0
        %1709 = vmatprep.subr.mxu0 0.0
        %1710 = vmatpush2.msra.mxu0 0.0
        %1711 = vmatprep.subr.mxu0 0.0
        %1712 = vmatpush2.msra.mxu0 0.0
        %1713 = vmatprep.mubr.f32.mxu0 0.0
        %v1714 = vand.u32 %v1230, 4294901760
        %1715 = vmatmul.mubr.f32.gmra.mxu0 %v1714
        %v1716 = vpop.f32.mrf.mxu0
        %v1717 = vadd.f32 %v1616, %v1716
        %v1718 = vpop.f32.mrf.mxu0
        %1719 = vmatprep.mubr.f32.mxu0 0.0
        %v1720 = vand.u32 %v1233, 4294901760
        %1721 = vmatmul.mubr.f32.gmra.mxu0 %v1720
        %v1722 = vpop.f32.mrf.mxu0
        %v1723 = vadd.f32 %v1624, %v1722
        %v1724 = vpop.f32.mrf.mxu0
        %1725 = vmatprep.mubr.f32.mxu0 0.0
        %v1726 = vand.u32 %v1236, 4294901760
        %1727 = vmatmul.mubr.f32.gmra.mxu0 %v1726
        %v1728 = vpop.f32.mrf.mxu0
        %v1729 = vadd.f32 %v1632, %v1728
        %v1730 = vpop.f32.mrf.mxu0
        %1731 = vmatprep.mubr.f32.mxu0 0.0
        %v1732 = vand.u32 %v1239, 4294901760
        %1733 = vmatmul.mubr.f32.gmra.mxu0 %v1732
        %v1734 = vpop.f32.mrf.mxu0
        %v1735 = vadd.f32 %v1640, %v1734
        %v1736 = vpop.f32.mrf.mxu0
        %1737 = vdwg.mxu0
        %1738 = vmatprep.subr.mxu0 0.0
        %1739 = vmatpush1.msra.mxu0 0.0
        %1740 = vmatprep.subr.mxu0 0.0
        %1741 = vmatpush1.msra.mxu0 0.0
        %1742 = vmatprep.subr.mxu0 0.0
        %1743 = vmatpush1.msra.mxu0 0.0
        %1744 = vmatprep.subr.mxu0 0.0
        %1745 = vmatpush1.msra.mxu0 0.0
        %1746 = vmatprep.subr.mxu0 0.0
        %1747 = vmatpush1.msra.mxu0 0.0
        %1748 = vmatprep.subr.mxu0 0.0
        %1749 = vmatpush1.msra.mxu0 0.0
        %1750 = vmatprep.subr.mxu0 0.0
        %1751 = vmatpush1.msra.mxu0 0.0
        %1752 = vmatprep.subr.mxu0 0.0
        %1753 = vmatpush1.msra.mxu0 0.0
        %1754 = vmatprep.subr.mxu0 0.0
        %1755 = vmatpush1.msra.mxu0 0.0
        %1756 = vmatprep.subr.mxu0 0.0
        %1757 = vmatpush1.msra.mxu0 0.0
        %1758 = vmatprep.subr.mxu0 0.0
        %1759 = vmatpush1.msra.mxu0 0.0
        %1760 = vmatprep.subr.mxu0 0.0
        %1761 = vmatpush1.msra.mxu0 0.0
        %1762 = vmatprep.subr.mxu0 0.0
        %1763 = vmatpush1.msra.mxu0 0.0
        %1764 = vmatprep.subr.mxu0 0.0
        %1765 = vmatpush1.msra.mxu0 0.0
        %1766 = vmatprep.subr.mxu0 0.0
        %v1767 = vand.u32 %v1228, 4294901760
        %1768 = vmatpush1.msra.mxu0 %v1767
        %1769 = vmatprep.subr.mxu0 0.0
        %v1770 = vand.u32 %v1227, 4294901760
        %1771 = vmatpush1.msra.mxu0 %v1770
        %1772 = vmatprep.subr.mxu0 0.0
        %1773 = vmatpush2.msra.mxu0 0.0
        %1774 = vmatprep.subr.mxu0 0.0
        %1775 = vmatpush2.msra.mxu0 0.0
        %1776 = vmatprep.subr.mxu0 0.0
        %1777 = vmatpush2.msra.mxu0 0.0
        %1778 = vmatprep.subr.mxu0 0.0
        %1779 = vmatpush2.msra.mxu0 0.0
        %1780 = vmatprep.subr.mxu0 0.0
        %1781 = vmatpush2.msra.mxu0 0.0
        %1782 = vmatprep.subr.mxu0 0.0
        %1783 = vmatpush2.msra.mxu0 0.0
        %1784 = vmatprep.subr.mxu0 0.0
        %1785 = vmatpush2.msra.mxu0 0.0
        %1786 = vmatprep.subr.mxu0 0.0
        %1787 = vmatpush2.msra.mxu0 0.0
        %1788 = vmatprep.subr.mxu0 0.0
        %1789 = vmatpush2.msra.mxu0 0.0
        %1790 = vmatprep.subr.mxu0 0.0
        %1791 = vmatpush2.msra.mxu0 0.0
        %1792 = vmatprep.subr.mxu0 0.0
        %1793 = vmatpush2.msra.mxu0 0.0
        %1794 = vmatprep.subr.mxu0 0.0
        %1795 = vmatpush2.msra.mxu0 0.0
        %1796 = vmatprep.subr.mxu0 0.0
        %1797 = vmatpush2.msra.mxu0 0.0
        %1798 = vmatprep.subr.mxu0 0.0
        %1799 = vmatpush2.msra.mxu0 0.0
        %1800 = vmatprep.subr.mxu0 0.0
        %1801 = vmatpush2.msra.mxu0 0.0
        %1802 = vmatprep.subr.mxu0 0.0
        %1803 = vmatpush2.msra.mxu0 0.0
        %1804 = vmatprep.mubr.f32.mxu0 0.0
        %v1805 = vand.u32 %v1230, 4294901760
        %1806 = vmatmul.mubr.f32.gmra.mxu0 %v1805
        %v1807 = vpop.f32.mrf.mxu0
        %v1808 = vadd.f32 %v1717, %v1807
        %v1809 = vpop.f32.mrf.mxu0
        %1810 = vmatprep.mubr.f32.mxu0 0.0
        %v1811 = vand.u32 %v1233, 4294901760
        %1812 = vmatmul.mubr.f32.gmra.mxu0 %v1811
        %v1813 = vpop.f32.mrf.mxu0
        %v1814 = vadd.f32 %v1723, %v1813
        %v1815 = vpop.f32.mrf.mxu0
        %1816 = vmatprep.mubr.f32.mxu0 0.0
        %v1817 = vand.u32 %v1236, 4294901760
        %1818 = vmatmul.mubr.f32.gmra.mxu0 %v1817
        %v1819 = vpop.f32.mrf.mxu0
        %v1820 = vadd.f32 %v1729, %v1819
        %v1821 = vpop.f32.mrf.mxu0
        %1822 = vmatprep.mubr.f32.mxu0 0.0
        %v1823 = vand.u32 %v1239, 4294901760
        %1824 = vmatmul.mubr.f32.gmra.mxu0 %v1823
        %v1825 = vpop.f32.mrf.mxu0
        %v1826 = vadd.f32 %v1735, %v1825
        %v1827 = vpop.f32.mrf.mxu0
        %1828 = vdwg.mxu0
        %v1833 = vrot.slane %v1808, 4
        %v1834 = vrot.slane %v1814, 4
        %v1835 = vrot.slane %v1820, 4
        %v1836 = vrot.slane %v1826, 4
        %1837 = vrot.lane.b32.xlu0 %v1833, 120
        %v1838 = vpop.permute.xlu0 %1837
        %1839 = vrot.lane.b32.xlu0 %v1834, 120
        %v1840 = vpop.permute.xlu0 %1839
        %1841 = vrot.lane.b32.xlu0 %v1835, 120
        %v1842 = vpop.permute.xlu0 %1841
        %1843 = vrot.lane.b32.xlu0 %v1836, 120
        %v1844 = vpop.permute.xlu0 %1843
        %v1849 = vsub.f32 %v1808, %v1838
        %v1850 = vsub.f32 %v1814, %v1840
        %v1851 = vsub.f32 %v1820, %v1842
        %v1852 = vsub.f32 %v1826, %v1844
        %1853 = vrot.lane.b32.xlu0 %v1833, 8
        %v1854 = vpop.permute.xlu0 %1853
        %1855 = vrot.lane.b32.xlu0 %v1834, 8
        %v1856 = vpop.permute.xlu0 %1855
        %1857 = vrot.lane.b32.xlu0 %v1835, 8
        %v1858 = vpop.permute.xlu0 %1857
        %1859 = vrot.lane.b32.xlu0 %v1836, 8
        %v1860 = vpop.permute.xlu0 %1859
        %v1865 = vadd.f32 %v1808, %v1854
        %v1866 = vadd.f32 %v1814, %v1856
        %v1867 = vadd.f32 %v1820, %v1858
        %v1868 = vadd.f32 %v1826, %v1860
        %v1869 = vsub.f32 0.0, %v1865
        %v1870 = vsub.f32 0.0, %v1866
        %v1871 = vsub.f32 0.0, %v1867
        %v1872 = vsub.f32 0.0, %v1868
        %v1877 = vrot.slane %v1850, 7
        %vm1878 = vcmask 1041409
        %v1879 = vsel %vm1878, %v1877, %v1849
        %v1880 = vrot.slane %v1851, 6
        %vm1881 = vcmask 1042434
        %v1882 = vsel %vm1881, %v1880, %v1879
        %v1883 = vrot.slane %v1852, 5
        %vm1884 = vcmask 1043459
        %v1885 = vsel %vm1884, %v1883, %v1882
        %vm1887 = vcmask 60416
        %1888 = vst.msk [vmem:[#allocation2] sm:$0xf] %vm1887, %v1885
        %v1893 = vrot.slane %v1870, 7
        %v1894 = vsel %vm1878, %v1893, %v1869
        %v1895 = vrot.slane %v1871, 6
        %v1896 = vsel %vm1881, %v1895, %v1894
        %v1897 = vrot.slane %v1872, 5
        %v1898 = vsel %vm1884, %v1897, %v1896
        %1899 = vrot.lane.b32.xlu0 %v1898, 120
        %v1900 = vpop.permute.xlu0 %1899
        %1902 = vst.msk [vmem:[#allocation3] sm:$0xf] %vm1887, %v1900
        %v1903 = vsel %vm1881, %v1877, %v1849
        %v1904 = vsel %vm1884, %v1880, %v1903
        %vm1905 = vcmask 1044484
        %v1906 = vsel %vm1905, %v1883, %v1904
        %1907 = vrot.lane.b32.xlu0 %v1906, 8
        %v1908 = vpop.permute.xlu0 %1907
        %vm1910 = vcmask 127041
        %1911 = vst.msk [vmem:[#allocation2 - $0x1] sm:$0x1e] %vm1910, %v1908
        %v1912 = vsel %vm1881, %v1893, %v1869
        %v1913 = vsel %vm1884, %v1895, %v1912
        %v1914 = vsel %vm1905, %v1897, %v1913
        %1916 = vst.msk [vmem:[#allocation3 - $0x1] sm:$0x1e] %vm1910, %v1914
        %v1917 = vsel %vm1884, %v1877, %v1849
        %v1918 = vsel %vm1905, %v1880, %v1917
        %vm1919 = vcmask 1045509
        %v1920 = vsel %vm1919, %v1883, %v1918
        %1921 = vrot.lane.b32.xlu0 %v1920, 16
        %v1922 = vpop.permute.xlu0 %1921
        %vm1924 = vcmask 193666
        %1925 = vst.msk [vmem:[#allocation2 - $0x2] sm:$0x3c] %vm1924, %v1922
        %v1926 = vsel %vm1884, %v1893, %v1869
        %v1927 = vsel %vm1905, %v1895, %v1926
        %v1928 = vsel %vm1919, %v1897, %v1927
        %1929 = vrot.lane.b32.xlu0 %v1928, 8
        %v1930 = vpop.permute.xlu0 %1929
        %1932 = vst.msk [vmem:[#allocation3 - $0x2] sm:$0x3c] %vm1924, %v1930
        %v1933 = vsel %vm1905, %v1877, %v1849
        %v1934 = vsel %vm1919, %v1880, %v1933
        %vm1935 = vcmask 1046534
        %v1936 = vsel %vm1935, %v1883, %v1934
        %1937 = vrot.lane.b32.xlu0 %v1936, 24
        %v1938 = vpop.permute.xlu0 %1937
        %vm1940 = vcmask 260291
        %1941 = vst.msk [vmem:[#allocation2 - $0x3] sm:$0x78] %vm1940, %v1938
        %v1942 = vsel %vm1905, %v1893, %v1869
        %v1943 = vsel %vm1919, %v1895, %v1942
        %v1944 = vsel %vm1935, %v1897, %v1943
        %1945 = vrot.lane.b32.xlu0 %v1944, 16
        %v1946 = vpop.permute.xlu0 %1945
        %1948 = vst.msk [vmem:[#allocation3 - $0x3] sm:$0x78] %vm1940, %v1946
        %vm1949 = vcmask 257024
        %1950 = vst.msk [vmem:[#allocation4] sm:$0xf] %vm1949, 0.0
        %1951 = vst.msk [vmem:[#allocation5] sm:$0xf] %vm1949, 0.0
        loop: start=0, step=1, limit=4
        $region53: #{tpu_custom_call.1} parent=51 // loop_pre_header
          _
        $region54: #{tpu_custom_call.1} parent=51 // loop_header
          %s1953 = sphi 0, %s1957
          %p1954 = scmp.ge.s32.totalorder %s1953, 4
        $region55: #{tpu_custom_call.1} parent=51 // loop_header_branch
          %1956 = sbr.rel (%p1954) target = $region59
        $region56: #{tpu_custom_call.1} parent=51 // loop_body
          %s1958 = scalar_lea.vmem [#allocation2], %s1953
          %v1959 = vld [vmem:[%s1958] sm:$0x1]
          %s1960 = scalar_lea.vmem [#allocation3], %s1953
          %v1961 = vld [vmem:[%s1960] sm:$0x1]
          %s1962 = smul.u32 %s1953, 4
          %s1963 = scalar_lea.vmem %s6, %s1962
          %v1964 = vld [vmem:[%s1963] sm:$0xf]
          %s1965 = scalar_lea.vmem %s7, %s1962
          %v1966 = vld [vmem:[%s1965] sm:$0xf]
          %v1967 = vld [vmem:[#allocation4] sm:$0xf]
          %v1968 = vlaneseq
          %v1969 = vshrl.u32 %v1968, 7
          %v1970 = vsub.s32 0, %v1969
          %v1971 = vrot.slane %v1959, %v1970
          %v1972 = vmul.f32 %v1971, %v1964
          %v1973 = vlaneseq
          %v1974 = vshrl.u32 %v1973, 7
          %v1975 = vsub.s32 0, %v1974
          %v1976 = vrot.slane %v1961, %v1975
          %v1977 = vmul.f32 %v1976, %v1966
          %v1978 = vsub.f32 %v1972, %v1977
          %v1979 = vadd.f32 %v1967, %v1978
          %1980 = vst.msk [vmem:[#allocation4] sm:$0xf] %vm1949, %v1979
          %v1981 = vld [vmem:[#allocation5] sm:$0xf]
          %v1982 = vmul.f32 %v1971, %v1966
          %v1983 = vmul.f32 %v1976, %v1964
          %v1984 = vadd.f32 %v1982, %v1983
          %v1985 = vadd.f32 %v1981, %v1984
          %1986 = vst.msk [vmem:[#allocation5] sm:$0xf] %vm1949, %v1985
        $region57: #{tpu_custom_call.1} parent=51 // loop_footer
          %s1957 = sadd.s32 1, %s1953
        $region58: #{tpu_custom_call.1} parent=51 // loop_footer_branch
          %1952 = sbr.rel target = $region54
        $region59: #{tpu_custom_call.1} parent=51 // loop_exit
          _
        %v1987 = vld [vmem:[#allocation4] sm:$0xf]
        %v1990 = vunpack.c.l.s4 1966171168
        %v1991 = vunpack.c.0.s8 %v1990
        %v1992 = vlaneseq
        %v1993 = vshrl.u32 %v1992, 7
        %v1994 = vsub.s32 %v1991, %v1993
        %v1995 = vrot.slane %v1987, %v1994
        %v1996 = vcombine.high %v1995, %v1995
        %v1998 = vunpack.c.l.s4 1966171168
        %v1999 = vunpack.c.0.s8 %v1998
        %v2000 = vlaneseq
        %v2001 = vshrl.u32 %v2000, 7
        %v2002 = vsub.s32 %v1999, %v2001
        %v2003 = vrot.slane %v1995, %v2002
        %v2005 = vunpack.c.l.s4 1966171168
        %v2006 = vunpack.c.0.s8 %v2005
        %v2007 = vlaneseq
        %v2008 = vshrl.u32 %v2007, 7
        %v2009 = vsub.s32 %v2006, %v2008
        %v2010 = vrot.slane %v1996, %v2009
        %v2011 = vcombine.high %v2003, %v2003
        %v2012 = vcombine.high %v2010, %v2010
        %vm2017 = vcmask 57344
        %2018 = vst.msk [vmem:[#allocation6] sm:$0x1] %vm2017, %v2003
        %2019 = vst.msk [vmem:[#allocation6 + $0x4] sm:$0x1] %vm2017, %v2010
        %2020 = vst.msk [vmem:[#allocation6 + $0x8] sm:$0x1] %vm2017, %v2011
        %2021 = vst.msk [vmem:[#allocation6 + $0xc] sm:$0x1] %vm2017, %v2012
        %v2022 = vld [vmem:[#allocation5] sm:$0xf]
        %v2025 = vunpack.c.l.s4 1966171168
        %v2026 = vunpack.c.0.s8 %v2025
        %v2027 = vlaneseq
        %v2028 = vshrl.u32 %v2027, 7
        %v2029 = vsub.s32 %v2026, %v2028
        %v2030 = vrot.slane %v2022, %v2029
        %v2031 = vcombine.high %v2030, %v2030
        %v2033 = vunpack.c.l.s4 1966171168
        %v2034 = vunpack.c.0.s8 %v2033
        %v2035 = vlaneseq
        %v2036 = vshrl.u32 %v2035, 7
        %v2037 = vsub.s32 %v2034, %v2036
        %v2038 = vrot.slane %v2030, %v2037
        %v2040 = vunpack.c.l.s4 1966171168
        %v2041 = vunpack.c.0.s8 %v2040
        %v2042 = vlaneseq
        %v2043 = vshrl.u32 %v2042, 7
        %v2044 = vsub.s32 %v2041, %v2043
        %v2045 = vrot.slane %v2031, %v2044
        %v2046 = vcombine.high %v2038, %v2038
        %v2047 = vcombine.high %v2045, %v2045
        %v2048 = vlaneseq
        %v2049 = vshrl.u32 %v2048, 7
        %v2050 = vsub.s32 0, %v2049
        %v2051 = vrot.slane %v2038, %v2050
        %v2052 = vlaneseq
        %v2053 = vshrl.u32 %v2052, 7
        %v2054 = vsub.s32 0, %v2053
        %v2055 = vrot.slane %v2045, %v2054
        %v2056 = vlaneseq
        %v2057 = vshrl.u32 %v2056, 7
        %v2058 = vsub.s32 0, %v2057
        %v2059 = vrot.slane %v2046, %v2058
        %v2060 = vlaneseq
        %v2061 = vshrl.u32 %v2060, 7
        %v2062 = vsub.s32 0, %v2061
        %v2063 = vrot.slane %v2047, %v2062
        %2064 = vrot.lane.b32.xlu0 %v2051, 8
        %v2065 = vpop.permute.xlu0 %2064
        %2066 = vrot.lane.b32.xlu0 %v2055, 8
        %v2067 = vpop.permute.xlu0 %2066
        %2068 = vrot.lane.b32.xlu0 %v2059, 8
        %v2069 = vpop.permute.xlu0 %2068
        %2070 = vrot.lane.b32.xlu0 %v2063, 8
        %v2071 = vpop.permute.xlu0 %2070
        %vm2076 = vcmask 122944
        %2077 = vst.msk [vmem:[#allocation6] sm:$0x1] %vm2076, %v2065
        %2078 = vst.msk [vmem:[#allocation6 + $0x4] sm:$0x1] %vm2076, %v2067
        %2079 = vst.msk [vmem:[#allocation6 + $0x8] sm:$0x1] %vm2076, %v2069
        %2080 = vst.msk [vmem:[#allocation6 + $0xc] sm:$0x1] %vm2076, %v2071
        %v2081 = vld [vmem:[#allocation4] sm:$0xf]
        %v2084 = vunpack.c.l.s4 1966171168
        %v2085 = vunpack.c.0.s8 %v2084
        %v2086 = vlaneseq
        %v2087 = vshrl.u32 %v2086, 7
        %v2088 = vsub.s32 %v2085, %v2087
        %v2089 = vrot.slane %v2081, %v2088
        %v2090 = vcombine.high %v2089, %v2089
        %v2092 = vunpack.c.l.s4 1966171168
        %v2093 = vunpack.c.0.s8 %v2092
        %v2094 = vlaneseq
        %v2095 = vshrl.u32 %v2094, 7
        %v2096 = vsub.s32 %v2093, %v2095
        %v2097 = vrot.slane %v2089, %v2096
        %v2099 = vunpack.c.l.s4 1966171168
        %v2100 = vunpack.c.0.s8 %v2099
        %v2101 = vlaneseq
        %v2102 = vshrl.u32 %v2101, 7
        %v2103 = vsub.s32 %v2100, %v2102
        %v2104 = vrot.slane %v2090, %v2103
        %v2105 = vcombine.high %v2097, %v2097
        %v2106 = vcombine.high %v2104, %v2104
        %v2107 = vlaneseq
        %v2108 = vshrl.u32 %v2107, 7
        %v2109 = vsub.s32 0, %v2108
        %v2110 = vrot.slane %v2097, %v2109
        %v2111 = vlaneseq
        %v2112 = vshrl.u32 %v2111, 7
        %v2113 = vsub.s32 0, %v2112
        %v2114 = vrot.slane %v2104, %v2113
        %v2115 = vlaneseq
        %v2116 = vshrl.u32 %v2115, 7
        %v2117 = vsub.s32 0, %v2116
        %v2118 = vrot.slane %v2105, %v2117
        %v2119 = vlaneseq
        %v2120 = vshrl.u32 %v2119, 7
        %v2121 = vsub.s32 0, %v2120
        %v2122 = vrot.slane %v2106, %v2121
        %2123 = vrot.lane.b32.xlu0 %v2110, 120
        %v2124 = vpop.permute.xlu0 %2123
        %2125 = vrot.lane.b32.xlu0 %v2114, 120
        %v2126 = vpop.permute.xlu0 %2125
        %2127 = vrot.lane.b32.xlu0 %v2118, 120
        %v2128 = vpop.permute.xlu0 %2127
        %2129 = vrot.lane.b32.xlu0 %v2122, 120
        %v2130 = vpop.permute.xlu0 %2129
        %2135 = vst.msk [vmem:[#allocation6 + $0x1] sm:$0x1] %vm2017, %v2124
        %2136 = vst.msk [vmem:[#allocation6 + $0x5] sm:$0x1] %vm2017, %v2126
        %2137 = vst.msk [vmem:[#allocation6 + $0x9] sm:$0x1] %vm2017, %v2128
        %2138 = vst.msk [vmem:[#allocation6 + $0xd] sm:$0x1] %vm2017, %v2130
        %v2139 = vld [vmem:[#allocation5] sm:$0xf]
        %v2142 = vunpack.c.l.s4 1966171168
        %v2143 = vunpack.c.0.s8 %v2142
        %v2144 = vlaneseq
        %v2145 = vshrl.u32 %v2144, 7
        %v2146 = vsub.s32 %v2143, %v2145
        %v2147 = vrot.slane %v2139, %v2146
        %v2148 = vcombine.high %v2147, %v2147
        %v2150 = vunpack.c.l.s4 1966171168
        %v2151 = vunpack.c.0.s8 %v2150
        %v2152 = vlaneseq
        %v2153 = vshrl.u32 %v2152, 7
        %v2154 = vsub.s32 %v2151, %v2153
        %v2155 = vrot.slane %v2147, %v2154
        %v2157 = vunpack.c.l.s4 1966171168
        %v2158 = vunpack.c.0.s8 %v2157
        %v2159 = vlaneseq
        %v2160 = vshrl.u32 %v2159, 7
        %v2161 = vsub.s32 %v2158, %v2160
        %v2162 = vrot.slane %v2148, %v2161
        %v2163 = vcombine.high %v2155, %v2155
        %v2164 = vcombine.high %v2162, %v2162
        %2169 = vst.msk [vmem:[#allocation6 + $0x1] sm:$0x1] %vm2076, %v2155
        %2170 = vst.msk [vmem:[#allocation6 + $0x5] sm:$0x1] %vm2076, %v2162
        %2171 = vst.msk [vmem:[#allocation6 + $0x9] sm:$0x1] %vm2076, %v2163
        %2172 = vst.msk [vmem:[#allocation6 + $0xd] sm:$0x1] %vm2076, %v2164
        %v2173 = vld [vmem:[#allocation4] sm:$0xf]
        %v2176 = vunpack.c.l.s4 1966171168
        %v2177 = vunpack.c.0.s8 %v2176
        %v2178 = vlaneseq
        %v2179 = vshrl.u32 %v2178, 7
        %v2180 = vsub.s32 %v2177, %v2179
        %v2181 = vrot.slane %v2173, %v2180
        %v2182 = vcombine.high %v2181, %v2181
        %v2184 = vunpack.c.l.s4 1966171168
        %v2185 = vunpack.c.0.s8 %v2184
        %v2186 = vlaneseq
        %v2187 = vshrl.u32 %v2186, 7
        %v2188 = vsub.s32 %v2185, %v2187
        %v2189 = vrot.slane %v2181, %v2188
        %v2191 = vunpack.c.l.s4 1966171168
        %v2192 = vunpack.c.0.s8 %v2191
        %v2193 = vlaneseq
        %v2194 = vshrl.u32 %v2193, 7
        %v2195 = vsub.s32 %v2192, %v2194
        %v2196 = vrot.slane %v2182, %v2195
        %v2197 = vcombine.high %v2189, %v2189
        %v2198 = vcombine.high %v2196, %v2196
        %v2199 = vlaneseq
        %v2200 = vshrl.u32 %v2199, 7
        %v2201 = vsub.s32 0, %v2200
        %v2202 = vrot.slane %v2189, %v2201
        %v2203 = vlaneseq
        %v2204 = vshrl.u32 %v2203, 7
        %v2205 = vsub.s32 0, %v2204
        %v2206 = vrot.slane %v2196, %v2205
        %v2207 = vlaneseq
        %v2208 = vshrl.u32 %v2207, 7
        %v2209 = vsub.s32 0, %v2208
        %v2210 = vrot.slane %v2197, %v2209
        %v2211 = vlaneseq
        %v2212 = vshrl.u32 %v2211, 7
        %v2213 = vsub.s32 0, %v2212
        %v2214 = vrot.slane %v2198, %v2213
        %2215 = vrot.lane.b32.xlu0 %v2202, 112
        %v2216 = vpop.permute.xlu0 %2215
        %2217 = vrot.lane.b32.xlu0 %v2206, 112
        %v2218 = vpop.permute.xlu0 %2217
        %2219 = vrot.lane.b32.xlu0 %v2210, 112
        %v2220 = vpop.permute.xlu0 %2219
        %2221 = vrot.lane.b32.xlu0 %v2214, 112
        %v2222 = vpop.permute.xlu0 %2221
        %2227 = vst.msk [vmem:[#allocation6 + $0x2] sm:$0x1] %vm2017, %v2216
        %2228 = vst.msk [vmem:[#allocation6 + $0x6] sm:$0x1] %vm2017, %v2218
        %2229 = vst.msk [vmem:[#allocation6 + $0xa] sm:$0x1] %vm2017, %v2220
        %2230 = vst.msk [vmem:[#allocation6 + $0xe] sm:$0x1] %vm2017, %v2222
        %v2231 = vld [vmem:[#allocation5] sm:$0xf]
        %v2234 = vunpack.c.l.s4 1966171168
        %v2235 = vunpack.c.0.s8 %v2234
        %v2236 = vlaneseq
        %v2237 = vshrl.u32 %v2236, 7
        %v2238 = vsub.s32 %v2235, %v2237
        %v2239 = vrot.slane %v2231, %v2238
        %v2240 = vcombine.high %v2239, %v2239
        %v2242 = vunpack.c.l.s4 1966171168
        %v2243 = vunpack.c.0.s8 %v2242
        %v2244 = vlaneseq
        %v2245 = vshrl.u32 %v2244, 7
        %v2246 = vsub.s32 %v2243, %v2245
        %v2247 = vrot.slane %v2239, %v2246
        %v2249 = vunpack.c.l.s4 1966171168
        %v2250 = vunpack.c.0.s8 %v2249
        %v2251 = vlaneseq
        %v2252 = vshrl.u32 %v2251, 7
        %v2253 = vsub.s32 %v2250, %v2252
        %v2254 = vrot.slane %v2240, %v2253
        %v2255 = vcombine.high %v2247, %v2247
        %v2256 = vcombine.high %v2254, %v2254
        %v2257 = vlaneseq
        %v2258 = vshrl.u32 %v2257, 7
        %v2259 = vsub.s32 0, %v2258
        %v2260 = vrot.slane %v2247, %v2259
        %v2261 = vlaneseq
        %v2262 = vshrl.u32 %v2261, 7
        %v2263 = vsub.s32 0, %v2262
        %v2264 = vrot.slane %v2254, %v2263
        %v2265 = vlaneseq
        %v2266 = vshrl.u32 %v2265, 7
        %v2267 = vsub.s32 0, %v2266
        %v2268 = vrot.slane %v2255, %v2267
        %v2269 = vlaneseq
        %v2270 = vshrl.u32 %v2269, 7
        %v2271 = vsub.s32 0, %v2270
        %v2272 = vrot.slane %v2256, %v2271
        %2273 = vrot.lane.b32.xlu0 %v2260, 120
        %v2274 = vpop.permute.xlu0 %2273
        %2275 = vrot.lane.b32.xlu0 %v2264, 120
        %v2276 = vpop.permute.xlu0 %2275
        %2277 = vrot.lane.b32.xlu0 %v2268, 120
        %v2278 = vpop.permute.xlu0 %2277
        %2279 = vrot.lane.b32.xlu0 %v2272, 120
        %v2280 = vpop.permute.xlu0 %2279
        %2285 = vst.msk [vmem:[#allocation6 + $0x2] sm:$0x1] %vm2076, %v2274
        %2286 = vst.msk [vmem:[#allocation6 + $0x6] sm:$0x1] %vm2076, %v2276
        %2287 = vst.msk [vmem:[#allocation6 + $0xa] sm:$0x1] %vm2076, %v2278
        %2288 = vst.msk [vmem:[#allocation6 + $0xe] sm:$0x1] %vm2076, %v2280
        %v2289 = vld [vmem:[#allocation4] sm:$0xf]
        %v2292 = vunpack.c.l.s4 1966171168
        %v2293 = vunpack.c.0.s8 %v2292
        %v2294 = vlaneseq
        %v2295 = vshrl.u32 %v2294, 7
        %v2296 = vsub.s32 %v2293, %v2295
        %v2297 = vrot.slane %v2289, %v2296
        %v2298 = vcombine.high %v2297, %v2297
        %v2300 = vunpack.c.l.s4 1966171168
        %v2301 = vunpack.c.0.s8 %v2300
        %v2302 = vlaneseq
        %v2303 = vshrl.u32 %v2302, 7
        %v2304 = vsub.s32 %v2301, %v2303
        %v2305 = vrot.slane %v2297, %v2304
        %v2307 = vunpack.c.l.s4 1966171168
        %v2308 = vunpack.c.0.s8 %v2307
        %v2309 = vlaneseq
        %v2310 = vshrl.u32 %v2309, 7
        %v2311 = vsub.s32 %v2308, %v2310
        %v2312 = vrot.slane %v2298, %v2311
        %v2313 = vcombine.high %v2305, %v2305
        %v2314 = vcombine.high %v2312, %v2312
        %v2315 = vlaneseq
        %v2316 = vshrl.u32 %v2315, 7
        %v2317 = vsub.s32 0, %v2316
        %v2318 = vrot.slane %v2305, %v2317
        %v2319 = vlaneseq
        %v2320 = vshrl.u32 %v2319, 7
        %v2321 = vsub.s32 0, %v2320
        %v2322 = vrot.slane %v2312, %v2321
        %v2323 = vlaneseq
        %v2324 = vshrl.u32 %v2323, 7
        %v2325 = vsub.s32 0, %v2324
        %v2326 = vrot.slane %v2313, %v2325
        %v2327 = vlaneseq
        %v2328 = vshrl.u32 %v2327, 7
        %v2329 = vsub.s32 0, %v2328
        %v2330 = vrot.slane %v2314, %v2329
        %2331 = vrot.lane.b32.xlu0 %v2318, 104
        %v2332 = vpop.permute.xlu0 %2331
        %2333 = vrot.lane.b32.xlu0 %v2322, 104
        %v2334 = vpop.permute.xlu0 %2333
        %2335 = vrot.lane.b32.xlu0 %v2326, 104
        %v2336 = vpop.permute.xlu0 %2335
        %2337 = vrot.lane.b32.xlu0 %v2330, 104
        %v2338 = vpop.permute.xlu0 %2337
        %2343 = vst.msk [vmem:[#allocation6 + $0x3] sm:$0x1] %vm2017, %v2332
        %2344 = vst.msk [vmem:[#allocation6 + $0x7] sm:$0x1] %vm2017, %v2334
        %2345 = vst.msk [vmem:[#allocation6 + $0xb] sm:$0x1] %vm2017, %v2336
        %2346 = vst.msk [vmem:[#allocation6 + $0xf] sm:$0x1] %vm2017, %v2338
        %v2347 = vld [vmem:[#allocation5] sm:$0xf]
        %v2350 = vunpack.c.l.s4 1966171168
        %v2351 = vunpack.c.0.s8 %v2350
        %v2352 = vlaneseq
        %v2353 = vshrl.u32 %v2352, 7
        %v2354 = vsub.s32 %v2351, %v2353
        %v2355 = vrot.slane %v2347, %v2354
        %v2356 = vcombine.high %v2355, %v2355
        %v2358 = vunpack.c.l.s4 1966171168
        %v2359 = vunpack.c.0.s8 %v2358
        %v2360 = vlaneseq
        %v2361 = vshrl.u32 %v2360, 7
        %v2362 = vsub.s32 %v2359, %v2361
        %v2363 = vrot.slane %v2355, %v2362
        %v2365 = vunpack.c.l.s4 1966171168
        %v2366 = vunpack.c.0.s8 %v2365
        %v2367 = vlaneseq
        %v2368 = vshrl.u32 %v2367, 7
        %v2369 = vsub.s32 %v2366, %v2368
        %v2370 = vrot.slane %v2356, %v2369
        %v2371 = vcombine.high %v2363, %v2363
        %v2372 = vcombine.high %v2370, %v2370
        %v2373 = vlaneseq
        %v2374 = vshrl.u32 %v2373, 7
        %v2375 = vsub.s32 0, %v2374
        %v2376 = vrot.slane %v2363, %v2375
        %v2377 = vlaneseq
        %v2378 = vshrl.u32 %v2377, 7
        %v2379 = vsub.s32 0, %v2378
        %v2380 = vrot.slane %v2370, %v2379
        %v2381 = vlaneseq
        %v2382 = vshrl.u32 %v2381, 7
        %v2383 = vsub.s32 0, %v2382
        %v2384 = vrot.slane %v2371, %v2383
        %v2385 = vlaneseq
        %v2386 = vshrl.u32 %v2385, 7
        %v2387 = vsub.s32 0, %v2386
        %v2388 = vrot.slane %v2372, %v2387
        %2389 = vrot.lane.b32.xlu0 %v2376, 112
        %v2390 = vpop.permute.xlu0 %2389
        %2391 = vrot.lane.b32.xlu0 %v2380, 112
        %v2392 = vpop.permute.xlu0 %2391
        %2393 = vrot.lane.b32.xlu0 %v2384, 112
        %v2394 = vpop.permute.xlu0 %2393
        %2395 = vrot.lane.b32.xlu0 %v2388, 112
        %v2396 = vpop.permute.xlu0 %2395
        %2401 = vst.msk [vmem:[#allocation6 + $0x3] sm:$0x1] %vm2076, %v2390
        %2402 = vst.msk [vmem:[#allocation6 + $0x7] sm:$0x1] %vm2076, %v2392
        %2403 = vst.msk [vmem:[#allocation6 + $0xb] sm:$0x1] %vm2076, %v2394
        %2404 = vst.msk [vmem:[#allocation6 + $0xf] sm:$0x1] %vm2076, %v2396
        %v2405 = vld [vmem:[#allocation6] sm:$0xf]
        %v2406 = vld [vmem:[#allocation6 + $0x4] sm:$0xf]
        %v2407 = vld [vmem:[#allocation6 + $0x8] sm:$0xf]
        %v2408 = vld [vmem:[#allocation6 + $0xc] sm:$0xf]
        %v2409 = vld [vmem:[%s3] sm:$0xff]
        %v2410 = vld [vmem:[%s3 + $0x8] sm:$0xff]
        %v2415 = vcombine.low %v2405, %v2406
        %v2416 = vcombine.low %v2407, %v2408
        %v2417 = vsel %vm314, %v2415, 0
        %v2419 = vsel %vm314, %v2416, 0
        %2421 = vmatprep.subr.mxu0 0.0
        %2422 = vmatpush1.msra.mxu0 0.0
        %2423 = vmatprep.subr.mxu0 0.0
        %2424 = vmatpush1.msra.mxu0 0.0
        %2425 = vmatprep.subr.mxu0 0.0
        %2426 = vmatpush1.msra.mxu0 0.0
        %2427 = vmatprep.subr.mxu0 0.0
        %2428 = vmatpush1.msra.mxu0 0.0
        %2429 = vmatprep.subr.mxu0 0.0
        %2430 = vmatpush1.msra.mxu0 0.0
        %2431 = vmatprep.subr.mxu0 0.0
        %2432 = vmatpush1.msra.mxu0 0.0
        %2433 = vmatprep.subr.mxu0 0.0
        %2434 = vmatpush1.msra.mxu0 0.0
        %2435 = vmatprep.subr.mxu0 0.0
        %2436 = vmatpush1.msra.mxu0 0.0
        %2437 = vmatprep.subr.mxu0 0.0
        %2438 = vmatpush1.msra.mxu0 0.0
        %2439 = vmatprep.subr.mxu0 0.0
        %2440 = vmatpush1.msra.mxu0 0.0
        %2441 = vmatprep.subr.mxu0 0.0
        %2442 = vmatpush1.msra.mxu0 0.0
        %2443 = vmatprep.subr.mxu0 0.0
        %2444 = vmatpush1.msra.mxu0 0.0
        %2445 = vmatprep.subr.mxu0 0.0
        %2446 = vmatpush1.msra.mxu0 0.0
        %2447 = vmatprep.subr.mxu0 0.0
        %2448 = vmatpush1.msra.mxu0 0.0
        %2449 = vmatprep.subr.mxu0 0.0
        %v2450 = vand.u32 %v2410, 4294901760
        %2451 = vmatpush1.msra.mxu0 %v2450
        %2452 = vmatprep.subr.mxu0 0.0
        %v2453 = vand.u32 %v2409, 4294901760
        %2454 = vmatpush1.msra.mxu0 %v2453
        %2455 = vmatprep.subr.mxu0 0.0
        %2456 = vmatpush2.msra.mxu0 0.0
        %2457 = vmatprep.subr.mxu0 0.0
        %2458 = vmatpush2.msra.mxu0 0.0
        %2459 = vmatprep.subr.mxu0 0.0
        %2460 = vmatpush2.msra.mxu0 0.0
        %2461 = vmatprep.subr.mxu0 0.0
        %2462 = vmatpush2.msra.mxu0 0.0
        %2463 = vmatprep.subr.mxu0 0.0
        %2464 = vmatpush2.msra.mxu0 0.0
        %2465 = vmatprep.subr.mxu0 0.0
        %2466 = vmatpush2.msra.mxu0 0.0
        %2467 = vmatprep.subr.mxu0 0.0
        %2468 = vmatpush2.msra.mxu0 0.0
        %2469 = vmatprep.subr.mxu0 0.0
        %2470 = vmatpush2.msra.mxu0 0.0
        %2471 = vmatprep.subr.mxu0 0.0
        %2472 = vmatpush2.msra.mxu0 0.0
        %2473 = vmatprep.subr.mxu0 0.0
        %2474 = vmatpush2.msra.mxu0 0.0
        %2475 = vmatprep.subr.mxu0 0.0
        %2476 = vmatpush2.msra.mxu0 0.0
        %2477 = vmatprep.subr.mxu0 0.0
        %2478 = vmatpush2.msra.mxu0 0.0
        %2479 = vmatprep.subr.mxu0 0.0
        %2480 = vmatpush2.msra.mxu0 0.0
        %2481 = vmatprep.subr.mxu0 0.0
        %2482 = vmatpush2.msra.mxu0 0.0
        %2483 = vmatprep.subr.mxu0 0.0
        %2484 = vmatpush2.msra.mxu0 0.0
        %2485 = vmatprep.subr.mxu0 0.0
        %2486 = vmatpush2.msra.mxu0 0.0
        %2487 = vmatprep.mubr.f32.mxu0 0.0
        %v2488 = vand.u32 %v2417, 4294901760
        %v2489 = vsub.f32 %v2417, %v2488
        %v2490 = vand.u32 %v2489, 4294901760
        %v2491 = vsub.f32 %v2489, %v2490
        %v2492 = vand.u32 %v2491, 4294901760
        %2493 = vmatmul.mubr.f32.gmra.mxu0 %v2492
        %v2494 = vpop.f32.mrf.mxu0
        %v2495 = vadd.f32 0.0, %v2494
        %v2496 = vpop.f32.mrf.mxu0
        %2497 = vmatprep.mubr.f32.mxu0 0.0
        %v2498 = vand.u32 %v2419, 4294901760
        %v2499 = vsub.f32 %v2419, %v2498
        %v2500 = vand.u32 %v2499, 4294901760
        %v2501 = vsub.f32 %v2499, %v2500
        %v2502 = vand.u32 %v2501, 4294901760
        %2503 = vmatmul.mubr.f32.gmra.mxu0 %v2502
        %v2504 = vpop.f32.mrf.mxu0
        %v2505 = vadd.f32 0.0, %v2504
        %v2506 = vpop.f32.mrf.mxu0
        %2507 = vdwg.mxu0
        %2508 = vmatprep.subr.mxu0 0.0
        %2509 = vmatpush1.msra.mxu0 0.0
        %2510 = vmatprep.subr.mxu0 0.0
        %2511 = vmatpush1.msra.mxu0 0.0
        %2512 = vmatprep.subr.mxu0 0.0
        %2513 = vmatpush1.msra.mxu0 0.0
        %2514 = vmatprep.subr.mxu0 0.0
        %2515 = vmatpush1.msra.mxu0 0.0
        %2516 = vmatprep.subr.mxu0 0.0
        %2517 = vmatpush1.msra.mxu0 0.0
        %2518 = vmatprep.subr.mxu0 0.0
        %2519 = vmatpush1.msra.mxu0 0.0
        %2520 = vmatprep.subr.mxu0 0.0
        %2521 = vmatpush1.msra.mxu0 0.0
        %2522 = vmatprep.subr.mxu0 0.0
        %2523 = vmatpush1.msra.mxu0 0.0
        %2524 = vmatprep.subr.mxu0 0.0
        %2525 = vmatpush1.msra.mxu0 0.0
        %2526 = vmatprep.subr.mxu0 0.0
        %2527 = vmatpush1.msra.mxu0 0.0
        %2528 = vmatprep.subr.mxu0 0.0
        %2529 = vmatpush1.msra.mxu0 0.0
        %2530 = vmatprep.subr.mxu0 0.0
        %2531 = vmatpush1.msra.mxu0 0.0
        %2532 = vmatprep.subr.mxu0 0.0
        %2533 = vmatpush1.msra.mxu0 0.0
        %2534 = vmatprep.subr.mxu0 0.0
        %2535 = vmatpush1.msra.mxu0 0.0
        %2536 = vmatprep.subr.mxu0 0.0
        %v2537 = vand.u32 %v2410, 4294901760
        %v2538 = vsub.f32 %v2410, %v2537
        %v2539 = vand.u32 %v2538, 4294901760
        %v2540 = vsub.f32 %v2538, %v2539
        %v2541 = vand.u32 %v2540, 4294901760
        %2542 = vmatpush1.msra.mxu0 %v2541
        %2543 = vmatprep.subr.mxu0 0.0
        %v2544 = vand.u32 %v2409, 4294901760
        %v2545 = vsub.f32 %v2409, %v2544
        %v2546 = vand.u32 %v2545, 4294901760
        %v2547 = vsub.f32 %v2545, %v2546
        %v2548 = vand.u32 %v2547, 4294901760
        %2549 = vmatpush1.msra.mxu0 %v2548
        %2550 = vmatprep.subr.mxu0 0.0
        %2551 = vmatpush2.msra.mxu0 0.0
        %2552 = vmatprep.subr.mxu0 0.0
        %2553 = vmatpush2.msra.mxu0 0.0
        %2554 = vmatprep.subr.mxu0 0.0
        %2555 = vmatpush2.msra.mxu0 0.0
        %2556 = vmatprep.subr.mxu0 0.0
        %2557 = vmatpush2.msra.mxu0 0.0
        %2558 = vmatprep.subr.mxu0 0.0
        %2559 = vmatpush2.msra.mxu0 0.0
        %2560 = vmatprep.subr.mxu0 0.0
        %2561 = vmatpush2.msra.mxu0 0.0
        %2562 = vmatprep.subr.mxu0 0.0
        %2563 = vmatpush2.msra.mxu0 0.0
        %2564 = vmatprep.subr.mxu0 0.0
        %2565 = vmatpush2.msra.mxu0 0.0
        %2566 = vmatprep.subr.mxu0 0.0
        %2567 = vmatpush2.msra.mxu0 0.0
        %2568 = vmatprep.subr.mxu0 0.0
        %2569 = vmatpush2.msra.mxu0 0.0
        %2570 = vmatprep.subr.mxu0 0.0
        %2571 = vmatpush2.msra.mxu0 0.0
        %2572 = vmatprep.subr.mxu0 0.0
        %2573 = vmatpush2.msra.mxu0 0.0
        %2574 = vmatprep.subr.mxu0 0.0
        %2575 = vmatpush2.msra.mxu0 0.0
        %2576 = vmatprep.subr.mxu0 0.0
        %2577 = vmatpush2.msra.mxu0 0.0
        %2578 = vmatprep.subr.mxu0 0.0
        %2579 = vmatpush2.msra.mxu0 0.0
        %2580 = vmatprep.subr.mxu0 0.0
        %2581 = vmatpush2.msra.mxu0 0.0
        %2582 = vmatprep.mubr.f32.mxu0 0.0
        %v2583 = vand.u32 %v2417, 4294901760
        %2584 = vmatmul.mubr.f32.gmra.mxu0 %v2583
        %v2585 = vpop.f32.mrf.mxu0
        %v2586 = vadd.f32 %v2495, %v2585
        %v2587 = vpop.f32.mrf.mxu0
        %2588 = vmatprep.mubr.f32.mxu0 0.0
        %v2589 = vand.u32 %v2419, 4294901760
        %2590 = vmatmul.mubr.f32.gmra.mxu0 %v2589
        %v2591 = vpop.f32.mrf.mxu0
        %v2592 = vadd.f32 %v2505, %v2591
        %v2593 = vpop.f32.mrf.mxu0
        %2594 = vdwg.mxu0
        %2595 = vmatprep.subr.mxu0 0.0
        %2596 = vmatpush1.msra.mxu0 0.0
        %2597 = vmatprep.subr.mxu0 0.0
        %2598 = vmatpush1.msra.mxu0 0.0
        %2599 = vmatprep.subr.mxu0 0.0
        %2600 = vmatpush1.msra.mxu0 0.0
        %2601 = vmatprep.subr.mxu0 0.0
        %2602 = vmatpush1.msra.mxu0 0.0
        %2603 = vmatprep.subr.mxu0 0.0
        %2604 = vmatpush1.msra.mxu0 0.0
        %2605 = vmatprep.subr.mxu0 0.0
        %2606 = vmatpush1.msra.mxu0 0.0
        %2607 = vmatprep.subr.mxu0 0.0
        %2608 = vmatpush1.msra.mxu0 0.0
        %2609 = vmatprep.subr.mxu0 0.0
        %2610 = vmatpush1.msra.mxu0 0.0
        %2611 = vmatprep.subr.mxu0 0.0
        %2612 = vmatpush1.msra.mxu0 0.0
        %2613 = vmatprep.subr.mxu0 0.0
        %2614 = vmatpush1.msra.mxu0 0.0
        %2615 = vmatprep.subr.mxu0 0.0
        %2616 = vmatpush1.msra.mxu0 0.0
        %2617 = vmatprep.subr.mxu0 0.0
        %2618 = vmatpush1.msra.mxu0 0.0
        %2619 = vmatprep.subr.mxu0 0.0
        %2620 = vmatpush1.msra.mxu0 0.0
        %2621 = vmatprep.subr.mxu0 0.0
        %2622 = vmatpush1.msra.mxu0 0.0
        %2623 = vmatprep.subr.mxu0 0.0
        %v2624 = vand.u32 %v2410, 4294901760
        %v2625 = vsub.f32 %v2410, %v2624
        %2626 = vmatpush1.msra.mxu0 %v2625
        %2627 = vmatprep.subr.mxu0 0.0
        %v2628 = vand.u32 %v2409, 4294901760
        %v2629 = vsub.f32 %v2409, %v2628
        %2630 = vmatpush1.msra.mxu0 %v2629
        %2631 = vmatprep.subr.mxu0 0.0
        %2632 = vmatpush2.msra.mxu0 0.0
        %2633 = vmatprep.subr.mxu0 0.0
        %2634 = vmatpush2.msra.mxu0 0.0
        %2635 = vmatprep.subr.mxu0 0.0
        %2636 = vmatpush2.msra.mxu0 0.0
        %2637 = vmatprep.subr.mxu0 0.0
        %2638 = vmatpush2.msra.mxu0 0.0
        %2639 = vmatprep.subr.mxu0 0.0
        %2640 = vmatpush2.msra.mxu0 0.0
        %2641 = vmatprep.subr.mxu0 0.0
        %2642 = vmatpush2.msra.mxu0 0.0
        %2643 = vmatprep.subr.mxu0 0.0
        %2644 = vmatpush2.msra.mxu0 0.0
        %2645 = vmatprep.subr.mxu0 0.0
        %2646 = vmatpush2.msra.mxu0 0.0
        %2647 = vmatprep.subr.mxu0 0.0
        %2648 = vmatpush2.msra.mxu0 0.0
        %2649 = vmatprep.subr.mxu0 0.0
        %2650 = vmatpush2.msra.mxu0 0.0
        %2651 = vmatprep.subr.mxu0 0.0
        %2652 = vmatpush2.msra.mxu0 0.0
        %2653 = vmatprep.subr.mxu0 0.0
        %2654 = vmatpush2.msra.mxu0 0.0
        %2655 = vmatprep.subr.mxu0 0.0
        %2656 = vmatpush2.msra.mxu0 0.0
        %2657 = vmatprep.subr.mxu0 0.0
        %2658 = vmatpush2.msra.mxu0 0.0
        %2659 = vmatprep.subr.mxu0 0.0
        %2660 = vmatpush2.msra.mxu0 0.0
        %2661 = vmatprep.subr.mxu0 0.0
        %2662 = vmatpush2.msra.mxu0 0.0
        %2663 = vmatprep.mubr.f32.mxu0 0.0
        %v2664 = vand.u32 %v2417, 4294901760
        %v2665 = vsub.f32 %v2417, %v2664
        %2666 = vmatmul.mubr.f32.gmra.mxu0 %v2665
        %v2667 = vpop.f32.mrf.mxu0
        %v2668 = vadd.f32 %v2586, %v2667
        %v2669 = vpop.f32.mrf.mxu0
        %2670 = vmatprep.mubr.f32.mxu0 0.0
        %v2671 = vand.u32 %v2419, 4294901760
        %v2672 = vsub.f32 %v2419, %v2671
        %2673 = vmatmul.mubr.f32.gmra.mxu0 %v2672
        %v2674 = vpop.f32.mrf.mxu0
        %v2675 = vadd.f32 %v2592, %v2674
        %v2676 = vpop.f32.mrf.mxu0
        %2677 = vdwg.mxu0
        %2678 = vmatprep.subr.mxu0 0.0
        %2679 = vmatpush1.msra.mxu0 0.0
        %2680 = vmatprep.subr.mxu0 0.0
        %2681 = vmatpush1.msra.mxu0 0.0
        %2682 = vmatprep.subr.mxu0 0.0
        %2683 = vmatpush1.msra.mxu0 0.0
        %2684 = vmatprep.subr.mxu0 0.0
        %2685 = vmatpush1.msra.mxu0 0.0
        %2686 = vmatprep.subr.mxu0 0.0
        %2687 = vmatpush1.msra.mxu0 0.0
        %2688 = vmatprep.subr.mxu0 0.0
        %2689 = vmatpush1.msra.mxu0 0.0
        %2690 = vmatprep.subr.mxu0 0.0
        %2691 = vmatpush1.msra.mxu0 0.0
        %2692 = vmatprep.subr.mxu0 0.0
        %2693 = vmatpush1.msra.mxu0 0.0
        %2694 = vmatprep.subr.mxu0 0.0
        %2695 = vmatpush1.msra.mxu0 0.0
        %2696 = vmatprep.subr.mxu0 0.0
        %2697 = vmatpush1.msra.mxu0 0.0
        %2698 = vmatprep.subr.mxu0 0.0
        %2699 = vmatpush1.msra.mxu0 0.0
        %2700 = vmatprep.subr.mxu0 0.0
        %2701 = vmatpush1.msra.mxu0 0.0
        %2702 = vmatprep.subr.mxu0 0.0
        %2703 = vmatpush1.msra.mxu0 0.0
        %2704 = vmatprep.subr.mxu0 0.0
        %2705 = vmatpush1.msra.mxu0 0.0
        %2706 = vmatprep.subr.mxu0 0.0
        %v2707 = vand.u32 %v2410, 4294901760
        %2708 = vmatpush1.msra.mxu0 %v2707
        %2709 = vmatprep.subr.mxu0 0.0
        %v2710 = vand.u32 %v2409, 4294901760
        %2711 = vmatpush1.msra.mxu0 %v2710
        %2712 = vmatprep.subr.mxu0 0.0
        %2713 = vmatpush2.msra.mxu0 0.0
        %2714 = vmatprep.subr.mxu0 0.0
        %2715 = vmatpush2.msra.mxu0 0.0
        %2716 = vmatprep.subr.mxu0 0.0
        %2717 = vmatpush2.msra.mxu0 0.0
        %2718 = vmatprep.subr.mxu0 0.0
        %2719 = vmatpush2.msra.mxu0 0.0
        %2720 = vmatprep.subr.mxu0 0.0
        %2721 = vmatpush2.msra.mxu0 0.0
        %2722 = vmatprep.subr.mxu0 0.0
        %2723 = vmatpush2.msra.mxu0 0.0
        %2724 = vmatprep.subr.mxu0 0.0
        %2725 = vmatpush2.msra.mxu0 0.0
        %2726 = vmatprep.subr.mxu0 0.0
        %2727 = vmatpush2.msra.mxu0 0.0
        %2728 = vmatprep.subr.mxu0 0.0
        %2729 = vmatpush2.msra.mxu0 0.0
        %2730 = vmatprep.subr.mxu0 0.0
        %2731 = vmatpush2.msra.mxu0 0.0
        %2732 = vmatprep.subr.mxu0 0.0
        %2733 = vmatpush2.msra.mxu0 0.0
        %2734 = vmatprep.subr.mxu0 0.0
        %2735 = vmatpush2.msra.mxu0 0.0
        %2736 = vmatprep.subr.mxu0 0.0
        %2737 = vmatpush2.msra.mxu0 0.0
        %2738 = vmatprep.subr.mxu0 0.0
        %2739 = vmatpush2.msra.mxu0 0.0
        %2740 = vmatprep.subr.mxu0 0.0
        %2741 = vmatpush2.msra.mxu0 0.0
        %2742 = vmatprep.subr.mxu0 0.0
        %2743 = vmatpush2.msra.mxu0 0.0
        %2744 = vmatprep.mubr.f32.mxu0 0.0
        %v2745 = vand.u32 %v2417, 4294901760
        %v2746 = vsub.f32 %v2417, %v2745
        %v2747 = vand.u32 %v2746, 4294901760
        %2748 = vmatmul.mubr.f32.gmra.mxu0 %v2747
        %v2749 = vpop.f32.mrf.mxu0
        %v2750 = vadd.f32 %v2668, %v2749
        %v2751 = vpop.f32.mrf.mxu0
        %2752 = vmatprep.mubr.f32.mxu0 0.0
        %v2753 = vand.u32 %v2419, 4294901760
        %v2754 = vsub.f32 %v2419, %v2753
        %v2755 = vand.u32 %v2754, 4294901760
        %2756 = vmatmul.mubr.f32.gmra.mxu0 %v2755
        %v2757 = vpop.f32.mrf.mxu0
        %v2758 = vadd.f32 %v2675, %v2757
        %v2759 = vpop.f32.mrf.mxu0
        %2760 = vdwg.mxu0
        %2761 = vmatprep.subr.mxu0 0.0
        %2762 = vmatpush1.msra.mxu0 0.0
        %2763 = vmatprep.subr.mxu0 0.0
        %2764 = vmatpush1.msra.mxu0 0.0
        %2765 = vmatprep.subr.mxu0 0.0
        %2766 = vmatpush1.msra.mxu0 0.0
        %2767 = vmatprep.subr.mxu0 0.0
        %2768 = vmatpush1.msra.mxu0 0.0
        %2769 = vmatprep.subr.mxu0 0.0
        %2770 = vmatpush1.msra.mxu0 0.0
        %2771 = vmatprep.subr.mxu0 0.0
        %2772 = vmatpush1.msra.mxu0 0.0
        %2773 = vmatprep.subr.mxu0 0.0
        %2774 = vmatpush1.msra.mxu0 0.0
        %2775 = vmatprep.subr.mxu0 0.0
        %2776 = vmatpush1.msra.mxu0 0.0
        %2777 = vmatprep.subr.mxu0 0.0
        %2778 = vmatpush1.msra.mxu0 0.0
        %2779 = vmatprep.subr.mxu0 0.0
        %2780 = vmatpush1.msra.mxu0 0.0
        %2781 = vmatprep.subr.mxu0 0.0
        %2782 = vmatpush1.msra.mxu0 0.0
        %2783 = vmatprep.subr.mxu0 0.0
        %2784 = vmatpush1.msra.mxu0 0.0
        %2785 = vmatprep.subr.mxu0 0.0
        %2786 = vmatpush1.msra.mxu0 0.0
        %2787 = vmatprep.subr.mxu0 0.0
        %2788 = vmatpush1.msra.mxu0 0.0
        %2789 = vmatprep.subr.mxu0 0.0
        %v2790 = vand.u32 %v2410, 4294901760
        %v2791 = vsub.f32 %v2410, %v2790
        %v2792 = vand.u32 %v2791, 4294901760
        %2793 = vmatpush1.msra.mxu0 %v2792
        %2794 = vmatprep.subr.mxu0 0.0
        %v2795 = vand.u32 %v2409, 4294901760
        %v2796 = vsub.f32 %v2409, %v2795
        %v2797 = vand.u32 %v2796, 4294901760
        %2798 = vmatpush1.msra.mxu0 %v2797
        %2799 = vmatprep.subr.mxu0 0.0
        %2800 = vmatpush2.msra.mxu0 0.0
        %2801 = vmatprep.subr.mxu0 0.0
        %2802 = vmatpush2.msra.mxu0 0.0
        %2803 = vmatprep.subr.mxu0 0.0
        %2804 = vmatpush2.msra.mxu0 0.0
        %2805 = vmatprep.subr.mxu0 0.0
        %2806 = vmatpush2.msra.mxu0 0.0
        %2807 = vmatprep.subr.mxu0 0.0
        %2808 = vmatpush2.msra.mxu0 0.0
        %2809 = vmatprep.subr.mxu0 0.0
        %2810 = vmatpush2.msra.mxu0 0.0
        %2811 = vmatprep.subr.mxu0 0.0
        %2812 = vmatpush2.msra.mxu0 0.0
        %2813 = vmatprep.subr.mxu0 0.0
        %2814 = vmatpush2.msra.mxu0 0.0
        %2815 = vmatprep.subr.mxu0 0.0
        %2816 = vmatpush2.msra.mxu0 0.0
        %2817 = vmatprep.subr.mxu0 0.0
        %2818 = vmatpush2.msra.mxu0 0.0
        %2819 = vmatprep.subr.mxu0 0.0
        %2820 = vmatpush2.msra.mxu0 0.0
        %2821 = vmatprep.subr.mxu0 0.0
        %2822 = vmatpush2.msra.mxu0 0.0
        %2823 = vmatprep.subr.mxu0 0.0
        %2824 = vmatpush2.msra.mxu0 0.0
        %2825 = vmatprep.subr.mxu0 0.0
        %2826 = vmatpush2.msra.mxu0 0.0
        %2827 = vmatprep.subr.mxu0 0.0
        %2828 = vmatpush2.msra.mxu0 0.0
        %2829 = vmatprep.subr.mxu0 0.0
        %2830 = vmatpush2.msra.mxu0 0.0
        %2831 = vmatprep.mubr.f32.mxu0 0.0
        %v2832 = vand.u32 %v2417, 4294901760
        %2833 = vmatmul.mubr.f32.gmra.mxu0 %v2832
        %v2834 = vpop.f32.mrf.mxu0
        %v2835 = vadd.f32 %v2750, %v2834
        %v2836 = vpop.f32.mrf.mxu0
        %2837 = vmatprep.mubr.f32.mxu0 0.0
        %v2838 = vand.u32 %v2419, 4294901760
        %2839 = vmatmul.mubr.f32.gmra.mxu0 %v2838
        %v2840 = vpop.f32.mrf.mxu0
        %v2841 = vadd.f32 %v2758, %v2840
        %v2842 = vpop.f32.mrf.mxu0
        %2843 = vdwg.mxu0
        %2844 = vmatprep.subr.mxu0 0.0
        %2845 = vmatpush1.msra.mxu0 0.0
        %2846 = vmatprep.subr.mxu0 0.0
        %2847 = vmatpush1.msra.mxu0 0.0
        %2848 = vmatprep.subr.mxu0 0.0
        %2849 = vmatpush1.msra.mxu0 0.0
        %2850 = vmatprep.subr.mxu0 0.0
        %2851 = vmatpush1.msra.mxu0 0.0
        %2852 = vmatprep.subr.mxu0 0.0
        %2853 = vmatpush1.msra.mxu0 0.0
        %2854 = vmatprep.subr.mxu0 0.0
        %2855 = vmatpush1.msra.mxu0 0.0
        %2856 = vmatprep.subr.mxu0 0.0
        %2857 = vmatpush1.msra.mxu0 0.0
        %2858 = vmatprep.subr.mxu0 0.0
        %2859 = vmatpush1.msra.mxu0 0.0
        %2860 = vmatprep.subr.mxu0 0.0
        %2861 = vmatpush1.msra.mxu0 0.0
        %2862 = vmatprep.subr.mxu0 0.0
        %2863 = vmatpush1.msra.mxu0 0.0
        %2864 = vmatprep.subr.mxu0 0.0
        %2865 = vmatpush1.msra.mxu0 0.0
        %2866 = vmatprep.subr.mxu0 0.0
        %2867 = vmatpush1.msra.mxu0 0.0
        %2868 = vmatprep.subr.mxu0 0.0
        %2869 = vmatpush1.msra.mxu0 0.0
        %2870 = vmatprep.subr.mxu0 0.0
        %2871 = vmatpush1.msra.mxu0 0.0
        %2872 = vmatprep.subr.mxu0 0.0
        %v2873 = vand.u32 %v2410, 4294901760
        %2874 = vmatpush1.msra.mxu0 %v2873
        %2875 = vmatprep.subr.mxu0 0.0
        %v2876 = vand.u32 %v2409, 4294901760
        %2877 = vmatpush1.msra.mxu0 %v2876
        %2878 = vmatprep.subr.mxu0 0.0
        %2879 = vmatpush2.msra.mxu0 0.0
        %2880 = vmatprep.subr.mxu0 0.0
        %2881 = vmatpush2.msra.mxu0 0.0
        %2882 = vmatprep.subr.mxu0 0.0
        %2883 = vmatpush2.msra.mxu0 0.0
        %2884 = vmatprep.subr.mxu0 0.0
        %2885 = vmatpush2.msra.mxu0 0.0
        %2886 = vmatprep.subr.mxu0 0.0
        %2887 = vmatpush2.msra.mxu0 0.0
        %2888 = vmatprep.subr.mxu0 0.0
        %2889 = vmatpush2.msra.mxu0 0.0
        %2890 = vmatprep.subr.mxu0 0.0
        %2891 = vmatpush2.msra.mxu0 0.0
        %2892 = vmatprep.subr.mxu0 0.0
        %2893 = vmatpush2.msra.mxu0 0.0
        %2894 = vmatprep.subr.mxu0 0.0
        %2895 = vmatpush2.msra.mxu0 0.0
        %2896 = vmatprep.subr.mxu0 0.0
        %2897 = vmatpush2.msra.mxu0 0.0
        %2898 = vmatprep.subr.mxu0 0.0
        %2899 = vmatpush2.msra.mxu0 0.0
        %2900 = vmatprep.subr.mxu0 0.0
        %2901 = vmatpush2.msra.mxu0 0.0
        %2902 = vmatprep.subr.mxu0 0.0
        %2903 = vmatpush2.msra.mxu0 0.0
        %2904 = vmatprep.subr.mxu0 0.0
        %2905 = vmatpush2.msra.mxu0 0.0
        %2906 = vmatprep.subr.mxu0 0.0
        %2907 = vmatpush2.msra.mxu0 0.0
        %2908 = vmatprep.subr.mxu0 0.0
        %2909 = vmatpush2.msra.mxu0 0.0
        %2910 = vmatprep.mubr.f32.mxu0 0.0
        %v2911 = vand.u32 %v2417, 4294901760
        %2912 = vmatmul.mubr.f32.gmra.mxu0 %v2911
        %v2913 = vpop.f32.mrf.mxu0
        %v2914 = vadd.f32 %v2835, %v2913
        %v2915 = vpop.f32.mrf.mxu0
        %2916 = vmatprep.mubr.f32.mxu0 0.0
        %v2917 = vand.u32 %v2419, 4294901760
        %2918 = vmatmul.mubr.f32.gmra.mxu0 %v2917
        %v2919 = vpop.f32.mrf.mxu0
        %v2920 = vadd.f32 %v2841, %v2919
        %v2921 = vpop.f32.mrf.mxu0
        %2922 = vdwg.mxu0
        %v2925 = vcombine.high %v2914, %v2914
        %v2926 = vcombine.high %v2920, %v2920
        %v2929 = vld [vmem:[%s4] sm:$0xff]
        %v2930 = vld [vmem:[%s4 + $0x8] sm:$0xff]
        %2931 = vmatprep.subr.mxu0 0.0
        %2932 = vmatpush1.msra.mxu0 0.0
        %2933 = vmatprep.subr.mxu0 0.0
        %2934 = vmatpush1.msra.mxu0 0.0
        %2935 = vmatprep.subr.mxu0 0.0
        %2936 = vmatpush1.msra.mxu0 0.0
        %2937 = vmatprep.subr.mxu0 0.0
        %2938 = vmatpush1.msra.mxu0 0.0
        %2939 = vmatprep.subr.mxu0 0.0
        %2940 = vmatpush1.msra.mxu0 0.0
        %2941 = vmatprep.subr.mxu0 0.0
        %2942 = vmatpush1.msra.mxu0 0.0
        %2943 = vmatprep.subr.mxu0 0.0
        %2944 = vmatpush1.msra.mxu0 0.0
        %2945 = vmatprep.subr.mxu0 0.0
        %2946 = vmatpush1.msra.mxu0 0.0
        %2947 = vmatprep.subr.mxu0 0.0
        %2948 = vmatpush1.msra.mxu0 0.0
        %2949 = vmatprep.subr.mxu0 0.0
        %2950 = vmatpush1.msra.mxu0 0.0
        %2951 = vmatprep.subr.mxu0 0.0
        %2952 = vmatpush1.msra.mxu0 0.0
        %2953 = vmatprep.subr.mxu0 0.0
        %2954 = vmatpush1.msra.mxu0 0.0
        %2955 = vmatprep.subr.mxu0 0.0
        %2956 = vmatpush1.msra.mxu0 0.0
        %2957 = vmatprep.subr.mxu0 0.0
        %2958 = vmatpush1.msra.mxu0 0.0
        %2959 = vmatprep.subr.mxu0 0.0
        %v2960 = vand.u32 %v2930, 4294901760
        %2961 = vmatpush1.msra.mxu0 %v2960
        %2962 = vmatprep.subr.mxu0 0.0
        %v2963 = vand.u32 %v2929, 4294901760
        %2964 = vmatpush1.msra.mxu0 %v2963
        %2965 = vmatprep.subr.mxu0 0.0
        %2966 = vmatpush2.msra.mxu0 0.0
        %2967 = vmatprep.subr.mxu0 0.0
        %2968 = vmatpush2.msra.mxu0 0.0
        %2969 = vmatprep.subr.mxu0 0.0
        %2970 = vmatpush2.msra.mxu0 0.0
        %2971 = vmatprep.subr.mxu0 0.0
        %2972 = vmatpush2.msra.mxu0 0.0
        %2973 = vmatprep.subr.mxu0 0.0
        %2974 = vmatpush2.msra.mxu0 0.0
        %2975 = vmatprep.subr.mxu0 0.0
        %2976 = vmatpush2.msra.mxu0 0.0
        %2977 = vmatprep.subr.mxu0 0.0
        %2978 = vmatpush2.msra.mxu0 0.0
        %2979 = vmatprep.subr.mxu0 0.0
        %2980 = vmatpush2.msra.mxu0 0.0
        %2981 = vmatprep.subr.mxu0 0.0
        %2982 = vmatpush2.msra.mxu0 0.0
        %2983 = vmatprep.subr.mxu0 0.0
        %2984 = vmatpush2.msra.mxu0 0.0
        %2985 = vmatprep.subr.mxu0 0.0
        %2986 = vmatpush2.msra.mxu0 0.0
        %2987 = vmatprep.subr.mxu0 0.0
        %2988 = vmatpush2.msra.mxu0 0.0
        %2989 = vmatprep.subr.mxu0 0.0
        %2990 = vmatpush2.msra.mxu0 0.0
        %2991 = vmatprep.subr.mxu0 0.0
        %2992 = vmatpush2.msra.mxu0 0.0
        %2993 = vmatprep.subr.mxu0 0.0
        %2994 = vmatpush2.msra.mxu0 0.0
        %2995 = vmatprep.subr.mxu0 0.0
        %2996 = vmatpush2.msra.mxu0 0.0
        %2997 = vmatprep.mubr.f32.mxu0 0.0
        %v2998 = vand.u32 %v2417, 4294901760
        %v2999 = vsub.f32 %v2417, %v2998
        %v3000 = vand.u32 %v2999, 4294901760
        %v3001 = vsub.f32 %v2999, %v3000
        %v3002 = vand.u32 %v3001, 4294901760
        %3003 = vmatmul.mubr.f32.gmra.mxu0 %v3002
        %v3004 = vpop.f32.mrf.mxu0
        %v3005 = vadd.f32 0.0, %v3004
        %v3006 = vpop.f32.mrf.mxu0
        %3007 = vmatprep.mubr.f32.mxu0 0.0
        %v3008 = vand.u32 %v2419, 4294901760
        %v3009 = vsub.f32 %v2419, %v3008
        %v3010 = vand.u32 %v3009, 4294901760
        %v3011 = vsub.f32 %v3009, %v3010
        %v3012 = vand.u32 %v3011, 4294901760
        %3013 = vmatmul.mubr.f32.gmra.mxu0 %v3012
        %v3014 = vpop.f32.mrf.mxu0
        %v3015 = vadd.f32 0.0, %v3014
        %v3016 = vpop.f32.mrf.mxu0
        %3017 = vdwg.mxu0
        %3018 = vmatprep.subr.mxu0 0.0
        %3019 = vmatpush1.msra.mxu0 0.0
        %3020 = vmatprep.subr.mxu0 0.0
        %3021 = vmatpush1.msra.mxu0 0.0
        %3022 = vmatprep.subr.mxu0 0.0
        %3023 = vmatpush1.msra.mxu0 0.0
        %3024 = vmatprep.subr.mxu0 0.0
        %3025 = vmatpush1.msra.mxu0 0.0
        %3026 = vmatprep.subr.mxu0 0.0
        %3027 = vmatpush1.msra.mxu0 0.0
        %3028 = vmatprep.subr.mxu0 0.0
        %3029 = vmatpush1.msra.mxu0 0.0
        %3030 = vmatprep.subr.mxu0 0.0
        %3031 = vmatpush1.msra.mxu0 0.0
        %3032 = vmatprep.subr.mxu0 0.0
        %3033 = vmatpush1.msra.mxu0 0.0
        %3034 = vmatprep.subr.mxu0 0.0
        %3035 = vmatpush1.msra.mxu0 0.0
        %3036 = vmatprep.subr.mxu0 0.0
        %3037 = vmatpush1.msra.mxu0 0.0
        %3038 = vmatprep.subr.mxu0 0.0
        %3039 = vmatpush1.msra.mxu0 0.0
        %3040 = vmatprep.subr.mxu0 0.0
        %3041 = vmatpush1.msra.mxu0 0.0
        %3042 = vmatprep.subr.mxu0 0.0
        %3043 = vmatpush1.msra.mxu0 0.0
        %3044 = vmatprep.subr.mxu0 0.0
        %3045 = vmatpush1.msra.mxu0 0.0
        %3046 = vmatprep.subr.mxu0 0.0
        %v3047 = vand.u32 %v2930, 4294901760
        %v3048 = vsub.f32 %v2930, %v3047
        %v3049 = vand.u32 %v3048, 4294901760
        %v3050 = vsub.f32 %v3048, %v3049
        %v3051 = vand.u32 %v3050, 4294901760
        %3052 = vmatpush1.msra.mxu0 %v3051
        %3053 = vmatprep.subr.mxu0 0.0
        %v3054 = vand.u32 %v2929, 4294901760
        %v3055 = vsub.f32 %v2929, %v3054
        %v3056 = vand.u32 %v3055, 4294901760
        %v3057 = vsub.f32 %v3055, %v3056
        %v3058 = vand.u32 %v3057, 4294901760
        %3059 = vmatpush1.msra.mxu0 %v3058
        %3060 = vmatprep.subr.mxu0 0.0
        %3061 = vmatpush2.msra.mxu0 0.0
        %3062 = vmatprep.subr.mxu0 0.0
        %3063 = vmatpush2.msra.mxu0 0.0
        %3064 = vmatprep.subr.mxu0 0.0
        %3065 = vmatpush2.msra.mxu0 0.0
        %3066 = vmatprep.subr.mxu0 0.0
        %3067 = vmatpush2.msra.mxu0 0.0
        %3068 = vmatprep.subr.mxu0 0.0
        %3069 = vmatpush2.msra.mxu0 0.0
        %3070 = vmatprep.subr.mxu0 0.0
        %3071 = vmatpush2.msra.mxu0 0.0
        %3072 = vmatprep.subr.mxu0 0.0
        %3073 = vmatpush2.msra.mxu0 0.0
        %3074 = vmatprep.subr.mxu0 0.0
        %3075 = vmatpush2.msra.mxu0 0.0
        %3076 = vmatprep.subr.mxu0 0.0
        %3077 = vmatpush2.msra.mxu0 0.0
        %3078 = vmatprep.subr.mxu0 0.0
        %3079 = vmatpush2.msra.mxu0 0.0
        %3080 = vmatprep.subr.mxu0 0.0
        %3081 = vmatpush2.msra.mxu0 0.0
        %3082 = vmatprep.subr.mxu0 0.0
        %3083 = vmatpush2.msra.mxu0 0.0
        %3084 = vmatprep.subr.mxu0 0.0
        %3085 = vmatpush2.msra.mxu0 0.0
        %3086 = vmatprep.subr.mxu0 0.0
        %3087 = vmatpush2.msra.mxu0 0.0
        %3088 = vmatprep.subr.mxu0 0.0
        %3089 = vmatpush2.msra.mxu0 0.0
        %3090 = vmatprep.subr.mxu0 0.0
        %3091 = vmatpush2.msra.mxu0 0.0
        %3092 = vmatprep.mubr.f32.mxu0 0.0
        %v3093 = vand.u32 %v2417, 4294901760
        %3094 = vmatmul.mubr.f32.gmra.mxu0 %v3093
        %v3095 = vpop.f32.mrf.mxu0
        %v3096 = vadd.f32 %v3005, %v3095
        %v3097 = vpop.f32.mrf.mxu0
        %3098 = vmatprep.mubr.f32.mxu0 0.0
        %v3099 = vand.u32 %v2419, 4294901760
        %3100 = vmatmul.mubr.f32.gmra.mxu0 %v3099
        %v3101 = vpop.f32.mrf.mxu0
        %v3102 = vadd.f32 %v3015, %v3101
        %v3103 = vpop.f32.mrf.mxu0
        %3104 = vdwg.mxu0
        %3105 = vmatprep.subr.mxu0 0.0
        %3106 = vmatpush1.msra.mxu0 0.0
        %3107 = vmatprep.subr.mxu0 0.0
        %3108 = vmatpush1.msra.mxu0 0.0
        %3109 = vmatprep.subr.mxu0 0.0
        %3110 = vmatpush1.msra.mxu0 0.0
        %3111 = vmatprep.subr.mxu0 0.0
        %3112 = vmatpush1.msra.mxu0 0.0
        %3113 = vmatprep.subr.mxu0 0.0
        %3114 = vmatpush1.msra.mxu0 0.0
        %3115 = vmatprep.subr.mxu0 0.0
        %3116 = vmatpush1.msra.mxu0 0.0
        %3117 = vmatprep.subr.mxu0 0.0
        %3118 = vmatpush1.msra.mxu0 0.0
        %3119 = vmatprep.subr.mxu0 0.0
        %3120 = vmatpush1.msra.mxu0 0.0
        %3121 = vmatprep.subr.mxu0 0.0
        %3122 = vmatpush1.msra.mxu0 0.0
        %3123 = vmatprep.subr.mxu0 0.0
        %3124 = vmatpush1.msra.mxu0 0.0
        %3125 = vmatprep.subr.mxu0 0.0
        %3126 = vmatpush1.msra.mxu0 0.0
        %3127 = vmatprep.subr.mxu0 0.0
        %3128 = vmatpush1.msra.mxu0 0.0
        %3129 = vmatprep.subr.mxu0 0.0
        %3130 = vmatpush1.msra.mxu0 0.0
        %3131 = vmatprep.subr.mxu0 0.0
        %3132 = vmatpush1.msra.mxu0 0.0
        %3133 = vmatprep.subr.mxu0 0.0
        %v3134 = vand.u32 %v2930, 4294901760
        %v3135 = vsub.f32 %v2930, %v3134
        %3136 = vmatpush1.msra.mxu0 %v3135
        %3137 = vmatprep.subr.mxu0 0.0
        %v3138 = vand.u32 %v2929, 4294901760
        %v3139 = vsub.f32 %v2929, %v3138
        %3140 = vmatpush1.msra.mxu0 %v3139
        %3141 = vmatprep.subr.mxu0 0.0
        %3142 = vmatpush2.msra.mxu0 0.0
        %3143 = vmatprep.subr.mxu0 0.0
        %3144 = vmatpush2.msra.mxu0 0.0
        %3145 = vmatprep.subr.mxu0 0.0
        %3146 = vmatpush2.msra.mxu0 0.0
        %3147 = vmatprep.subr.mxu0 0.0
        %3148 = vmatpush2.msra.mxu0 0.0
        %3149 = vmatprep.subr.mxu0 0.0
        %3150 = vmatpush2.msra.mxu0 0.0
        %3151 = vmatprep.subr.mxu0 0.0
        %3152 = vmatpush2.msra.mxu0 0.0
        %3153 = vmatprep.subr.mxu0 0.0
        %3154 = vmatpush2.msra.mxu0 0.0
        %3155 = vmatprep.subr.mxu0 0.0
        %3156 = vmatpush2.msra.mxu0 0.0
        %3157 = vmatprep.subr.mxu0 0.0
        %3158 = vmatpush2.msra.mxu0 0.0
        %3159 = vmatprep.subr.mxu0 0.0
        %3160 = vmatpush2.msra.mxu0 0.0
        %3161 = vmatprep.subr.mxu0 0.0
        %3162 = vmatpush2.msra.mxu0 0.0
        %3163 = vmatprep.subr.mxu0 0.0
        %3164 = vmatpush2.msra.mxu0 0.0
        %3165 = vmatprep.subr.mxu0 0.0
        %3166 = vmatpush2.msra.mxu0 0.0
        %3167 = vmatprep.subr.mxu0 0.0
        %3168 = vmatpush2.msra.mxu0 0.0
        %3169 = vmatprep.subr.mxu0 0.0
        %3170 = vmatpush2.msra.mxu0 0.0
        %3171 = vmatprep.subr.mxu0 0.0
        %3172 = vmatpush2.msra.mxu0 0.0
        %3173 = vmatprep.mubr.f32.mxu0 0.0
        %v3174 = vand.u32 %v2417, 4294901760
        %v3175 = vsub.f32 %v2417, %v3174
        %3176 = vmatmul.mubr.f32.gmra.mxu0 %v3175
        %v3177 = vpop.f32.mrf.mxu0
        %v3178 = vadd.f32 %v3096, %v3177
        %v3179 = vpop.f32.mrf.mxu0
        %3180 = vmatprep.mubr.f32.mxu0 0.0
        %v3181 = vand.u32 %v2419, 4294901760
        %v3182 = vsub.f32 %v2419, %v3181
        %3183 = vmatmul.mubr.f32.gmra.mxu0 %v3182
        %v3184 = vpop.f32.mrf.mxu0
        %v3185 = vadd.f32 %v3102, %v3184
        %v3186 = vpop.f32.mrf.mxu0
        %3187 = vdwg.mxu0
        %3188 = vmatprep.subr.mxu0 0.0
        %3189 = vmatpush1.msra.mxu0 0.0
        %3190 = vmatprep.subr.mxu0 0.0
        %3191 = vmatpush1.msra.mxu0 0.0
        %3192 = vmatprep.subr.mxu0 0.0
        %3193 = vmatpush1.msra.mxu0 0.0
        %3194 = vmatprep.subr.mxu0 0.0
        %3195 = vmatpush1.msra.mxu0 0.0
        %3196 = vmatprep.subr.mxu0 0.0
        %3197 = vmatpush1.msra.mxu0 0.0
        %3198 = vmatprep.subr.mxu0 0.0
        %3199 = vmatpush1.msra.mxu0 0.0
        %3200 = vmatprep.subr.mxu0 0.0
        %3201 = vmatpush1.msra.mxu0 0.0
        %3202 = vmatprep.subr.mxu0 0.0
        %3203 = vmatpush1.msra.mxu0 0.0
        %3204 = vmatprep.subr.mxu0 0.0
        %3205 = vmatpush1.msra.mxu0 0.0
        %3206 = vmatprep.subr.mxu0 0.0
        %3207 = vmatpush1.msra.mxu0 0.0
        %3208 = vmatprep.subr.mxu0 0.0
        %3209 = vmatpush1.msra.mxu0 0.0
        %3210 = vmatprep.subr.mxu0 0.0
        %3211 = vmatpush1.msra.mxu0 0.0
        %3212 = vmatprep.subr.mxu0 0.0
        %3213 = vmatpush1.msra.mxu0 0.0
        %3214 = vmatprep.subr.mxu0 0.0
        %3215 = vmatpush1.msra.mxu0 0.0
        %3216 = vmatprep.subr.mxu0 0.0
        %v3217 = vand.u32 %v2930, 4294901760
        %3218 = vmatpush1.msra.mxu0 %v3217
        %3219 = vmatprep.subr.mxu0 0.0
        %v3220 = vand.u32 %v2929, 4294901760
        %3221 = vmatpush1.msra.mxu0 %v3220
        %3222 = vmatprep.subr.mxu0 0.0
        %3223 = vmatpush2.msra.mxu0 0.0
        %3224 = vmatprep.subr.mxu0 0.0
        %3225 = vmatpush2.msra.mxu0 0.0
        %3226 = vmatprep.subr.mxu0 0.0
        %3227 = vmatpush2.msra.mxu0 0.0
        %3228 = vmatprep.subr.mxu0 0.0
        %3229 = vmatpush2.msra.mxu0 0.0
        %3230 = vmatprep.subr.mxu0 0.0
        %3231 = vmatpush2.msra.mxu0 0.0
        %3232 = vmatprep.subr.mxu0 0.0
        %3233 = vmatpush2.msra.mxu0 0.0
        %3234 = vmatprep.subr.mxu0 0.0
        %3235 = vmatpush2.msra.mxu0 0.0
        %3236 = vmatprep.subr.mxu0 0.0
        %3237 = vmatpush2.msra.mxu0 0.0
        %3238 = vmatprep.subr.mxu0 0.0
        %3239 = vmatpush2.msra.mxu0 0.0
        %3240 = vmatprep.subr.mxu0 0.0
        %3241 = vmatpush2.msra.mxu0 0.0
        %3242 = vmatprep.subr.mxu0 0.0
        %3243 = vmatpush2.msra.mxu0 0.0
        %3244 = vmatprep.subr.mxu0 0.0
        %3245 = vmatpush2.msra.mxu0 0.0
        %3246 = vmatprep.subr.mxu0 0.0
        %3247 = vmatpush2.msra.mxu0 0.0
        %3248 = vmatprep.subr.mxu0 0.0
        %3249 = vmatpush2.msra.mxu0 0.0
        %3250 = vmatprep.subr.mxu0 0.0
        %3251 = vmatpush2.msra.mxu0 0.0
        %3252 = vmatprep.subr.mxu0 0.0
        %3253 = vmatpush2.msra.mxu0 0.0
        %3254 = vmatprep.mubr.f32.mxu0 0.0
        %v3255 = vand.u32 %v2417, 4294901760
        %v3256 = vsub.f32 %v2417, %v3255
        %v3257 = vand.u32 %v3256, 4294901760
        %3258 = vmatmul.mubr.f32.gmra.mxu0 %v3257
        %v3259 = vpop.f32.mrf.mxu0
        %v3260 = vadd.f32 %v3178, %v3259
        %v3261 = vpop.f32.mrf.mxu0
        %3262 = vmatprep.mubr.f32.mxu0 0.0
        %v3263 = vand.u32 %v2419, 4294901760
        %v3264 = vsub.f32 %v2419, %v3263
        %v3265 = vand.u32 %v3264, 4294901760
        %3266 = vmatmul.mubr.f32.gmra.mxu0 %v3265
        %v3267 = vpop.f32.mrf.mxu0
        %v3268 = vadd.f32 %v3185, %v3267
        %v3269 = vpop.f32.mrf.mxu0
        %3270 = vdwg.mxu0
        %3271 = vmatprep.subr.mxu0 0.0
        %3272 = vmatpush1.msra.mxu0 0.0
        %3273 = vmatprep.subr.mxu0 0.0
        %3274 = vmatpush1.msra.mxu0 0.0
        %3275 = vmatprep.subr.mxu0 0.0
        %3276 = vmatpush1.msra.mxu0 0.0
        %3277 = vmatprep.subr.mxu0 0.0
        %3278 = vmatpush1.msra.mxu0 0.0
        %3279 = vmatprep.subr.mxu0 0.0
        %3280 = vmatpush1.msra.mxu0 0.0
        %3281 = vmatprep.subr.mxu0 0.0
        %3282 = vmatpush1.msra.mxu0 0.0
        %3283 = vmatprep.subr.mxu0 0.0
        %3284 = vmatpush1.msra.mxu0 0.0
        %3285 = vmatprep.subr.mxu0 0.0
        %3286 = vmatpush1.msra.mxu0 0.0
        %3287 = vmatprep.subr.mxu0 0.0
        %3288 = vmatpush1.msra.mxu0 0.0
        %3289 = vmatprep.subr.mxu0 0.0
        %3290 = vmatpush1.msra.mxu0 0.0
        %3291 = vmatprep.subr.mxu0 0.0
        %3292 = vmatpush1.msra.mxu0 0.0
        %3293 = vmatprep.subr.mxu0 0.0
        %3294 = vmatpush1.msra.mxu0 0.0
        %3295 = vmatprep.subr.mxu0 0.0
        %3296 = vmatpush1.msra.mxu0 0.0
        %3297 = vmatprep.subr.mxu0 0.0
        %3298 = vmatpush1.msra.mxu0 0.0
        %3299 = vmatprep.subr.mxu0 0.0
        %v3300 = vand.u32 %v2930, 4294901760
        %v3301 = vsub.f32 %v2930, %v3300
        %v3302 = vand.u32 %v3301, 4294901760
        %3303 = vmatpush1.msra.mxu0 %v3302
        %3304 = vmatprep.subr.mxu0 0.0
        %v3305 = vand.u32 %v2929, 4294901760
        %v3306 = vsub.f32 %v2929, %v3305
        %v3307 = vand.u32 %v3306, 4294901760
        %3308 = vmatpush1.msra.mxu0 %v3307
        %3309 = vmatprep.subr.mxu0 0.0
        %3310 = vmatpush2.msra.mxu0 0.0
        %3311 = vmatprep.subr.mxu0 0.0
        %3312 = vmatpush2.msra.mxu0 0.0
        %3313 = vmatprep.subr.mxu0 0.0
        %3314 = vmatpush2.msra.mxu0 0.0
        %3315 = vmatprep.subr.mxu0 0.0
        %3316 = vmatpush2.msra.mxu0 0.0
        %3317 = vmatprep.subr.mxu0 0.0
        %3318 = vmatpush2.msra.mxu0 0.0
        %3319 = vmatprep.subr.mxu0 0.0
        %3320 = vmatpush2.msra.mxu0 0.0
        %3321 = vmatprep.subr.mxu0 0.0
        %3322 = vmatpush2.msra.mxu0 0.0
        %3323 = vmatprep.subr.mxu0 0.0
        %3324 = vmatpush2.msra.mxu0 0.0
        %3325 = vmatprep.subr.mxu0 0.0
        %3326 = vmatpush2.msra.mxu0 0.0
        %3327 = vmatprep.subr.mxu0 0.0
        %3328 = vmatpush2.msra.mxu0 0.0
        %3329 = vmatprep.subr.mxu0 0.0
        %3330 = vmatpush2.msra.mxu0 0.0
        %3331 = vmatprep.subr.mxu0 0.0
        %3332 = vmatpush2.msra.mxu0 0.0
        %3333 = vmatprep.subr.mxu0 0.0
        %3334 = vmatpush2.msra.mxu0 0.0
        %3335 = vmatprep.subr.mxu0 0.0
        %3336 = vmatpush2.msra.mxu0 0.0
        %3337 = vmatprep.subr.mxu0 0.0
        %3338 = vmatpush2.msra.mxu0 0.0
        %3339 = vmatprep.subr.mxu0 0.0
        %3340 = vmatpush2.msra.mxu0 0.0
        %3341 = vmatprep.mubr.f32.mxu0 0.0
        %v3342 = vand.u32 %v2417, 4294901760
        %3343 = vmatmul.mubr.f32.gmra.mxu0 %v3342
        %v3344 = vpop.f32.mrf.mxu0
        %v3345 = vadd.f32 %v3260, %v3344
        %v3346 = vpop.f32.mrf.mxu0
        %3347 = vmatprep.mubr.f32.mxu0 0.0
        %v3348 = vand.u32 %v2419, 4294901760
        %3349 = vmatmul.mubr.f32.gmra.mxu0 %v3348
        %v3350 = vpop.f32.mrf.mxu0
        %v3351 = vadd.f32 %v3268, %v3350
        %v3352 = vpop.f32.mrf.mxu0
        %3353 = vdwg.mxu0
        %3354 = vmatprep.subr.mxu0 0.0
        %3355 = vmatpush1.msra.mxu0 0.0
        %3356 = vmatprep.subr.mxu0 0.0
        %3357 = vmatpush1.msra.mxu0 0.0
        %3358 = vmatprep.subr.mxu0 0.0
        %3359 = vmatpush1.msra.mxu0 0.0
        %3360 = vmatprep.subr.mxu0 0.0
        %3361 = vmatpush1.msra.mxu0 0.0
        %3362 = vmatprep.subr.mxu0 0.0
        %3363 = vmatpush1.msra.mxu0 0.0
        %3364 = vmatprep.subr.mxu0 0.0
        %3365 = vmatpush1.msra.mxu0 0.0
        %3366 = vmatprep.subr.mxu0 0.0
        %3367 = vmatpush1.msra.mxu0 0.0
        %3368 = vmatprep.subr.mxu0 0.0
        %3369 = vmatpush1.msra.mxu0 0.0
        %3370 = vmatprep.subr.mxu0 0.0
        %3371 = vmatpush1.msra.mxu0 0.0
        %3372 = vmatprep.subr.mxu0 0.0
        %3373 = vmatpush1.msra.mxu0 0.0
        %3374 = vmatprep.subr.mxu0 0.0
        %3375 = vmatpush1.msra.mxu0 0.0
        %3376 = vmatprep.subr.mxu0 0.0
        %3377 = vmatpush1.msra.mxu0 0.0
        %3378 = vmatprep.subr.mxu0 0.0
        %3379 = vmatpush1.msra.mxu0 0.0
        %3380 = vmatprep.subr.mxu0 0.0
        %3381 = vmatpush1.msra.mxu0 0.0
        %3382 = vmatprep.subr.mxu0 0.0
        %v3383 = vand.u32 %v2930, 4294901760
        %3384 = vmatpush1.msra.mxu0 %v3383
        %3385 = vmatprep.subr.mxu0 0.0
        %v3386 = vand.u32 %v2929, 4294901760
        %3387 = vmatpush1.msra.mxu0 %v3386
        %3388 = vmatprep.subr.mxu0 0.0
        %3389 = vmatpush2.msra.mxu0 0.0
        %3390 = vmatprep.subr.mxu0 0.0
        %3391 = vmatpush2.msra.mxu0 0.0
        %3392 = vmatprep.subr.mxu0 0.0
        %3393 = vmatpush2.msra.mxu0 0.0
        %3394 = vmatprep.subr.mxu0 0.0
        %3395 = vmatpush2.msra.mxu0 0.0
        %3396 = vmatprep.subr.mxu0 0.0
        %3397 = vmatpush2.msra.mxu0 0.0
        %3398 = vmatprep.subr.mxu0 0.0
        %3399 = vmatpush2.msra.mxu0 0.0
        %3400 = vmatprep.subr.mxu0 0.0
        %3401 = vmatpush2.msra.mxu0 0.0
        %3402 = vmatprep.subr.mxu0 0.0
        %3403 = vmatpush2.msra.mxu0 0.0
        %3404 = vmatprep.subr.mxu0 0.0
        %3405 = vmatpush2.msra.mxu0 0.0
        %3406 = vmatprep.subr.mxu0 0.0
        %3407 = vmatpush2.msra.mxu0 0.0
        %3408 = vmatprep.subr.mxu0 0.0
        %3409 = vmatpush2.msra.mxu0 0.0
        %3410 = vmatprep.subr.mxu0 0.0
        %3411 = vmatpush2.msra.mxu0 0.0
        %3412 = vmatprep.subr.mxu0 0.0
        %3413 = vmatpush2.msra.mxu0 0.0
        %3414 = vmatprep.subr.mxu0 0.0
        %3415 = vmatpush2.msra.mxu0 0.0
        %3416 = vmatprep.subr.mxu0 0.0
        %3417 = vmatpush2.msra.mxu0 0.0
        %3418 = vmatprep.subr.mxu0 0.0
        %3419 = vmatpush2.msra.mxu0 0.0
        %3420 = vmatprep.mubr.f32.mxu0 0.0
        %v3421 = vand.u32 %v2417, 4294901760
        %3422 = vmatmul.mubr.f32.gmra.mxu0 %v3421
        %v3423 = vpop.f32.mrf.mxu0
        %v3424 = vadd.f32 %v3345, %v3423
        %v3425 = vpop.f32.mrf.mxu0
        %3426 = vmatprep.mubr.f32.mxu0 0.0
        %v3427 = vand.u32 %v2419, 4294901760
        %3428 = vmatmul.mubr.f32.gmra.mxu0 %v3427
        %v3429 = vpop.f32.mrf.mxu0
        %v3430 = vadd.f32 %v3351, %v3429
        %v3431 = vpop.f32.mrf.mxu0
        %3432 = vdwg.mxu0
        %v3435 = vcombine.high %v3424, %v3424
        %v3436 = vcombine.high %v3430, %v3430
        %v3437 = vcombine.low %v3424, %v3424
        %v3438 = vcombine.low %v3435, %v3435
        %v3439 = vcombine.low %v3430, %v3430
        %v3440 = vcombine.low %v3436, %v3436
        %vm3445 = vcmask 1043456
        %v3446 = vsel %vm3445, %v2914, %v3437
        %v3447 = vsel %vm3445, %v2925, %v3438
        %v3448 = vsel %vm3445, %v2920, %v3439
        %v3449 = vsel %vm3445, %v2926, %v3440
        %3450 = vxpose.xlu0.b32.start [1/16] %v3446, 128
        %3451 = vxpose.xlu0.b32.cont [2/16] 0.0, 128
        %3452 = vxpose.xlu0.b32.cont [3/16] 0.0, 128
        %3453 = vxpose.xlu0.b32.cont [4/16] 0.0, 128
        %3454 = vxpose.xlu0.b32.cont [5/16] 0.0, 128
        %3455 = vxpose.xlu0.b32.cont [6/16] 0.0, 128
        %3456 = vxpose.xlu0.b32.cont [7/16] 0.0, 128
        %3457 = vxpose.xlu0.b32.cont [8/16] 0.0, 128
        %3458 = vxpose.xlu0.b32.cont [9/16] 0.0, 128
        %3459 = vxpose.xlu0.b32.cont [10/16] 0.0, 128
        %3460 = vxpose.xlu0.b32.cont [11/16] 0.0, 128
        %3461 = vxpose.xlu0.b32.cont [12/16] 0.0, 128
        %3462 = vxpose.xlu0.b32.cont [13/16] 0.0, 128
        %3463 = vxpose.xlu0.b32.cont [14/16] 0.0, 128
        %3464 = vxpose.xlu0.b32.cont [15/16] 0.0, 128
        %3465 = vxpose.xlu0.b32.end [16/16] 0.0, 128
        %v3466 = vpop.trf.xlu0
        %v3467 = vpop.trf.xlu0
        %v3468 = vpop.trf.xlu0
        %v3469 = vpop.trf.xlu0
        %v3470 = vpop.trf.xlu0
        %v3471 = vpop.trf.xlu0
        %v3472 = vpop.trf.xlu0
        %v3473 = vpop.trf.xlu0
        %v3474 = vpop.trf.xlu0
        %v3475 = vpop.trf.xlu0
        %v3476 = vpop.trf.xlu0
        %v3477 = vpop.trf.xlu0
        %v3478 = vpop.trf.xlu0
        %v3479 = vpop.trf.xlu0
        %v3480 = vpop.trf.xlu0
        %v3481 = vpop.trf.xlu0
        %3482 = vxpose.xlu0.b32.start [1/16] %v3447, 128
        %3483 = vxpose.xlu0.b32.cont [2/16] 0.0, 128
        %3484 = vxpose.xlu0.b32.cont [3/16] 0.0, 128
        %3485 = vxpose.xlu0.b32.cont [4/16] 0.0, 128
        %3486 = vxpose.xlu0.b32.cont [5/16] 0.0, 128
        %3487 = vxpose.xlu0.b32.cont [6/16] 0.0, 128
        %3488 = vxpose.xlu0.b32.cont [7/16] 0.0, 128
        %3489 = vxpose.xlu0.b32.cont [8/16] 0.0, 128
        %3490 = vxpose.xlu0.b32.cont [9/16] 0.0, 128
        %3491 = vxpose.xlu0.b32.cont [10/16] 0.0, 128
        %3492 = vxpose.xlu0.b32.cont [11/16] 0.0, 128
        %3493 = vxpose.xlu0.b32.cont [12/16] 0.0, 128
        %3494 = vxpose.xlu0.b32.cont [13/16] 0.0, 128
        %3495 = vxpose.xlu0.b32.cont [14/16] 0.0, 128
        %3496 = vxpose.xlu0.b32.cont [15/16] 0.0, 128
        %3497 = vxpose.xlu0.b32.end [16/16] 0.0, 128
        %v3498 = vpop.trf.xlu0
        %v3499 = vpop.trf.xlu0
        %v3500 = vpop.trf.xlu0
        %v3501 = vpop.trf.xlu0
        %v3502 = vpop.trf.xlu0
        %v3503 = vpop.trf.xlu0
        %v3504 = vpop.trf.xlu0
        %v3505 = vpop.trf.xlu0
        %v3506 = vpop.trf.xlu0
        %v3507 = vpop.trf.xlu0
        %v3508 = vpop.trf.xlu0
        %v3509 = vpop.trf.xlu0
        %v3510 = vpop.trf.xlu0
        %v3511 = vpop.trf.xlu0
        %v3512 = vpop.trf.xlu0
        %v3513 = vpop.trf.xlu0
        %3514 = vxpose.xlu0.b32.start [1/16] %v3448, 128
        %3515 = vxpose.xlu0.b32.cont [2/16] 0.0, 128
        %3516 = vxpose.xlu0.b32.cont [3/16] 0.0, 128
        %3517 = vxpose.xlu0.b32.cont [4/16] 0.0, 128
        %3518 = vxpose.xlu0.b32.cont [5/16] 0.0, 128
        %3519 = vxpose.xlu0.b32.cont [6/16] 0.0, 128
        %3520 = vxpose.xlu0.b32.cont [7/16] 0.0, 128
        %3521 = vxpose.xlu0.b32.cont [8/16] 0.0, 128
        %3522 = vxpose.xlu0.b32.cont [9/16] 0.0, 128
        %3523 = vxpose.xlu0.b32.cont [10/16] 0.0, 128
        %3524 = vxpose.xlu0.b32.cont [11/16] 0.0, 128
        %3525 = vxpose.xlu0.b32.cont [12/16] 0.0, 128
        %3526 = vxpose.xlu0.b32.cont [13/16] 0.0, 128
        %3527 = vxpose.xlu0.b32.cont [14/16] 0.0, 128
        %3528 = vxpose.xlu0.b32.cont [15/16] 0.0, 128
        %3529 = vxpose.xlu0.b32.end [16/16] 0.0, 128
        %v3530 = vpop.trf.xlu0
        %v3531 = vpop.trf.xlu0
        %v3532 = vpop.trf.xlu0
        %v3533 = vpop.trf.xlu0
        %v3534 = vpop.trf.xlu0
        %v3535 = vpop.trf.xlu0
        %v3536 = vpop.trf.xlu0
        %v3537 = vpop.trf.xlu0
        %v3538 = vpop.trf.xlu0
        %v3539 = vpop.trf.xlu0
        %v3540 = vpop.trf.xlu0
        %v3541 = vpop.trf.xlu0
        %v3542 = vpop.trf.xlu0
        %v3543 = vpop.trf.xlu0
        %v3544 = vpop.trf.xlu0
        %v3545 = vpop.trf.xlu0
        %3546 = vxpose.xlu0.b32.start [1/16] %v3449, 128
        %3547 = vxpose.xlu0.b32.cont [2/16] 0.0, 128
        %3548 = vxpose.xlu0.b32.cont [3/16] 0.0, 128
        %3549 = vxpose.xlu0.b32.cont [4/16] 0.0, 128
        %3550 = vxpose.xlu0.b32.cont [5/16] 0.0, 128
        %3551 = vxpose.xlu0.b32.cont [6/16] 0.0, 128
        %3552 = vxpose.xlu0.b32.cont [7/16] 0.0, 128
        %3553 = vxpose.xlu0.b32.cont [8/16] 0.0, 128
        %3554 = vxpose.xlu0.b32.cont [9/16] 0.0, 128
        %3555 = vxpose.xlu0.b32.cont [10/16] 0.0, 128
        %3556 = vxpose.xlu0.b32.cont [11/16] 0.0, 128
        %3557 = vxpose.xlu0.b32.cont [12/16] 0.0, 128
        %3558 = vxpose.xlu0.b32.cont [13/16] 0.0, 128
        %3559 = vxpose.xlu0.b32.cont [14/16] 0.0, 128
        %3560 = vxpose.xlu0.b32.cont [15/16] 0.0, 128
        %3561 = vxpose.xlu0.b32.end [16/16] 0.0, 128
        %v3562 = vpop.trf.xlu0
        %v3563 = vpop.trf.xlu0
        %v3564 = vpop.trf.xlu0
        %v3565 = vpop.trf.xlu0
        %v3566 = vpop.trf.xlu0
        %v3567 = vpop.trf.xlu0
        %v3568 = vpop.trf.xlu0
        %v3569 = vpop.trf.xlu0
        %v3570 = vpop.trf.xlu0
        %v3571 = vpop.trf.xlu0
        %v3572 = vpop.trf.xlu0
        %v3573 = vpop.trf.xlu0
        %v3574 = vpop.trf.xlu0
        %v3575 = vpop.trf.xlu0
        %v3576 = vpop.trf.xlu0
        %v3577 = vpop.trf.xlu0
        %v3578 = vld [vmem:[%s5] sm:$0xff]
        %vm3579 = vcmask 64512
        %v3581 = vsel %vm3579, %v3466, 0
        %v3584 = vsel %vm3579, %v3467, 0
        %v3587 = vsel %vm3579, %v3498, 0
        %v3590 = vsel %vm3579, %v3499, 0
        %v3593 = vsel %vm3579, %v3530, 0
        %v3596 = vsel %vm3579, %v3531, 0
        %v3599 = vsel %vm3579, %v3562, 0
        %v3602 = vsel %vm3579, %v3563, 0
        %3604 = vmatprep.subr.mxu0 0.0
        %3605 = vmatpush1.msra.mxu0 0.0
        %3606 = vmatprep.subr.mxu0 0.0
        %3607 = vmatpush1.msra.mxu0 0.0
        %3608 = vmatprep.subr.mxu0 0.0
        %3609 = vmatpush1.msra.mxu0 0.0
        %3610 = vmatprep.subr.mxu0 0.0
        %3611 = vmatpush1.msra.mxu0 0.0
        %3612 = vmatprep.subr.mxu0 0.0
        %3613 = vmatpush1.msra.mxu0 0.0
        %3614 = vmatprep.subr.mxu0 0.0
        %3615 = vmatpush1.msra.mxu0 0.0
        %3616 = vmatprep.subr.mxu0 0.0
        %3617 = vmatpush1.msra.mxu0 0.0
        %3618 = vmatprep.subr.mxu0 0.0
        %3619 = vmatpush1.msra.mxu0 0.0
        %3620 = vmatprep.subr.mxu0 0.0
        %3621 = vmatpush1.msra.mxu0 0.0
        %3622 = vmatprep.subr.mxu0 0.0
        %3623 = vmatpush1.msra.mxu0 0.0
        %3624 = vmatprep.subr.mxu0 0.0
        %3625 = vmatpush1.msra.mxu0 0.0
        %3626 = vmatprep.subr.mxu0 0.0
        %3627 = vmatpush1.msra.mxu0 0.0
        %3628 = vmatprep.subr.mxu0 0.0
        %3629 = vmatpush1.msra.mxu0 0.0
        %3630 = vmatprep.subr.mxu0 0.0
        %3631 = vmatpush1.msra.mxu0 0.0
        %3632 = vmatprep.subr.mxu0 0.0
        %3633 = vmatpush1.msra.mxu0 0.0
        %3634 = vmatprep.subr.mxu0 0.0
        %v3635 = vand.u32 %v3578, 4294901760
        %3636 = vmatpush1.msra.mxu0 %v3635
        %3637 = vmatprep.subr.mxu0 0.0
        %3638 = vmatpush2.msra.mxu0 0.0
        %3639 = vmatprep.subr.mxu0 0.0
        %3640 = vmatpush2.msra.mxu0 0.0
        %3641 = vmatprep.subr.mxu0 0.0
        %3642 = vmatpush2.msra.mxu0 0.0
        %3643 = vmatprep.subr.mxu0 0.0
        %3644 = vmatpush2.msra.mxu0 0.0
        %3645 = vmatprep.subr.mxu0 0.0
        %3646 = vmatpush2.msra.mxu0 0.0
        %3647 = vmatprep.subr.mxu0 0.0
        %3648 = vmatpush2.msra.mxu0 0.0
        %3649 = vmatprep.subr.mxu0 0.0
        %3650 = vmatpush2.msra.mxu0 0.0
        %3651 = vmatprep.subr.mxu0 0.0
        %3652 = vmatpush2.msra.mxu0 0.0
        %3653 = vmatprep.subr.mxu0 0.0
        %3654 = vmatpush2.msra.mxu0 0.0
        %3655 = vmatprep.subr.mxu0 0.0
        %3656 = vmatpush2.msra.mxu0 0.0
        %3657 = vmatprep.subr.mxu0 0.0
        %3658 = vmatpush2.msra.mxu0 0.0
        %3659 = vmatprep.subr.mxu0 0.0
        %3660 = vmatpush2.msra.mxu0 0.0
        %3661 = vmatprep.subr.mxu0 0.0
        %3662 = vmatpush2.msra.mxu0 0.0
        %3663 = vmatprep.subr.mxu0 0.0
        %3664 = vmatpush2.msra.mxu0 0.0
        %3665 = vmatprep.subr.mxu0 0.0
        %3666 = vmatpush2.msra.mxu0 0.0
        %3667 = vmatprep.subr.mxu0 0.0
        %3668 = vmatpush2.msra.mxu0 0.0
        %3669 = vmatprep.mubr.f32.mxu0 0.0
        %v3670 = vand.u32 %v3581, 4294901760
        %v3671 = vsub.f32 %v3581, %v3670
        %v3672 = vand.u32 %v3671, 4294901760
        %v3673 = vsub.f32 %v3671, %v3672
        %v3674 = vand.u32 %v3673, 4294901760
        %3675 = vmatmul.mubr.f32.gmra.mxu0 %v3674
        %v3676 = vpop.f32.mrf.mxu0
        %v3677 = vadd.f32 0.0, %v3676
        %v3678 = vpop.f32.mrf.mxu0
        %3679 = vmatprep.mubr.f32.mxu0 0.0
        %v3680 = vand.u32 %v3584, 4294901760
        %v3681 = vsub.f32 %v3584, %v3680
        %v3682 = vand.u32 %v3681, 4294901760
        %v3683 = vsub.f32 %v3681, %v3682
        %v3684 = vand.u32 %v3683, 4294901760
        %3685 = vmatmul.mubr.f32.gmra.mxu0 %v3684
        %v3686 = vpop.f32.mrf.mxu0
        %v3687 = vadd.f32 0.0, %v3686
        %v3688 = vpop.f32.mrf.mxu0
        %3689 = vmatprep.mubr.f32.mxu0 0.0
        %v3690 = vand.u32 %v3587, 4294901760
        %v3691 = vsub.f32 %v3587, %v3690
        %v3692 = vand.u32 %v3691, 4294901760
        %v3693 = vsub.f32 %v3691, %v3692
        %v3694 = vand.u32 %v3693, 4294901760
        %3695 = vmatmul.mubr.f32.gmra.mxu0 %v3694
        %v3696 = vpop.f32.mrf.mxu0
        %v3697 = vadd.f32 0.0, %v3696
        %v3698 = vpop.f32.mrf.mxu0
        %3699 = vmatprep.mubr.f32.mxu0 0.0
        %v3700 = vand.u32 %v3590, 4294901760
        %v3701 = vsub.f32 %v3590, %v3700
        %v3702 = vand.u32 %v3701, 4294901760
        %v3703 = vsub.f32 %v3701, %v3702
        %v3704 = vand.u32 %v3703, 4294901760
        %3705 = vmatmul.mubr.f32.gmra.mxu0 %v3704
        %v3706 = vpop.f32.mrf.mxu0
        %v3707 = vadd.f32 0.0, %v3706
        %v3708 = vpop.f32.mrf.mxu0
        %3709 = vmatprep.mubr.f32.mxu0 0.0
        %v3710 = vand.u32 %v3593, 4294901760
        %v3711 = vsub.f32 %v3593, %v3710
        %v3712 = vand.u32 %v3711, 4294901760
        %v3713 = vsub.f32 %v3711, %v3712
        %v3714 = vand.u32 %v3713, 4294901760
        %3715 = vmatmul.mubr.f32.gmra.mxu0 %v3714
        %v3716 = vpop.f32.mrf.mxu0
        %v3717 = vadd.f32 0.0, %v3716
        %v3718 = vpop.f32.mrf.mxu0
        %3719 = vmatprep.mubr.f32.mxu0 0.0
        %v3720 = vand.u32 %v3596, 4294901760
        %v3721 = vsub.f32 %v3596, %v3720
        %v3722 = vand.u32 %v3721, 4294901760
        %v3723 = vsub.f32 %v3721, %v3722
        %v3724 = vand.u32 %v3723, 4294901760
        %3725 = vmatmul.mubr.f32.gmra.mxu0 %v3724
        %v3726 = vpop.f32.mrf.mxu0
        %v3727 = vadd.f32 0.0, %v3726
        %v3728 = vpop.f32.mrf.mxu0
        %3729 = vmatprep.mubr.f32.mxu0 0.0
        %v3730 = vand.u32 %v3599, 4294901760
        %v3731 = vsub.f32 %v3599, %v3730
        %v3732 = vand.u32 %v3731, 4294901760
        %v3733 = vsub.f32 %v3731, %v3732
        %v3734 = vand.u32 %v3733, 4294901760
        %3735 = vmatmul.mubr.f32.gmra.mxu0 %v3734
        %v3736 = vpop.f32.mrf.mxu0
        %v3737 = vadd.f32 0.0, %v3736
        %v3738 = vpop.f32.mrf.mxu0
        %3739 = vmatprep.mubr.f32.mxu0 0.0
        %v3740 = vand.u32 %v3602, 4294901760
        %v3741 = vsub.f32 %v3602, %v3740
        %v3742 = vand.u32 %v3741, 4294901760
        %v3743 = vsub.f32 %v3741, %v3742
        %v3744 = vand.u32 %v3743, 4294901760
        %3745 = vmatmul.mubr.f32.gmra.mxu0 %v3744
        %v3746 = vpop.f32.mrf.mxu0
        %v3747 = vadd.f32 0.0, %v3746
        %v3748 = vpop.f32.mrf.mxu0
        %3749 = vdwg.mxu0
        %3750 = vmatprep.subr.mxu0 0.0
        %3751 = vmatpush1.msra.mxu0 0.0
        %3752 = vmatprep.subr.mxu0 0.0
        %3753 = vmatpush1.msra.mxu0 0.0
        %3754 = vmatprep.subr.mxu0 0.0
        %3755 = vmatpush1.msra.mxu0 0.0
        %3756 = vmatprep.subr.mxu0 0.0
        %3757 = vmatpush1.msra.mxu0 0.0
        %3758 = vmatprep.subr.mxu0 0.0
        %3759 = vmatpush1.msra.mxu0 0.0
        %3760 = vmatprep.subr.mxu0 0.0
        %3761 = vmatpush1.msra.mxu0 0.0
        %3762 = vmatprep.subr.mxu0 0.0
        %3763 = vmatpush1.msra.mxu0 0.0
        %3764 = vmatprep.subr.mxu0 0.0
        %3765 = vmatpush1.msra.mxu0 0.0
        %3766 = vmatprep.subr.mxu0 0.0
        %3767 = vmatpush1.msra.mxu0 0.0
        %3768 = vmatprep.subr.mxu0 0.0
        %3769 = vmatpush1.msra.mxu0 0.0
        %3770 = vmatprep.subr.mxu0 0.0
        %3771 = vmatpush1.msra.mxu0 0.0
        %3772 = vmatprep.subr.mxu0 0.0
        %3773 = vmatpush1.msra.mxu0 0.0
        %3774 = vmatprep.subr.mxu0 0.0
        %3775 = vmatpush1.msra.mxu0 0.0
        %3776 = vmatprep.subr.mxu0 0.0
        %3777 = vmatpush1.msra.mxu0 0.0
        %3778 = vmatprep.subr.mxu0 0.0
        %3779 = vmatpush1.msra.mxu0 0.0
        %3780 = vmatprep.subr.mxu0 0.0
        %v3781 = vand.u32 %v3578, 4294901760
        %v3782 = vsub.f32 %v3578, %v3781
        %v3783 = vand.u32 %v3782, 4294901760
        %v3784 = vsub.f32 %v3782, %v3783
        %v3785 = vand.u32 %v3784, 4294901760
        %3786 = vmatpush1.msra.mxu0 %v3785
        %3787 = vmatprep.subr.mxu0 0.0
        %3788 = vmatpush2.msra.mxu0 0.0
        %3789 = vmatprep.subr.mxu0 0.0
        %3790 = vmatpush2.msra.mxu0 0.0
        %3791 = vmatprep.subr.mxu0 0.0
        %3792 = vmatpush2.msra.mxu0 0.0
        %3793 = vmatprep.subr.mxu0 0.0
        %3794 = vmatpush2.msra.mxu0 0.0
        %3795 = vmatprep.subr.mxu0 0.0
        %3796 = vmatpush2.msra.mxu0 0.0
        %3797 = vmatprep.subr.mxu0 0.0
        %3798 = vmatpush2.msra.mxu0 0.0
        %3799 = vmatprep.subr.mxu0 0.0
        %3800 = vmatpush2.msra.mxu0 0.0
        %3801 = vmatprep.subr.mxu0 0.0
        %3802 = vmatpush2.msra.mxu0 0.0
        %3803 = vmatprep.subr.mxu0 0.0
        %3804 = vmatpush2.msra.mxu0 0.0
        %3805 = vmatprep.subr.mxu0 0.0
        %3806 = vmatpush2.msra.mxu0 0.0
        %3807 = vmatprep.subr.mxu0 0.0
        %3808 = vmatpush2.msra.mxu0 0.0
        %3809 = vmatprep.subr.mxu0 0.0
        %3810 = vmatpush2.msra.mxu0 0.0
        %3811 = vmatprep.subr.mxu0 0.0
        %3812 = vmatpush2.msra.mxu0 0.0
        %3813 = vmatprep.subr.mxu0 0.0
        %3814 = vmatpush2.msra.mxu0 0.0
        %3815 = vmatprep.subr.mxu0 0.0
        %3816 = vmatpush2.msra.mxu0 0.0
        %3817 = vmatprep.subr.mxu0 0.0
        %3818 = vmatpush2.msra.mxu0 0.0
        %3819 = vmatprep.mubr.f32.mxu0 0.0
        %v3820 = vand.u32 %v3581, 4294901760
        %3821 = vmatmul.mubr.f32.gmra.mxu0 %v3820
        %v3822 = vpop.f32.mrf.mxu0
        %v3823 = vadd.f32 %v3677, %v3822
        %v3824 = vpop.f32.mrf.mxu0
        %3825 = vmatprep.mubr.f32.mxu0 0.0
        %v3826 = vand.u32 %v3584, 4294901760
        %3827 = vmatmul.mubr.f32.gmra.mxu0 %v3826
        %v3828 = vpop.f32.mrf.mxu0
        %v3829 = vadd.f32 %v3687, %v3828
        %v3830 = vpop.f32.mrf.mxu0
        %3831 = vmatprep.mubr.f32.mxu0 0.0
        %v3832 = vand.u32 %v3587, 4294901760
        %3833 = vmatmul.mubr.f32.gmra.mxu0 %v3832
        %v3834 = vpop.f32.mrf.mxu0
        %v3835 = vadd.f32 %v3697, %v3834
        %v3836 = vpop.f32.mrf.mxu0
        %3837 = vmatprep.mubr.f32.mxu0 0.0
        %v3838 = vand.u32 %v3590, 4294901760
        %3839 = vmatmul.mubr.f32.gmra.mxu0 %v3838
        %v3840 = vpop.f32.mrf.mxu0
        %v3841 = vadd.f32 %v3707, %v3840
        %v3842 = vpop.f32.mrf.mxu0
        %3843 = vmatprep.mubr.f32.mxu0 0.0
        %v3844 = vand.u32 %v3593, 4294901760
        %3845 = vmatmul.mubr.f32.gmra.mxu0 %v3844
        %v3846 = vpop.f32.mrf.mxu0
        %v3847 = vadd.f32 %v3717, %v3846
        %v3848 = vpop.f32.mrf.mxu0
        %3849 = vmatprep.mubr.f32.mxu0 0.0
        %v3850 = vand.u32 %v3596, 4294901760
        %3851 = vmatmul.mubr.f32.gmra.mxu0 %v3850
        %v3852 = vpop.f32.mrf.mxu0
        %v3853 = vadd.f32 %v3727, %v3852
        %v3854 = vpop.f32.mrf.mxu0
        %3855 = vmatprep.mubr.f32.mxu0 0.0
        %v3856 = vand.u32 %v3599, 4294901760
        %3857 = vmatmul.mubr.f32.gmra.mxu0 %v3856
        %v3858 = vpop.f32.mrf.mxu0
        %v3859 = vadd.f32 %v3737, %v3858
        %v3860 = vpop.f32.mrf.mxu0
        %3861 = vmatprep.mubr.f32.mxu0 0.0
        %v3862 = vand.u32 %v3602, 4294901760
        %3863 = vmatmul.mubr.f32.gmra.mxu0 %v3862
        %v3864 = vpop.f32.mrf.mxu0
        %v3865 = vadd.f32 %v3747, %v3864
        %v3866 = vpop.f32.mrf.mxu0
        %3867 = vdwg.mxu0
        %3868 = vmatprep.subr.mxu0 0.0
        %3869 = vmatpush1.msra.mxu0 0.0
        %3870 = vmatprep.subr.mxu0 0.0
        %3871 = vmatpush1.msra.mxu0 0.0
        %3872 = vmatprep.subr.mxu0 0.0
        %3873 = vmatpush1.msra.mxu0 0.0
        %3874 = vmatprep.subr.mxu0 0.0
        %3875 = vmatpush1.msra.mxu0 0.0
        %3876 = vmatprep.subr.mxu0 0.0
        %3877 = vmatpush1.msra.mxu0 0.0
        %3878 = vmatprep.subr.mxu0 0.0
        %3879 = vmatpush1.msra.mxu0 0.0
        %3880 = vmatprep.subr.mxu0 0.0
        %3881 = vmatpush1.msra.mxu0 0.0
        %3882 = vmatprep.subr.mxu0 0.0
        %3883 = vmatpush1.msra.mxu0 0.0
        %3884 = vmatprep.subr.mxu0 0.0
        %3885 = vmatpush1.msra.mxu0 0.0
        %3886 = vmatprep.subr.mxu0 0.0
        %3887 = vmatpush1.msra.mxu0 0.0
        %3888 = vmatprep.subr.mxu0 0.0
        %3889 = vmatpush1.msra.mxu0 0.0
        %3890 = vmatprep.subr.mxu0 0.0
        %3891 = vmatpush1.msra.mxu0 0.0
        %3892 = vmatprep.subr.mxu0 0.0
        %3893 = vmatpush1.msra.mxu0 0.0
        %3894 = vmatprep.subr.mxu0 0.0
        %3895 = vmatpush1.msra.mxu0 0.0
        %3896 = vmatprep.subr.mxu0 0.0
        %3897 = vmatpush1.msra.mxu0 0.0
        %3898 = vmatprep.subr.mxu0 0.0
        %v3899 = vand.u32 %v3578, 4294901760
        %v3900 = vsub.f32 %v3578, %v3899
        %3901 = vmatpush1.msra.mxu0 %v3900
        %3902 = vmatprep.subr.mxu0 0.0
        %3903 = vmatpush2.msra.mxu0 0.0
        %3904 = vmatprep.subr.mxu0 0.0
        %3905 = vmatpush2.msra.mxu0 0.0
        %3906 = vmatprep.subr.mxu0 0.0
        %3907 = vmatpush2.msra.mxu0 0.0
        %3908 = vmatprep.subr.mxu0 0.0
        %3909 = vmatpush2.msra.mxu0 0.0
        %3910 = vmatprep.subr.mxu0 0.0
        %3911 = vmatpush2.msra.mxu0 0.0
        %3912 = vmatprep.subr.mxu0 0.0
        %3913 = vmatpush2.msra.mxu0 0.0
        %3914 = vmatprep.subr.mxu0 0.0
        %3915 = vmatpush2.msra.mxu0 0.0
        %3916 = vmatprep.subr.mxu0 0.0
        %3917 = vmatpush2.msra.mxu0 0.0
        %3918 = vmatprep.subr.mxu0 0.0
        %3919 = vmatpush2.msra.mxu0 0.0
        %3920 = vmatprep.subr.mxu0 0.0
        %3921 = vmatpush2.msra.mxu0 0.0
        %3922 = vmatprep.subr.mxu0 0.0
        %3923 = vmatpush2.msra.mxu0 0.0
        %3924 = vmatprep.subr.mxu0 0.0
        %3925 = vmatpush2.msra.mxu0 0.0
        %3926 = vmatprep.subr.mxu0 0.0
        %3927 = vmatpush2.msra.mxu0 0.0
        %3928 = vmatprep.subr.mxu0 0.0
        %3929 = vmatpush2.msra.mxu0 0.0
        %3930 = vmatprep.subr.mxu0 0.0
        %3931 = vmatpush2.msra.mxu0 0.0
        %3932 = vmatprep.subr.mxu0 0.0
        %3933 = vmatpush2.msra.mxu0 0.0
        %3934 = vmatprep.mubr.f32.mxu0 0.0
        %v3935 = vand.u32 %v3581, 4294901760
        %v3936 = vsub.f32 %v3581, %v3935
        %3937 = vmatmul.mubr.f32.gmra.mxu0 %v3936
        %v3938 = vpop.f32.mrf.mxu0
        %v3939 = vadd.f32 %v3823, %v3938
        %v3940 = vpop.f32.mrf.mxu0
        %3941 = vmatprep.mubr.f32.mxu0 0.0
        %v3942 = vand.u32 %v3584, 4294901760
        %v3943 = vsub.f32 %v3584, %v3942
        %3944 = vmatmul.mubr.f32.gmra.mxu0 %v3943
        %v3945 = vpop.f32.mrf.mxu0
        %v3946 = vadd.f32 %v3829, %v3945
        %v3947 = vpop.f32.mrf.mxu0
        %3948 = vmatprep.mubr.f32.mxu0 0.0
        %v3949 = vand.u32 %v3587, 4294901760
        %v3950 = vsub.f32 %v3587, %v3949
        %3951 = vmatmul.mubr.f32.gmra.mxu0 %v3950
        %v3952 = vpop.f32.mrf.mxu0
        %v3953 = vadd.f32 %v3835, %v3952
        %v3954 = vpop.f32.mrf.mxu0
        %3955 = vmatprep.mubr.f32.mxu0 0.0
        %v3956 = vand.u32 %v3590, 4294901760
        %v3957 = vsub.f32 %v3590, %v3956
        %3958 = vmatmul.mubr.f32.gmra.mxu0 %v3957
        %v3959 = vpop.f32.mrf.mxu0
        %v3960 = vadd.f32 %v3841, %v3959
        %v3961 = vpop.f32.mrf.mxu0
        %3962 = vmatprep.mubr.f32.mxu0 0.0
        %v3963 = vand.u32 %v3593, 4294901760
        %v3964 = vsub.f32 %v3593, %v3963
        %3965 = vmatmul.mubr.f32.gmra.mxu0 %v3964
        %v3966 = vpop.f32.mrf.mxu0
        %v3967 = vadd.f32 %v3847, %v3966
        %v3968 = vpop.f32.mrf.mxu0
        %3969 = vmatprep.mubr.f32.mxu0 0.0
        %v3970 = vand.u32 %v3596, 4294901760
        %v3971 = vsub.f32 %v3596, %v3970
        %3972 = vmatmul.mubr.f32.gmra.mxu0 %v3971
        %v3973 = vpop.f32.mrf.mxu0
        %v3974 = vadd.f32 %v3853, %v3973
        %v3975 = vpop.f32.mrf.mxu0
        %3976 = vmatprep.mubr.f32.mxu0 0.0
        %v3977 = vand.u32 %v3599, 4294901760
        %v3978 = vsub.f32 %v3599, %v3977
        %3979 = vmatmul.mubr.f32.gmra.mxu0 %v3978
        %v3980 = vpop.f32.mrf.mxu0
        %v3981 = vadd.f32 %v3859, %v3980
        %v3982 = vpop.f32.mrf.mxu0
        %3983 = vmatprep.mubr.f32.mxu0 0.0
        %v3984 = vand.u32 %v3602, 4294901760
        %v3985 = vsub.f32 %v3602, %v3984
        %3986 = vmatmul.mubr.f32.gmra.mxu0 %v3985
        %v3987 = vpop.f32.mrf.mxu0
        %v3988 = vadd.f32 %v3865, %v3987
        %v3989 = vpop.f32.mrf.mxu0
        %3990 = vdwg.mxu0
        %3991 = vmatprep.subr.mxu0 0.0
        %3992 = vmatpush1.msra.mxu0 0.0
        %3993 = vmatprep.subr.mxu0 0.0
        %3994 = vmatpush1.msra.mxu0 0.0
        %3995 = vmatprep.subr.mxu0 0.0
        %3996 = vmatpush1.msra.mxu0 0.0
        %3997 = vmatprep.subr.mxu0 0.0
        %3998 = vmatpush1.msra.mxu0 0.0
        %3999 = vmatprep.subr.mxu0 0.0
        %4000 = vmatpush1.msra.mxu0 0.0
        %4001 = vmatprep.subr.mxu0 0.0
        %4002 = vmatpush1.msra.mxu0 0.0
        %4003 = vmatprep.subr.mxu0 0.0
        %4004 = vmatpush1.msra.mxu0 0.0
        %4005 = vmatprep.subr.mxu0 0.0
        %4006 = vmatpush1.msra.mxu0 0.0
        %4007 = vmatprep.subr.mxu0 0.0
        %4008 = vmatpush1.msra.mxu0 0.0
        %4009 = vmatprep.subr.mxu0 0.0
        %4010 = vmatpush1.msra.mxu0 0.0
        %4011 = vmatprep.subr.mxu0 0.0
        %4012 = vmatpush1.msra.mxu0 0.0
        %4013 = vmatprep.subr.mxu0 0.0
        %4014 = vmatpush1.msra.mxu0 0.0
        %4015 = vmatprep.subr.mxu0 0.0
        %4016 = vmatpush1.msra.mxu0 0.0
        %4017 = vmatprep.subr.mxu0 0.0
        %4018 = vmatpush1.msra.mxu0 0.0
        %4019 = vmatprep.subr.mxu0 0.0
        %4020 = vmatpush1.msra.mxu0 0.0
        %4021 = vmatprep.subr.mxu0 0.0
        %v4022 = vand.u32 %v3578, 4294901760
        %4023 = vmatpush1.msra.mxu0 %v4022
        %4024 = vmatprep.subr.mxu0 0.0
        %4025 = vmatpush2.msra.mxu0 0.0
        %4026 = vmatprep.subr.mxu0 0.0
        %4027 = vmatpush2.msra.mxu0 0.0
        %4028 = vmatprep.subr.mxu0 0.0
        %4029 = vmatpush2.msra.mxu0 0.0
        %4030 = vmatprep.subr.mxu0 0.0
        %4031 = vmatpush2.msra.mxu0 0.0
        %4032 = vmatprep.subr.mxu0 0.0
        %4033 = vmatpush2.msra.mxu0 0.0
        %4034 = vmatprep.subr.mxu0 0.0
        %4035 = vmatpush2.msra.mxu0 0.0
        %4036 = vmatprep.subr.mxu0 0.0
        %4037 = vmatpush2.msra.mxu0 0.0
        %4038 = vmatprep.subr.mxu0 0.0
        %4039 = vmatpush2.msra.mxu0 0.0
        %4040 = vmatprep.subr.mxu0 0.0
        %4041 = vmatpush2.msra.mxu0 0.0
        %4042 = vmatprep.subr.mxu0 0.0
        %4043 = vmatpush2.msra.mxu0 0.0
        %4044 = vmatprep.subr.mxu0 0.0
        %4045 = vmatpush2.msra.mxu0 0.0
        %4046 = vmatprep.subr.mxu0 0.0
        %4047 = vmatpush2.msra.mxu0 0.0
        %4048 = vmatprep.subr.mxu0 0.0
        %4049 = vmatpush2.msra.mxu0 0.0
        %4050 = vmatprep.subr.mxu0 0.0
        %4051 = vmatpush2.msra.mxu0 0.0
        %4052 = vmatprep.subr.mxu0 0.0
        %4053 = vmatpush2.msra.mxu0 0.0
        %4054 = vmatprep.subr.mxu0 0.0
        %4055 = vmatpush2.msra.mxu0 0.0
        %4056 = vmatprep.mubr.f32.mxu0 0.0
        %v4057 = vand.u32 %v3581, 4294901760
        %v4058 = vsub.f32 %v3581, %v4057
        %v4059 = vand.u32 %v4058, 4294901760
        %4060 = vmatmul.mubr.f32.gmra.mxu0 %v4059
        %v4061 = vpop.f32.mrf.mxu0
        %v4062 = vadd.f32 %v3939, %v4061
        %v4063 = vpop.f32.mrf.mxu0
        %4064 = vmatprep.mubr.f32.mxu0 0.0
        %v4065 = vand.u32 %v3584, 4294901760
        %v4066 = vsub.f32 %v3584, %v4065
        %v4067 = vand.u32 %v4066, 4294901760
        %4068 = vmatmul.mubr.f32.gmra.mxu0 %v4067
        %v4069 = vpop.f32.mrf.mxu0
        %v4070 = vadd.f32 %v3946, %v4069
        %v4071 = vpop.f32.mrf.mxu0
        %4072 = vmatprep.mubr.f32.mxu0 0.0
        %v4073 = vand.u32 %v3587, 4294901760
        %v4074 = vsub.f32 %v3587, %v4073
        %v4075 = vand.u32 %v4074, 4294901760
        %4076 = vmatmul.mubr.f32.gmra.mxu0 %v4075
        %v4077 = vpop.f32.mrf.mxu0
        %v4078 = vadd.f32 %v3953, %v4077
        %v4079 = vpop.f32.mrf.mxu0
        %4080 = vmatprep.mubr.f32.mxu0 0.0
        %v4081 = vand.u32 %v3590, 4294901760
        %v4082 = vsub.f32 %v3590, %v4081
        %v4083 = vand.u32 %v4082, 4294901760
        %4084 = vmatmul.mubr.f32.gmra.mxu0 %v4083
        %v4085 = vpop.f32.mrf.mxu0
        %v4086 = vadd.f32 %v3960, %v4085
        %v4087 = vpop.f32.mrf.mxu0
        %4088 = vmatprep.mubr.f32.mxu0 0.0
        %v4089 = vand.u32 %v3593, 4294901760
        %v4090 = vsub.f32 %v3593, %v4089
        %v4091 = vand.u32 %v4090, 4294901760
        %4092 = vmatmul.mubr.f32.gmra.mxu0 %v4091
        %v4093 = vpop.f32.mrf.mxu0
        %v4094 = vadd.f32 %v3967, %v4093
        %v4095 = vpop.f32.mrf.mxu0
        %4096 = vmatprep.mubr.f32.mxu0 0.0
        %v4097 = vand.u32 %v3596, 4294901760
        %v4098 = vsub.f32 %v3596, %v4097
        %v4099 = vand.u32 %v4098, 4294901760
        %4100 = vmatmul.mubr.f32.gmra.mxu0 %v4099
        %v4101 = vpop.f32.mrf.mxu0
        %v4102 = vadd.f32 %v3974, %v4101
        %v4103 = vpop.f32.mrf.mxu0
        %4104 = vmatprep.mubr.f32.mxu0 0.0
        %v4105 = vand.u32 %v3599, 4294901760
        %v4106 = vsub.f32 %v3599, %v4105
        %v4107 = vand.u32 %v4106, 4294901760
        %4108 = vmatmul.mubr.f32.gmra.mxu0 %v4107
        %v4109 = vpop.f32.mrf.mxu0
        %v4110 = vadd.f32 %v3981, %v4109
        %v4111 = vpop.f32.mrf.mxu0
        %4112 = vmatprep.mubr.f32.mxu0 0.0
        %v4113 = vand.u32 %v3602, 4294901760
        %v4114 = vsub.f32 %v3602, %v4113
        %v4115 = vand.u32 %v4114, 4294901760
        %4116 = vmatmul.mubr.f32.gmra.mxu0 %v4115
        %v4117 = vpop.f32.mrf.mxu0
        %v4118 = vadd.f32 %v3988, %v4117
        %v4119 = vpop.f32.mrf.mxu0
        %4120 = vdwg.mxu0
        %4121 = vmatprep.subr.mxu0 0.0
        %4122 = vmatpush1.msra.mxu0 0.0
        %4123 = vmatprep.subr.mxu0 0.0
        %4124 = vmatpush1.msra.mxu0 0.0
        %4125 = vmatprep.subr.mxu0 0.0
        %4126 = vmatpush1.msra.mxu0 0.0
        %4127 = vmatprep.subr.mxu0 0.0
        %4128 = vmatpush1.msra.mxu0 0.0
        %4129 = vmatprep.subr.mxu0 0.0
        %4130 = vmatpush1.msra.mxu0 0.0
        %4131 = vmatprep.subr.mxu0 0.0
        %4132 = vmatpush1.msra.mxu0 0.0
        %4133 = vmatprep.subr.mxu0 0.0
        %4134 = vmatpush1.msra.mxu0 0.0
        %4135 = vmatprep.subr.mxu0 0.0
        %4136 = vmatpush1.msra.mxu0 0.0
        %4137 = vmatprep.subr.mxu0 0.0
        %4138 = vmatpush1.msra.mxu0 0.0
        %4139 = vmatprep.subr.mxu0 0.0
        %4140 = vmatpush1.msra.mxu0 0.0
        %4141 = vmatprep.subr.mxu0 0.0
        %4142 = vmatpush1.msra.mxu0 0.0
        %4143 = vmatprep.subr.mxu0 0.0
        %4144 = vmatpush1.msra.mxu0 0.0
        %4145 = vmatprep.subr.mxu0 0.0
        %4146 = vmatpush1.msra.mxu0 0.0
        %4147 = vmatprep.subr.mxu0 0.0
        %4148 = vmatpush1.msra.mxu0 0.0
        %4149 = vmatprep.subr.mxu0 0.0
        %4150 = vmatpush1.msra.mxu0 0.0
        %4151 = vmatprep.subr.mxu0 0.0
        %v4152 = vand.u32 %v3578, 4294901760
        %v4153 = vsub.f32 %v3578, %v4152
        %v4154 = vand.u32 %v4153, 4294901760
        %4155 = vmatpush1.msra.mxu0 %v4154
        %4156 = vmatprep.subr.mxu0 0.0
        %4157 = vmatpush2.msra.mxu0 0.0
        %4158 = vmatprep.subr.mxu0 0.0
        %4159 = vmatpush2.msra.mxu0 0.0
        %4160 = vmatprep.subr.mxu0 0.0
        %4161 = vmatpush2.msra.mxu0 0.0
        %4162 = vmatprep.subr.mxu0 0.0
        %4163 = vmatpush2.msra.mxu0 0.0
        %4164 = vmatprep.subr.mxu0 0.0
        %4165 = vmatpush2.msra.mxu0 0.0
        %4166 = vmatprep.subr.mxu0 0.0
        %4167 = vmatpush2.msra.mxu0 0.0
        %4168 = vmatprep.subr.mxu0 0.0
        %4169 = vmatpush2.msra.mxu0 0.0
        %4170 = vmatprep.subr.mxu0 0.0
        %4171 = vmatpush2.msra.mxu0 0.0
        %4172 = vmatprep.subr.mxu0 0.0
        %4173 = vmatpush2.msra.mxu0 0.0
        %4174 = vmatprep.subr.mxu0 0.0
        %4175 = vmatpush2.msra.mxu0 0.0
        %4176 = vmatprep.subr.mxu0 0.0
        %4177 = vmatpush2.msra.mxu0 0.0
        %4178 = vmatprep.subr.mxu0 0.0
        %4179 = vmatpush2.msra.mxu0 0.0
        %4180 = vmatprep.subr.mxu0 0.0
        %4181 = vmatpush2.msra.mxu0 0.0
        %4182 = vmatprep.subr.mxu0 0.0
        %4183 = vmatpush2.msra.mxu0 0.0
        %4184 = vmatprep.subr.mxu0 0.0
        %4185 = vmatpush2.msra.mxu0 0.0
        %4186 = vmatprep.subr.mxu0 0.0
        %4187 = vmatpush2.msra.mxu0 0.0
        %4188 = vmatprep.mubr.f32.mxu0 0.0
        %v4189 = vand.u32 %v3581, 4294901760
        %4190 = vmatmul.mubr.f32.gmra.mxu0 %v4189
        %v4191 = vpop.f32.mrf.mxu0
        %v4192 = vadd.f32 %v4062, %v4191
        %v4193 = vpop.f32.mrf.mxu0
        %4194 = vmatprep.mubr.f32.mxu0 0.0
        %v4195 = vand.u32 %v3584, 4294901760
        %4196 = vmatmul.mubr.f32.gmra.mxu0 %v4195
        %v4197 = vpop.f32.mrf.mxu0
        %v4198 = vadd.f32 %v4070, %v4197
        %v4199 = vpop.f32.mrf.mxu0
        %4200 = vmatprep.mubr.f32.mxu0 0.0
        %v4201 = vand.u32 %v3587, 4294901760
        %4202 = vmatmul.mubr.f32.gmra.mxu0 %v4201
        %v4203 = vpop.f32.mrf.mxu0
        %v4204 = vadd.f32 %v4078, %v4203
        %v4205 = vpop.f32.mrf.mxu0
        %4206 = vmatprep.mubr.f32.mxu0 0.0
        %v4207 = vand.u32 %v3590, 4294901760
        %4208 = vmatmul.mubr.f32.gmra.mxu0 %v4207
        %v4209 = vpop.f32.mrf.mxu0
        %v4210 = vadd.f32 %v4086, %v4209
        %v4211 = vpop.f32.mrf.mxu0
        %4212 = vmatprep.mubr.f32.mxu0 0.0
        %v4213 = vand.u32 %v3593, 4294901760
        %4214 = vmatmul.mubr.f32.gmra.mxu0 %v4213
        %v4215 = vpop.f32.mrf.mxu0
        %v4216 = vadd.f32 %v4094, %v4215
        %v4217 = vpop.f32.mrf.mxu0
        %4218 = vmatprep.mubr.f32.mxu0 0.0
        %v4219 = vand.u32 %v3596, 4294901760
        %4220 = vmatmul.mubr.f32.gmra.mxu0 %v4219
        %v4221 = vpop.f32.mrf.mxu0
        %v4222 = vadd.f32 %v4102, %v4221
        %v4223 = vpop.f32.mrf.mxu0
        %4224 = vmatprep.mubr.f32.mxu0 0.0
        %v4225 = vand.u32 %v3599, 4294901760
        %4226 = vmatmul.mubr.f32.gmra.mxu0 %v4225
        %v4227 = vpop.f32.mrf.mxu0
        %v4228 = vadd.f32 %v4110, %v4227
        %v4229 = vpop.f32.mrf.mxu0
        %4230 = vmatprep.mubr.f32.mxu0 0.0
        %v4231 = vand.u32 %v3602, 4294901760
        %4232 = vmatmul.mubr.f32.gmra.mxu0 %v4231
        %v4233 = vpop.f32.mrf.mxu0
        %v4234 = vadd.f32 %v4118, %v4233
        %v4235 = vpop.f32.mrf.mxu0
        %4236 = vdwg.mxu0
        %4237 = vmatprep.subr.mxu0 0.0
        %4238 = vmatpush1.msra.mxu0 0.0
        %4239 = vmatprep.subr.mxu0 0.0
        %4240 = vmatpush1.msra.mxu0 0.0
        %4241 = vmatprep.subr.mxu0 0.0
        %4242 = vmatpush1.msra.mxu0 0.0
        %4243 = vmatprep.subr.mxu0 0.0
        %4244 = vmatpush1.msra.mxu0 0.0
        %4245 = vmatprep.subr.mxu0 0.0
        %4246 = vmatpush1.msra.mxu0 0.0
        %4247 = vmatprep.subr.mxu0 0.0
        %4248 = vmatpush1.msra.mxu0 0.0
        %4249 = vmatprep.subr.mxu0 0.0
        %4250 = vmatpush1.msra.mxu0 0.0
        %4251 = vmatprep.subr.mxu0 0.0
        %4252 = vmatpush1.msra.mxu0 0.0
        %4253 = vmatprep.subr.mxu0 0.0
        %4254 = vmatpush1.msra.mxu0 0.0
        %4255 = vmatprep.subr.mxu0 0.0
        %4256 = vmatpush1.msra.mxu0 0.0
        %4257 = vmatprep.subr.mxu0 0.0
        %4258 = vmatpush1.msra.mxu0 0.0
        %4259 = vmatprep.subr.mxu0 0.0
        %4260 = vmatpush1.msra.mxu0 0.0
        %4261 = vmatprep.subr.mxu0 0.0
        %4262 = vmatpush1.msra.mxu0 0.0
        %4263 = vmatprep.subr.mxu0 0.0
        %4264 = vmatpush1.msra.mxu0 0.0
        %4265 = vmatprep.subr.mxu0 0.0
        %4266 = vmatpush1.msra.mxu0 0.0
        %4267 = vmatprep.subr.mxu0 0.0
        %v4268 = vand.u32 %v3578, 4294901760
        %4269 = vmatpush1.msra.mxu0 %v4268
        %4270 = vmatprep.subr.mxu0 0.0
        %4271 = vmatpush2.msra.mxu0 0.0
        %4272 = vmatprep.subr.mxu0 0.0
        %4273 = vmatpush2.msra.mxu0 0.0
        %4274 = vmatprep.subr.mxu0 0.0
        %4275 = vmatpush2.msra.mxu0 0.0
        %4276 = vmatprep.subr.mxu0 0.0
        %4277 = vmatpush2.msra.mxu0 0.0
        %4278 = vmatprep.subr.mxu0 0.0
        %4279 = vmatpush2.msra.mxu0 0.0
        %4280 = vmatprep.subr.mxu0 0.0
        %4281 = vmatpush2.msra.mxu0 0.0
        %4282 = vmatprep.subr.mxu0 0.0
        %4283 = vmatpush2.msra.mxu0 0.0
        %4284 = vmatprep.subr.mxu0 0.0
        %4285 = vmatpush2.msra.mxu0 0.0
        %4286 = vmatprep.subr.mxu0 0.0
        %4287 = vmatpush2.msra.mxu0 0.0
        %4288 = vmatprep.subr.mxu0 0.0
        %4289 = vmatpush2.msra.mxu0 0.0
        %4290 = vmatprep.subr.mxu0 0.0
        %4291 = vmatpush2.msra.mxu0 0.0
        %4292 = vmatprep.subr.mxu0 0.0
        %4293 = vmatpush2.msra.mxu0 0.0
        %4294 = vmatprep.subr.mxu0 0.0
        %4295 = vmatpush2.msra.mxu0 0.0
        %4296 = vmatprep.subr.mxu0 0.0
        %4297 = vmatpush2.msra.mxu0 0.0
        %4298 = vmatprep.subr.mxu0 0.0
        %4299 = vmatpush2.msra.mxu0 0.0
        %4300 = vmatprep.subr.mxu0 0.0
        %4301 = vmatpush2.msra.mxu0 0.0
        %4302 = vmatprep.mubr.f32.mxu0 0.0
        %v4303 = vand.u32 %v3581, 4294901760
        %4304 = vmatmul.mubr.f32.gmra.mxu0 %v4303
        %v4305 = vpop.f32.mrf.mxu0
        %v4306 = vadd.f32 %v4192, %v4305
        %v4307 = vpop.f32.mrf.mxu0
        %4308 = vmatprep.mubr.f32.mxu0 0.0
        %v4309 = vand.u32 %v3584, 4294901760
        %4310 = vmatmul.mubr.f32.gmra.mxu0 %v4309
        %v4311 = vpop.f32.mrf.mxu0
        %v4312 = vadd.f32 %v4198, %v4311
        %v4313 = vpop.f32.mrf.mxu0
        %4314 = vmatprep.mubr.f32.mxu0 0.0
        %v4315 = vand.u32 %v3587, 4294901760
        %4316 = vmatmul.mubr.f32.gmra.mxu0 %v4315
        %v4317 = vpop.f32.mrf.mxu0
        %v4318 = vadd.f32 %v4204, %v4317
        %v4319 = vpop.f32.mrf.mxu0
        %4320 = vmatprep.mubr.f32.mxu0 0.0
        %v4321 = vand.u32 %v3590, 4294901760
        %4322 = vmatmul.mubr.f32.gmra.mxu0 %v4321
        %v4323 = vpop.f32.mrf.mxu0
        %v4324 = vadd.f32 %v4210, %v4323
        %v4325 = vpop.f32.mrf.mxu0
        %4326 = vmatprep.mubr.f32.mxu0 0.0
        %v4327 = vand.u32 %v3593, 4294901760
        %4328 = vmatmul.mubr.f32.gmra.mxu0 %v4327
        %v4329 = vpop.f32.mrf.mxu0
        %v4330 = vadd.f32 %v4216, %v4329
        %v4331 = vpop.f32.mrf.mxu0
        %4332 = vmatprep.mubr.f32.mxu0 0.0
        %v4333 = vand.u32 %v3596, 4294901760
        %4334 = vmatmul.mubr.f32.gmra.mxu0 %v4333
        %v4335 = vpop.f32.mrf.mxu0
        %v4336 = vadd.f32 %v4222, %v4335
        %v4337 = vpop.f32.mrf.mxu0
        %4338 = vmatprep.mubr.f32.mxu0 0.0
        %v4339 = vand.u32 %v3599, 4294901760
        %4340 = vmatmul.mubr.f32.gmra.mxu0 %v4339
        %v4341 = vpop.f32.mrf.mxu0
        %v4342 = vadd.f32 %v4228, %v4341
        %v4343 = vpop.f32.mrf.mxu0
        %4344 = vmatprep.mubr.f32.mxu0 0.0
        %v4345 = vand.u32 %v3602, 4294901760
        %4346 = vmatmul.mubr.f32.gmra.mxu0 %v4345
        %v4347 = vpop.f32.mrf.mxu0
        %v4348 = vadd.f32 %v4234, %v4347
        %v4349 = vpop.f32.mrf.mxu0
        %4350 = vdwg.mxu0
        %4351 = vst [vmem:[%s298] sm:$0xff] %v4306
        %4352 = vst [vmem:[%s298 + $0x8] sm:$0xff] %v4312
        %4353 = vst [vmem:[%s298 + $0x10] sm:$0xff] %v4318
        %4354 = vst [vmem:[%s298 + $0x18] sm:$0xff] %v4324
        %4355 = vst [vmem:[%s298 + $0x20] sm:$0xff] %v4330
        %4356 = vst [vmem:[%s298 + $0x28] sm:$0xff] %v4336
        %4357 = vst [vmem:[%s298 + $0x30] sm:$0xff] %v4342
        %4358 = vst [vmem:[%s298 + $0x38] sm:$0xff] %v4348
        %s4359 = sand.u32 %s203, 1
        %s4360 = scalar_lea.sflag [#allocation8], %s4359
        %s4361 = sand.u32 %s203, 1
        %s4362 = smul.addr %s4361, 64
        %s4363 = scalar_lea.vmem [#allocation7], %s4362
        // Predicated region
        $region60: #{tpu_custom_call.1} parent=51 // pred_check
          %p4364 = pneg %p213
        $region61: #{tpu_custom_call.1} parent=51 // pred_check_branch
          %4366 = sbr.rel (%p4364) target = $region63
        $region62: #{tpu_custom_call.1} parent=51 // pred_region
          %s4368 = ssub.s32 1024, 1024
          %4369 = vsyncadd %s4360, %s4368
          %s4370 = smul.addr %s22, 8
          %s4371 = smul.addr %s4370, 128
          %s4372 = scalar_lea.hbm %s8, %s4371
          %s4373 = sshll.u32 %s4363, 4
          %s4374 = int_to_ptr.vmem [resolvable:$true] %s4373
          %4379 = dma.vmem_to_hbm [thread:$0]  %s4374, 1024, %s4372, %s4360, 128, 128, 8
        $region63: #{tpu_custom_call.1} parent=51 // pred_fallthru
          _
      $region52: #{tpu_custom_call.1} parent=5 // pred_fallthru
        _
      %p4380 = scmp.le.s32.totalorder 2, %s17
      // Predicated region
      $region64: #{tpu_custom_call.1} parent=5 // pred_check
        %p4381 = pneg %p4380
      $region65: #{tpu_custom_call.1} parent=5 // pred_check_branch
        %4383 = sbr.rel (%p4381) target = $region67
      $region66: #{tpu_custom_call.1} parent=5 // pred_region
        %s4384 = ssub.s32 %s17, 2
        // Predicated region
        $region68: #{tpu_custom_call.1} parent=66 // pred_check
          %p4385 = pneg %p219
        $region69: #{tpu_custom_call.1} parent=66 // pred_check_branch
          %4387 = sbr.rel (%p4385) target = $region71
        $region70: #{tpu_custom_call.1} parent=66 // pred_region
          %s4388 = sand.u32 %s204, 1
          %s4389 = scalar_lea.sflag [#allocation8], %s4388
          %s4390 = sand.u32 %s204, 1
          %s4391 = smul.addr %s4390, 64
          %s4392 = scalar_lea.vmem [#allocation7], %s4391
          %4393 = dma.done %s4389, 1024
        $region71: #{tpu_custom_call.1} parent=66 // pred_fallthru
          _
      $region67: #{tpu_custom_call.1} parent=5 // pred_fallthru
        _
    $region6: #{tpu_custom_call.1} parent=1 // loop_footer
      %s21 = sadd.s32 1, %s17
    $region7: #{tpu_custom_call.1} parent=1 // loop_footer_branch
      %16 = sbr.rel target = $region3
    $region8: #{tpu_custom_call.1} parent=1 // loop_exit
      _
    %4394 = vsyncpa [#allocation8], 1
    %s4395 = scalar_lea.sflag [#allocation8], 1
    %4396 = vsyncpa %s4395, 1

</llo_original>
